<compile_context>
chip_gen: v7x
topology: tpu7x:2x2x1
jax: 0.10.0
libtpu: 0.0.40
codegen_flags: <defaults>
</compile_context>

<pallas_src>
import functools

import jax
import jax.numpy as jnp
from jax.experimental import pallas as pl
from jax.experimental.pallas import tpu as pltpu


# ----------------------------------------------------------------------------- helpers
def _round_up(x, m):
    return ((x + m - 1) // m) * m


def _cdiv(a, b):
    return -(-a // b)


def _tpu_generation():
    try:
        kind = jax.devices()[0].device_kind.lower()
    except Exception:
        return 0
    for g in (7, 6, 5, 4):
        if f"v{g}" in kind:
            return g
    return 0


def _vmem_budget_bytes(gen):
    # v5e / v6e have 128 MiB VMEM per core -> use ~100 MiB.
    # v7x has 64 MiB per TensorCore -> stay well under it. Unknown: conservative.
    if gen in (5, 6):
        return 100 << 20
    return 48 << 20


def _compute_dtype(gen, stream_dtype):
    if jnp.dtype(stream_dtype) == jnp.float32:
        return jnp.float32
    if gen == 5:          # v5e VPU/EUP are not bf16-native -> upcast elementwise chain
        return jnp.float32
    return jnp.bfloat16


def _pick_batch_tile(B, T_pad, N_pad, stream_itemsize, compute_itemsize, budget):
    """Solve for the batch tile that fills ~75% of the VMEM budget."""
    # Per batch row of a tile: two big streams (double-buffered) + ~3 full-size
    # compute-dtype intermediates (att, e, scratch) + the small 2-D blocks.
    per_row = (4 * T_pad * N_pad * stream_itemsize
               + 3 * T_pad * N_pad * compute_itemsize
               + 2 * 4 * N_pad                     # s_t_hat (double-buffered, f32)
               + 4 * 4 * T_pad                     # mask + coverage (dbl-buffered, f32)
               + 2 * 4 * (N_pad + 2 * T_pad))      # c_t / attn / cov_out outputs
    fixed = 2 * 4 * (N_pad * N_pad + 3 * 8 * N_pad) + (4 << 20)   # weights + slack
    bt = int((budget * 0.75 - fixed) // per_row)
    bt = max(8, (bt // 8) * 8)
    bt = min(bt, _round_up(max(B, 1), 8))
    # Megacore: prefer >= 2 grid steps when the batch allows, so the "parallel"
    # axis actually splits across the two TensorCores on v7x.
    if _cdiv(_round_up(max(B, 1), 8), bt) == 1 and B > 8:
        bt = _round_up(_cdiv(B, 2), 8)
    return bt
    # TODO(synk): if even Bt=8 exceeds the budget (very large T*N), tile T as well.


# ----------------------------------------------------------------------------- kernel
def attention_kernel(s_ref, enc_out_ref, enc_feat_ref, mask_ref, cov_ref,
                     wd_ref, bd_ref, wc_ref, v_ref,
                     c_t_ref, attn_ref, cov_out_ref, *, compute_dtype):
    f32 = jnp.float32
    bt, t_pad, n_pad = enc_out_ref.shape
    cdt = compute_dtype

    s = s_ref[...].astype(f32)                       # (Bt, N)
    enc_out = enc_out_ref[...]                       # (Bt, T, N), stream dtype
    enc_feat = enc_feat_ref[...].astype(cdt)         # (Bt, T, N), compute dtype
    mask = mask_ref[...]                             # (Bt, T) f32
    cov = cov_ref[...]                               # (Bt, T) f32

    # decode_proj on the MXU with all Bt rows: (Bt, N) @ (N, N) + bias.
    dec_fea = (jnp.dot(s, wd_ref[...], preferred_element_type=f32)
               + bd_ref[...]).astype(cdt)            # (Bt, N)

    # Coverage column layout derived in-kernel (XLU transpose; replaces the old
    # (Bt, T, 1) input stream that inflated VMEM 128x).
    cov_col = jnp.transpose(cov[:, None, :], (0, 2, 1)).astype(cdt)   # (Bt, T, 1)
    wc_row = wc_ref[...].astype(cdt)[None, :, :]                       # (1, 1, N)

    # att = enc_feat + dec_fea (broadcast over T) + coverage * W_c     (Bt, T, N)
    att = enc_feat + dec_fea[:, None, :] + cov_col * wc_row
    e = jnp.tanh(att)                                                  # EUP

    # v-projection on the MXU: (Bt,1,N) x (Bt,T,N) -> (Bt,1,T); result already
    # lane-dense in T, then squeezed to 2-D for the softmax / stores.
    v_b = jnp.broadcast_to(v_ref[...].astype(cdt)[None, :, :], (bt, 1, n_pad))
    scores = jnp.einsum('bqn,btn->bqt', v_b, e,
                        preferred_element_type=f32).reshape(bt, t_pad)  # (Bt, T)

    # Masked softmax folded with the renormalization (the softmax Z cancels, so
    # this is mathematically identical to softmax -> *mask -> /sum).  Scores are
    # pre-masked so the row max only sees valid columns.
    scores = scores + (mask - 1.0) * 1e9
    m = jnp.max(scores, axis=-1, keepdims=True)
    ex = jnp.exp(scores - m) * mask                                    # (Bt, T)
    norm = jnp.sum(ex, axis=-1, keepdims=True)
    # approx reciprocal on the otherwise-idle EUP; clamp so fully-masked
    # (padding) rows give attn=0 instead of NaN.
    inv_norm = pl.reciprocal(jnp.maximum(norm, 1e-30), approx=True)
    attn = ex * inv_norm                                               # (Bt, T) f32

    # c_t = attn @ encoder_outputs on the MXU: (Bt,1,T) x (Bt,T,N) -> (Bt,1,N)
    c_t = jnp.einsum('bqt,btn->bqn', attn[:, None, :].astype(enc_out.dtype),
                     enc_out, preferred_element_type=f32)

    c_t_ref[...] = c_t.reshape(bt, n_pad).astype(c_t_ref.dtype)
    attn_ref[...] = attn.astype(attn_ref.dtype)
    cov_out_ref[...] = (cov + attn).astype(cov_out_ref.dtype)


# ----------------------------------------------------------------------------- wrappers
def prepare_encoder(encoder_outputs, encoder_feature, enc_padding_mask, *,
                    stream_dtype=jnp.bfloat16, batch_tile=None):
    """Pad/cast the decode-step-invariant encoder tensors ONCE (hoisted out of
    the per-decoder-step path).  encoder_feature may be (B*T, N) or (B, T, N)."""
    B, T, N = encoder_outputs.shape
    gen = _tpu_generation()
    cdt = _compute_dtype(gen, stream_dtype)
    T_pad = _round_up(T, 128)
    N_pad = _round_up(N, 128)
    if batch_tile is None:
        Bt = _pick_batch_tile(B, T_pad, N_pad, jnp.dtype(stream_dtype).itemsize,
                              jnp.dtype(cdt).itemsize, _vmem_budget_bytes(gen))
    else:
        Bt = _round_up(max(int(batch_tile), 1), 8)
    B_pad = _round_up(B, Bt)

    def pad3(x):
        x = x.astype(stream_dtype)          # single cast, no intermediate f32 copy
        return jnp.pad(x, ((0, B_pad - B), (0, T_pad - T), (0, N_pad - N)))

    return {
        "enc_out": pad3(encoder_outputs),
        "enc_feat": pad3(encoder_feature.reshape(B, T, N)),
        "mask": jnp.pad(enc_padding_mask.astype(jnp.float32),
                        ((0, B_pad - B), (0, T_pad - T))),
    }


def attention_step(enc_state, s_t_hat, coverage, params, *, batch_tile=None):
    """One decoder-step attention using the pre-padded encoder state."""
    f32 = jnp.float32
    enc_out_p, enc_feat_p, mask_p = (enc_state["enc_out"], enc_state["enc_feat"],
                                     enc_state["mask"])
    B, N = s_t_hat.shape
    T = coverage.shape[1]
    B_pad, T_pad, N_pad = enc_out_p.shape
    stream_dtype = enc_out_p.dtype
    gen = _tpu_generation()
    cdt = _compute_dtype(gen, stream_dtype)

    if batch_tile is None:
        Bt = _pick_batch_tile(B, T_pad, N_pad, jnp.dtype(stream_dtype).itemsize,
                              jnp.dtype(cdt).itemsize, _vmem_budget_bytes(gen))
    else:
        Bt = _round_up(max(int(batch_tile), 1), 8)
    if B_pad % Bt != 0:
        Bt = 8                               # always divides B_pad (multiple of 8)
    nb = B_pad // Bt

    wd, bd, wc, v = params                   # wd: (N,N) pre-transposed for x @ wd
    s_p = jnp.pad(s_t_hat.astype(f32), ((0, B_pad - B), (0, N_pad - N)))
    cov_p = jnp.pad(coverage.astype(f32), ((0, B_pad - B), (0, T_pad - T)))
    wd_p = jnp.pad(wd.astype(f32), ((0, N_pad - N), (0, N_pad - N)))
    bd_p = jnp.pad(bd.astype(f32), ((0, 0), (0, N_pad - N)))
    wc_p = jnp.pad(wc.astype(f32), ((0, 0), (0, N_pad - N)))
    v_p = jnp.pad(v.astype(f32), ((0, 0), (0, N_pad - N)))

    row2 = lambda i: (i, 0)
    row3 = lambda i: (i, 0, 0)
    const2 = lambda i: (0, 0)

    in_specs = [
        pl.BlockSpec((Bt, N_pad), row2),             # s_t_hat
        pl.BlockSpec((Bt, T_pad, N_pad), row3),      # encoder_outputs (stream dtype)
        pl.BlockSpec((Bt, T_pad, N_pad), row3),      # encoder_feature (stream dtype)
        pl.BlockSpec((Bt, T_pad), row2),             # enc_padding_mask
        pl.BlockSpec((Bt, T_pad), row2),             # coverage
        pl.BlockSpec((N_pad, N_pad), const2),        # decode_proj weight (VMEM-resident)
        pl.BlockSpec((1, N_pad), const2),            # decode_proj bias
        pl.BlockSpec((1, N_pad), const2),            # W_c weight
        pl.BlockSpec((1, N_pad), const2),            # v weight
    ]
    out_specs = [
        pl.BlockSpec((Bt, N_pad), row2),             # c_t
        pl.BlockSpec((Bt, T_pad), row2),             # attn_dist
        pl.BlockSpec((Bt, T_pad), row2),             # coverage out
    ]
    out_shapes = (
        jax.ShapeDtypeStruct((B_pad, N_pad), f32),
        jax.ShapeDtypeStruct((B_pad, T_pad), f32),
        jax.ShapeDtypeStruct((B_pad, T_pad), f32),
    )

    # VMEM request derived from the actual tile (streams double-buffered +
    # compute-dtype intermediates + weights), capped per generation.
    s_item = jnp.dtype(stream_dtype).itemsize
    c_item = jnp.dtype(cdt).itemsize
    est = (Bt * T_pad * N_pad * (4 * s_item + 3 * c_item)
           + Bt * 4 * (2 * N_pad + 4 * T_pad + N_pad + 2 * T_pad)
           + 2 * 4 * (N_pad * N_pad + 3 * 8 * N_pad))
    ceiling = (112 << 20) if gen in (5, 6) else (56 << 20)
    vmem_limit = int(min(max(int(est * 1.15) + (2 << 20), 32 << 20), ceiling))

    kernel = functools.partial(attention_kernel, compute_dtype=cdt)
    grid_spec = pltpu.PrefetchScalarGridSpec(
        num_scalar_prefetch=0, grid=(nb,),
        in_specs=in_specs, out_specs=out_specs)

    c_t_p, attn_p, cov_out_p = pl.pallas_call(
        kernel,
        grid_spec=grid_spec,
        out_shape=out_shapes,
        input_output_aliases={4: 2},   # coverage buffer reused for coverage_out
        compiler_params=pltpu.CompilerParams(
            dimension_semantics=("parallel",),
            vmem_limit_bytes=vmem_limit),
    )(s_p, enc_out_p, enc_feat_p, mask_p, cov_p, wd_p, bd_p, wc_p, v_p)

    return c_t_p[:B, :N], attn_p[:B, :T], cov_out_p[:B, :T]


def attention_forward(s_t_hat, encoder_outputs, encoder_feature,
                      enc_padding_mask, coverage, params, *,
                      stream_dtype=jnp.bfloat16, batch_tile=None):
    """Convenience one-shot wrapper (prepare + step)."""
    enc_state = prepare_encoder(encoder_outputs, encoder_feature, enc_padding_mask,
                                stream_dtype=stream_dtype, batch_tile=batch_tile)
    return attention_step(enc_state, s_t_hat, coverage, params, batch_tile=batch_tile)


# ----------------------------------------------------------------------------- reference
def reference_forward(s_t_hat, encoder_outputs, encoder_feature,
                      enc_padding_mask, coverage, params):
    """Pure-JAX reference mirroring the PyTorch forward (is_coverage=True)."""
    B, T, N = encoder_outputs.shape
    wd, bd, wc, v = params
    dec_fea = s_t_hat @ wd + bd                               # (B, N)
    att = encoder_feature.reshape(B, T, N) + dec_fea[:, None, :]
    att = att + coverage[:, :, None] * wc[None, :, :]
    e = jnp.tanh(att)
    scores = jnp.sum(e * v[None, :, :], axis=-1)              # (B, T)
    sm = jax.nn.softmax(scores, axis=-1)
    attn_ = sm * enc_padding_mask
    attn = attn_ / jnp.sum(attn_, axis=-1, keepdims=True)
    c_t = jnp.einsum('bt,btn->bn', attn, encoder_outputs)
    cov_out = coverage + attn
    return c_t, attn, cov_out


if __name__ == "__main__":
    # Small config: hidden_dim=16 -> N = 2*hidden_dim = 32, batch B=2, src_len T=8.
    B, T, hidden_dim = 2, 8, 16
    N = 2 * hidden_dim

    key = jax.random.PRNGKey(0)
    ks = jax.random.split(key, 8)

    # decode_proj: Linear(N, N) -> weight (N, N) [pre-transposed], bias (1, N)
    # W_c: Linear(1, N, bias=False) -> row vector (1, N)
    # v:   Linear(N, 1, bias=False) -> row vector (1, N)
    wd = jax.random.normal(ks[0], (N, N), jnp.float32) * 0.1
    bd = jax.random.normal(ks[1], (1, N), jnp.float32) * 0.1
    wc = jax.random.normal(ks[2], (1, N), jnp.float32) * 0.1
    v = jax.random.normal(ks[3], (1, N), jnp.float32) * 0.1
    params = (wd, bd, wc, v)

    s_t_hat = jax.random.normal(ks[4], (B, N), jnp.float32)
    encoder_outputs = jax.random.normal(ks[5], (B, T, N), jnp.float32)
    encoder_feature = jax.random.normal(ks[6], (B * T, N), jnp.float32)  # flattened, as in PyTorch
    enc_padding_mask = jnp.concatenate(
        [jnp.ones((B, T - 2), jnp.float32), jnp.zeros((B, 2), jnp.float32)], axis=1)
    coverage = jnp.abs(jax.random.normal(ks[7], (B, T), jnp.float32)) * 0.1

    # Encoder pad/cast done once (hoisted); per-step attention is jitted.
    enc_state = prepare_encoder(encoder_outputs, encoder_feature, enc_padding_mask)
    step_fn = jax.jit(attention_step)
    c_t, attn_dist, coverage_out = step_fn(enc_state, s_t_hat, coverage, params)
    jax.block_until_ready((c_t, attn_dist, coverage_out))

    c_ref, a_ref, cov_ref = reference_forward(
        s_t_hat, encoder_outputs, encoder_feature, enc_padding_mask, coverage, params)

    assert c_t.shape == (B, N) and attn_dist.shape == (B, T) and coverage_out.shape == (B, T)
    # bf16 streaming + approx EUP reciprocal -> small relative error vs f32 reference.
    assert jnp.allclose(c_t, c_ref, atol=2e-2, rtol=2e-2)
    assert jnp.allclose(attn_dist, a_ref, atol=2e-2, rtol=2e-2)
    assert jnp.allclose(coverage_out, cov_ref, atol=2e-2, rtol=2e-2)

    print("KERNEL_OK")
</pallas_src>

<mosaic_0001>
module attributes {stable_mosaic.version = 11 : i64} {
  func.func @attention_kernel(%arg0: i32, %arg1: memref<8x128xf32, #tpu.memory_space<vmem>>, %arg2: memref<8x128x128xbf16, #tpu.memory_space<vmem>>, %arg3: memref<8x128x128xbf16, #tpu.memory_space<vmem>>, %arg4: memref<8x128xf32, #tpu.memory_space<vmem>>, %arg5: memref<8x128xf32, #tpu.memory_space<vmem>>, %arg6: memref<128x128xf32, #tpu.memory_space<vmem>>, %arg7: memref<1x128xf32, #tpu.memory_space<vmem>>, %arg8: memref<1x128xf32, #tpu.memory_space<vmem>>, %arg9: memref<1x128xf32, #tpu.memory_space<vmem>>, %arg10: memref<8x128xf32, #tpu.memory_space<vmem>>, %arg11: memref<8x128xf32, #tpu.memory_space<vmem>>, %arg12: memref<8x128xf32, #tpu.memory_space<vmem>>) attributes {dimension_semantics = [#tpu.dimension_semantics<parallel>], iteration_bounds = array<i64: 1>, scalar_prefetch = 0 : i64, scratch_operands = 0 : i64, tpu.core_type = #tpu.core_type<tc>, window_params = [{transform_indices = @transform_0, window_bounds = array<i64: 8, 128>}, {transform_indices = @transform_1, window_bounds = array<i64: 8, 128, 128>}, {transform_indices = @transform_2, window_bounds = array<i64: 8, 128, 128>}, {transform_indices = @transform_3, window_bounds = array<i64: 8, 128>}, {transform_indices = @transform_4, window_bounds = array<i64: 8, 128>}, {pipeline_mode = #tpu.pipeline_mode<synchronous>, transform_indices = @transform_5, window_bounds = array<i64: 128, 128>}, {pipeline_mode = #tpu.pipeline_mode<synchronous>, transform_indices = @transform_6, window_bounds = array<i64: 1, 128>}, {pipeline_mode = #tpu.pipeline_mode<synchronous>, transform_indices = @transform_7, window_bounds = array<i64: 1, 128>}, {pipeline_mode = #tpu.pipeline_mode<synchronous>, transform_indices = @transform_8, window_bounds = array<i64: 1, 128>}, {transform_indices = @transform_9, window_bounds = array<i64: 8, 128>}, {transform_indices = @transform_10, window_bounds = array<i64: 8, 128>}, {transform_indices = @transform_11, window_bounds = array<i64: 8, 128>}]} {
    %c0 = arith.constant 0 : index
    %c0_0 = arith.constant 0 : index
    %0 = vector.load %arg1[%c0, %c0_0] : memref<8x128xf32, #tpu.memory_space<vmem>>, vector<8x128xf32>
    %c0_1 = arith.constant 0 : index
    %c0_2 = arith.constant 0 : index
    %c0_3 = arith.constant 0 : index
    %1 = vector.load %arg2[%c0_1, %c0_2, %c0_3] : memref<8x128x128xbf16, #tpu.memory_space<vmem>>, vector<8x128x128xbf16>
    %c0_4 = arith.constant 0 : index
    %c0_5 = arith.constant 0 : index
    %c0_6 = arith.constant 0 : index
    %2 = vector.load %arg3[%c0_4, %c0_5, %c0_6] : memref<8x128x128xbf16, #tpu.memory_space<vmem>>, vector<8x128x128xbf16>
    %c0_7 = arith.constant 0 : index
    %c0_8 = arith.constant 0 : index
    %3 = vector.load %arg4[%c0_7, %c0_8] : memref<8x128xf32, #tpu.memory_space<vmem>>, vector<8x128xf32>
    %c0_9 = arith.constant 0 : index
    %c0_10 = arith.constant 0 : index
    %4 = vector.load %arg5[%c0_9, %c0_10] : memref<8x128xf32, #tpu.memory_space<vmem>>, vector<8x128xf32>
    %c0_11 = arith.constant 0 : index
    %c0_12 = arith.constant 0 : index
    %5 = vector.load %arg6[%c0_11, %c0_12] : memref<128x128xf32, #tpu.memory_space<vmem>>, vector<128x128xf32>
    %cst = arith.constant dense<0.000000e+00> : vector<8x128xf32>
    %6 = tpu.matmul %0, %5, %cst {dimension_numbers = #tpu.dot_dimension_numbers<[1], [0], [0], [1], [0, 0, 1, 1], [], []>} : vector<8x128xf32>, vector<128x128xf32>, vector<8x128xf32> -> vector<8x128xf32>
    %c0_13 = arith.constant 0 : index
    %c0_14 = arith.constant 0 : index
    %7 = vector.load %arg7[%c0_13, %c0_14] : memref<1x128xf32, #tpu.memory_space<vmem>>, vector<1x128xf32>
    %8 = vector.broadcast %7 : vector<1x128xf32> to vector<8x128xf32>
    %9 = arith.addf %6, %8 : vector<8x128xf32>
    %10 = arith.truncf %9 : vector<8x128xf32> to vector<8x128xbf16>
    %11 = vector.shape_cast %4 : vector<8x128xf32> to vector<8x1x128xf32>
    %12 = tpu.transpose %11, [0, 2, 1] : vector<8x1x128xf32> -> vector<8x128x1xf32>
    %13 = arith.truncf %12 : vector<8x128x1xf32> to vector<8x128x1xbf16>
    %c0_15 = arith.constant 0 : index
    %c0_16 = arith.constant 0 : index
    %14 = vector.load %arg8[%c0_15, %c0_16] : memref<1x128xf32, #tpu.memory_space<vmem>>, vector<1x128xf32>
    %15 = arith.truncf %14 : vector<1x128xf32> to vector<1x128xbf16>
    %16 = vector.shape_cast %15 : vector<1x128xbf16> to vector<1x1x128xbf16>
    %17 = vector.shape_cast %10 : vector<8x128xbf16> to vector<8x1x128xbf16>
    %18 = vector.broadcast %17 : vector<8x1x128xbf16> to vector<8x128x128xbf16>
    %19 = arith.addf %2, %18 : vector<8x128x128xbf16>
    %20 = vector.broadcast %13 : vector<8x128x1xbf16> to vector<8x128x128xbf16>
    %21 = vector.broadcast %16 : vector<1x1x128xbf16> to vector<8x128x128xbf16>
    %22 = arith.mulf %20, %21 : vector<8x128x128xbf16>
    %23 = arith.addf %19, %22 : vector<8x128x128xbf16>
    %24 = math.tanh %23 : vector<8x128x128xbf16>
    %c0_17 = arith.constant 0 : index
    %c0_18 = arith.constant 0 : index
    %25 = vector.load %arg9[%c0_17, %c0_18] : memref<1x128xf32, #tpu.memory_space<vmem>>, vector<1x128xf32>
    %26 = arith.truncf %25 : vector<1x128xf32> to vector<1x128xbf16>
    %27 = vector.shape_cast %26 : vector<1x128xbf16> to vector<1x1x128xbf16>
    %28 = vector.shape_cast %27 : vector<1x1x128xbf16> to vector<1x1x128xbf16>
    %29 = vector.broadcast %28 : vector<1x1x128xbf16> to vector<8x1x128xbf16>
    "tpu.trace_start"() <{level = 10 : i32, message = "bqn,btn->bqt"}> : () -> ()
    %cst_19 = arith.constant dense<0.000000e+00> : vector<8x1x128xf32>
    %30 = tpu.matmul %29, %24, %cst_19 {dimension_numbers = #tpu.dot_dimension_numbers<[2], [2], [1], [1], [0, 0, 0, 1, 1, 1], [0], [0]>} : vector<8x1x128xbf16>, vector<8x128x128xbf16>, vector<8x1x128xf32> -> vector<8x1x128xf32>
    "tpu.trace_stop"() : () -> ()
    %31 = vector.shape_cast %30 : vector<8x1x128xf32> to vector<8x128xf32>
    %cst_20 = arith.constant 1.000000e+00 : f32
    %32 = vector.broadcast %cst_20 : f32 to vector<8x128xf32>
    %33 = arith.subf %3, %32 : vector<8x128xf32>
    %cst_21 = arith.constant 1.000000e+09 : f32
    %34 = vector.broadcast %cst_21 : f32 to vector<8x128xf32>
    %35 = arith.mulf %33, %34 : vector<8x128xf32>
    %36 = arith.addf %31, %35 : vector<8x128xf32>
    %cst_22 = arith.constant dense<0xFF800000> : vector<8xf32>
    %37 = vector.multi_reduction <maximumf>, %36, %cst_22 [1] : vector<8x128xf32> to vector<8xf32>
    %38 = vector.shape_cast %37 : vector<8xf32> to vector<8x1xf32>
    %39 = vector.broadcast %38 : vector<8x1xf32> to vector<8x128xf32>
    %40 = arith.subf %36, %39 : vector<8x128xf32>
    %41 = math.exp %40 : vector<8x128xf32>
    %42 = arith.mulf %41, %3 : vector<8x128xf32>
    %cst_23 = arith.constant dense<0.000000e+00> : vector<8xf32>
    %43 = vector.multi_reduction <add>, %42, %cst_23 [1] : vector<8x128xf32> to vector<8xf32>
    %44 = vector.shape_cast %43 : vector<8xf32> to vector<8x1xf32>
    %cst_24 = arith.constant 1.000000e-30 : f32
    %45 = vector.broadcast %cst_24 : f32 to vector<8x1xf32>
    %46 = arith.maximumf %44, %45 : vector<8x1xf32>
    %47 = tpu.reciprocal %46 {approx = true} : vector<8x1xf32> -> vector<8x1xf32>
    %48 = vector.broadcast %47 : vector<8x1xf32> to vector<8x128xf32>
    %49 = arith.mulf %42, %48 : vector<8x128xf32>
    %50 = vector.shape_cast %49 : vector<8x128xf32> to vector<8x1x128xf32>
    %51 = arith.truncf %50 : vector<8x1x128xf32> to vector<8x1x128xbf16>
    "tpu.trace_start"() <{level = 10 : i32, message = "bqt,btn->bqn"}> : () -> ()
    %cst_25 = arith.constant dense<0.000000e+00> : vector<8x1x128xf32>
    %52 = tpu.matmul %51, %1, %cst_25 {dimension_numbers = #tpu.dot_dimension_numbers<[2], [1], [1], [2], [0, 0, 0, 1, 1, 2], [0], [0]>} : vector<8x1x128xbf16>, vector<8x128x128xbf16>, vector<8x1x128xf32> -> vector<8x1x128xf32>
    "tpu.trace_stop"() : () -> ()
    %53 = vector.shape_cast %52 : vector<8x1x128xf32> to vector<8x128xf32>
    %c0_26 = arith.constant 0 : index
    %c0_27 = arith.constant 0 : index
    %54 = vector.load %arg10[%c0_26, %c0_27] : memref<8x128xf32, #tpu.memory_space<vmem>>, vector<8x128xf32>
    tpu.vector_store %arg10[%c0_26, %c0_27], %53 {strides = array<i32>} : memref<8x128xf32, #tpu.memory_space<vmem>>, vector<8x128xf32>,
    %c0_28 = arith.constant 0 : index
    %c0_29 = arith.constant 0 : index
    %55 = vector.load %arg11[%c0_28, %c0_29] : memref<8x128xf32, #tpu.memory_space<vmem>>, vector<8x128xf32>
    tpu.vector_store %arg11[%c0_28, %c0_29], %49 {strides = array<i32>} : memref<8x128xf32, #tpu.memory_space<vmem>>, vector<8x128xf32>,
    %56 = arith.addf %4, %49 : vector<8x128xf32>
    %c0_30 = arith.constant 0 : index
    %c0_31 = arith.constant 0 : index
    %57 = vector.load %arg12[%c0_30, %c0_31] : memref<8x128xf32, #tpu.memory_space<vmem>>, vector<8x128xf32>
    tpu.vector_store %arg12[%c0_30, %c0_31], %56 {strides = array<i32>} : memref<8x128xf32, #tpu.memory_space<vmem>>, vector<8x128xf32>,
    return
  }
  func.func @transform_0(%arg0: i32) -> (i32, i32) {
    %c0_i32 = arith.constant 0 : i32
    %c0_i32_0 = arith.constant 0 : i32
    return %arg0, %c0_i32 : i32, i32
  }
  func.func @transform_1(%arg0: i32) -> (i32, i32, i32) {
    %c0_i32 = arith.constant 0 : i32
    %c0_i32_0 = arith.constant 0 : i32
    %c0_i32_1 = arith.constant 0 : i32
    return %arg0, %c0_i32, %c0_i32_0 : i32, i32, i32
  }
  func.func @transform_2(%arg0: i32) -> (i32, i32, i32) {
    %c0_i32 = arith.constant 0 : i32
    %c0_i32_0 = arith.constant 0 : i32
    %c0_i32_1 = arith.constant 0 : i32
    return %arg0, %c0_i32, %c0_i32_0 : i32, i32, i32
  }
  func.func @transform_3(%arg0: i32) -> (i32, i32) {
    %c0_i32 = arith.constant 0 : i32
    %c0_i32_0 = arith.constant 0 : i32
    return %arg0, %c0_i32 : i32, i32
  }
  func.func @transform_4(%arg0: i32) -> (i32, i32) {
    %c0_i32 = arith.constant 0 : i32
    %c0_i32_0 = arith.constant 0 : i32
    return %arg0, %c0_i32 : i32, i32
  }
  func.func @transform_5(%arg0: i32) -> (i32, i32) {
    %c0_i32 = arith.constant 0 : i32
    %c0_i32_0 = arith.constant 0 : i32
    %c0_i32_1 = arith.constant 0 : i32
    return %c0_i32, %c0_i32_0 : i32, i32
  }
  func.func @transform_6(%arg0: i32) -> (i32, i32) {
    %c0_i32 = arith.constant 0 : i32
    %c0_i32_0 = arith.constant 0 : i32
    %c0_i32_1 = arith.constant 0 : i32
    return %c0_i32, %c0_i32_0 : i32, i32
  }
  func.func @transform_7(%arg0: i32) -> (i32, i32) {
    %c0_i32 = arith.constant 0 : i32
    %c0_i32_0 = arith.constant 0 : i32
    %c0_i32_1 = arith.constant 0 : i32
    return %c0_i32, %c0_i32_0 : i32, i32
  }
  func.func @transform_8(%arg0: i32) -> (i32, i32) {
    %c0_i32 = arith.constant 0 : i32
    %c0_i32_0 = arith.constant 0 : i32
    %c0_i32_1 = arith.constant 0 : i32
    return %c0_i32, %c0_i32_0 : i32, i32
  }
  func.func @transform_9(%arg0: i32) -> (i32, i32) {
    %c0_i32 = arith.constant 0 : i32
    %c0_i32_0 = arith.constant 0 : i32
    return %arg0, %c0_i32 : i32, i32
  }
  func.func @transform_10(%arg0: i32) -> (i32, i32) {
    %c0_i32 = arith.constant 0 : i32
    %c0_i32_0 = arith.constant 0 : i32
    return %arg0, %c0_i32 : i32, i32
  }
  func.func @transform_11(%arg0: i32) -> (i32, i32) {
    %c0_i32 = arith.constant 0 : i32
    %c0_i32_0 = arith.constant 0 : i32
    return %arg0, %c0_i32 : i32, i32
  }
}

</mosaic_0001>

<llo_original>
// kernel: attention_step.1
$region0: #{attention_step.1}
  #allocation0 [shape = 'u32[]', space=smem, size = 0x4, offset = 0x4, fixed_abs, tag = 'smem constant byte address 0x4 - core index']
  #allocation1 [shape = 'u32[144,128]{1,0:T(1,128)}', space=vmem, size = 0x12000, scoped, tag = 'internal scratch']
  %s0 = inlined_call_operand.vmem [shape: f32[8,128], index: 0, kind: input, shape index: {}]
  %s1 = inlined_call_operand.hbm [shape: bf16[8,128,128], index: 1, kind: input, shape index: {}]
  %s2 = inlined_call_operand.hbm [shape: bf16[8,128,128], index: 2, kind: input, shape index: {}]
  %s3 = inlined_call_operand.vmem [shape: f32[8,128], index: 3, kind: input, shape index: {}]
  %s4 = inlined_call_operand.vmem [shape: f32[8,128], index: 4, kind: input, shape index: {}, may-alias: {4,11}]
  %s5 = inlined_call_operand.vmem [shape: f32[128,128], index: 5, kind: input, shape index: {}]
  %s6 = inlined_call_operand.vmem [shape: f32[1,128], index: 6, kind: input, shape index: {}]
  %s7 = inlined_call_operand.vmem [shape: f32[1,128], index: 7, kind: input, shape index: {}]
  %s8 = inlined_call_operand.vmem [shape: f32[1,128], index: 8, kind: input, shape index: {}]
  %s9 = inlined_call_operand.vmem [shape: f32[8,128], index: 9, kind: output, shape index: {0}]
  %s10 = inlined_call_operand.vmem [shape: f32[8,128], index: 10, kind: output, shape index: {1}]
  %s11 = inlined_call_operand.vmem [shape: f32[8,128], index: 11, kind: output, shape index: {2}, may-alias: {4,11}]
  %12 = xla_tuple %s9, %s10, %s11
  %s13 = sld [smem:[#allocation0]]
  $region70: #{attention_step.1} parent=0
    _
  %s15 = ssub.s32 1, %s13
  %s16 = scalar_select 0, %s15, %s13
  $region1: #{attention_step.1} parent=0
    #allocation2 [shape = 'u8[262144]{0}', space=vmem, size = 0x40000, scoped, tag = 'input window, operand 1, single buffered']
    #allocation3 [shape = 's32[1]{0}', space=sflag, size = 0x4, scoped, tag = 'scoped memory for attention_step.1']
    #allocation4 [shape = 'u8[262144]{0}', space=vmem, size = 0x40000, scoped, tag = 'input window, operand 2, single buffered']
    #allocation5 [shape = 's32[1]{0}', space=sflag, size = 0x4, scoped, tag = 'scoped memory for attention_step.1']
    %17 = vsyncpa [#allocation3], 0
    %18 = vsyncpa [#allocation5], 0
    // Predicated region
    $region2: #{attention_step.1} parent=1 // pred_check
      _
    $region3: #{attention_step.1} parent=1 // pred_check_branch
      %20 = sbr.rel (0) target = $region5
    $region4: #{attention_step.1} parent=1 // pred_region
      _
    $region5: #{attention_step.1} parent=1 // pred_fallthru
      _
    // Predicated region
    $region6: #{attention_step.1} parent=1 // pred_check
      _
    $region7: #{attention_step.1} parent=1 // pred_check_branch
      %22 = sbr.rel (0) target = $region9
    $region8: #{attention_step.1} parent=1 // pred_region
      %s24 = ssub.s32 8192, 8192
      %25 = vsyncadd [#allocation3], %s24
      %s26 = sshll.u32 [#allocation2], 4
      %s27 = int_to_ptr.vmem [resolvable:$true] %s26
      %32 = dma.hbm_to_vmem [thread:$0]  %s1, 8192, %s27, [#allocation3], 64, 64, 4
    $region9: #{attention_step.1} parent=1 // pred_fallthru
      _
    // Predicated region
    $region10: #{attention_step.1} parent=1 // pred_check
      _
    $region11: #{attention_step.1} parent=1 // pred_check_branch
      %34 = sbr.rel (0) target = $region13
    $region12: #{attention_step.1} parent=1 // pred_region
      %s36 = ssub.s32 8192, 8192
      %37 = vsyncadd [#allocation5], %s36
      %s38 = sshll.u32 [#allocation4], 4
      %s39 = int_to_ptr.vmem [resolvable:$true] %s38
      %44 = dma.hbm_to_vmem [thread:$0]  %s2, 8192, %s39, [#allocation5], 64, 64, 4
    $region13: #{attention_step.1} parent=1 // pred_fallthru
      _
    // Predicated region
    $region14: #{attention_step.1} parent=1 // pred_check
      _
    $region15: #{attention_step.1} parent=1 // pred_check_branch
      %46 = sbr.rel (0) target = $region17
    $region16: #{attention_step.1} parent=1 // pred_region
      _
    $region17: #{attention_step.1} parent=1 // pred_fallthru
      _
    // Predicated region
    $region18: #{attention_step.1} parent=1 // pred_check
      _
    $region19: #{attention_step.1} parent=1 // pred_check_branch
      %48 = sbr.rel (0) target = $region21
    $region20: #{attention_step.1} parent=1 // pred_region
      _
    $region21: #{attention_step.1} parent=1 // pred_fallthru
      _
    // Predicated region
    $region22: #{attention_step.1} parent=1 // pred_check
      _
    $region23: #{attention_step.1} parent=1 // pred_check_branch
      %50 = sbr.rel (0) target = $region25
    $region24: #{attention_step.1} parent=1 // pred_region
      _
    $region25: #{attention_step.1} parent=1 // pred_fallthru
      _
    // Predicated region
    $region26: #{attention_step.1} parent=1 // pred_check
      _
    $region27: #{attention_step.1} parent=1 // pred_check_branch
      %52 = sbr.rel (0) target = $region29
    $region28: #{attention_step.1} parent=1 // pred_region
      _
    $region29: #{attention_step.1} parent=1 // pred_fallthru
      _
    // Predicated region
    $region30: #{attention_step.1} parent=1 // pred_check
      _
    $region31: #{attention_step.1} parent=1 // pred_check_branch
      %54 = sbr.rel (0) target = $region33
    $region32: #{attention_step.1} parent=1 // pred_region
      _
    $region33: #{attention_step.1} parent=1 // pred_fallthru
      _
    // Predicated region
    $region34: #{attention_step.1} parent=1 // pred_check
      _
    $region35: #{attention_step.1} parent=1 // pred_check_branch
      %56 = sbr.rel (0) target = $region37
    $region36: #{attention_step.1} parent=1 // pred_region
      _
    $region37: #{attention_step.1} parent=1 // pred_fallthru
      _
    // Predicated region
    $region38: #{attention_step.1} parent=1 // pred_check
      _
    $region39: #{attention_step.1} parent=1 // pred_check_branch
      %58 = sbr.rel (0) target = $region41
    $region40: #{attention_step.1} parent=1 // pred_region
      %59 = dma.done [#allocation3], 8192
    $region41: #{attention_step.1} parent=1 // pred_fallthru
      _
    // Predicated region
    $region42: #{attention_step.1} parent=1 // pred_check
      _
    $region43: #{attention_step.1} parent=1 // pred_check_branch
      %61 = sbr.rel (0) target = $region45
    $region44: #{attention_step.1} parent=1 // pred_region
      %62 = dma.done [#allocation5], 8192
    $region45: #{attention_step.1} parent=1 // pred_fallthru
      _
    %v64 = vld [vmem:[%s0] sm:$0xff]
    %v65 = vld [vmem:[#allocation2] sm:$0xf]
    %v66 = vld [vmem:[#allocation2 + $0x4] sm:$0xf]
    %v67 = vld [vmem:[#allocation2 + $0x8] sm:$0xf]
    %v68 = vld [vmem:[#allocation2 + $0xc] sm:$0xf]
    %v69 = vld [vmem:[#allocation2 + $0x10] sm:$0xf]
    %v70 = vld [vmem:[#allocation2 + $0x14] sm:$0xf]
    %v71 = vld [vmem:[#allocation2 + $0x18] sm:$0xf]
    %v72 = vld [vmem:[#allocation2 + $0x1c] sm:$0xf]
    %v73 = vld [vmem:[#allocation2 + $0x20] sm:$0xf]
    %v74 = vld [vmem:[#allocation2 + $0x24] sm:$0xf]
    %v75 = vld [vmem:[#allocation2 + $0x28] sm:$0xf]
    %v76 = vld [vmem:[#allocation2 + $0x2c] sm:$0xf]
    %v77 = vld [vmem:[#allocation2 + $0x30] sm:$0xf]
    %v78 = vld [vmem:[#allocation2 + $0x34] sm:$0xf]
    %v79 = vld [vmem:[#allocation2 + $0x38] sm:$0xf]
    %v80 = vld [vmem:[#allocation2 + $0x3c] sm:$0xf]
    %v81 = vld [vmem:[#allocation2 + $0x40] sm:$0xf]
    %v82 = vld [vmem:[#allocation2 + $0x44] sm:$0xf]
    %v83 = vld [vmem:[#allocation2 + $0x48] sm:$0xf]
    %v84 = vld [vmem:[#allocation2 + $0x4c] sm:$0xf]
    %v85 = vld [vmem:[#allocation2 + $0x50] sm:$0xf]
    %v86 = vld [vmem:[#allocation2 + $0x54] sm:$0xf]
    %v87 = vld [vmem:[#allocation2 + $0x58] sm:$0xf]
    %v88 = vld [vmem:[#allocation2 + $0x5c] sm:$0xf]
    %v89 = vld [vmem:[#allocation2 + $0x60] sm:$0xf]
    %v90 = vld [vmem:[#allocation2 + $0x64] sm:$0xf]
    %v91 = vld [vmem:[#allocation2 + $0x68] sm:$0xf]
    %v92 = vld [vmem:[#allocation2 + $0x6c] sm:$0xf]
    %v93 = vld [vmem:[#allocation2 + $0x70] sm:$0xf]
    %v94 = vld [vmem:[#allocation2 + $0x74] sm:$0xf]
    %v95 = vld [vmem:[#allocation2 + $0x78] sm:$0xf]
    %v96 = vld [vmem:[#allocation2 + $0x7c] sm:$0xf]
    %v97 = vld [vmem:[#allocation2 + $0x80] sm:$0xf]
    %v98 = vld [vmem:[#allocation2 + $0x84] sm:$0xf]
    %v99 = vld [vmem:[#allocation2 + $0x88] sm:$0xf]
    %v100 = vld [vmem:[#allocation2 + $0x8c] sm:$0xf]
    %v101 = vld [vmem:[#allocation2 + $0x90] sm:$0xf]
    %v102 = vld [vmem:[#allocation2 + $0x94] sm:$0xf]
    %v103 = vld [vmem:[#allocation2 + $0x98] sm:$0xf]
    %v104 = vld [vmem:[#allocation2 + $0x9c] sm:$0xf]
    %v105 = vld [vmem:[#allocation2 + $0xa0] sm:$0xf]
    %v106 = vld [vmem:[#allocation2 + $0xa4] sm:$0xf]
    %v107 = vld [vmem:[#allocation2 + $0xa8] sm:$0xf]
    %v108 = vld [vmem:[#allocation2 + $0xac] sm:$0xf]
    %v109 = vld [vmem:[#allocation2 + $0xb0] sm:$0xf]
    %v110 = vld [vmem:[#allocation2 + $0xb4] sm:$0xf]
    %v111 = vld [vmem:[#allocation2 + $0xb8] sm:$0xf]
    %v112 = vld [vmem:[#allocation2 + $0xbc] sm:$0xf]
    %v113 = vld [vmem:[#allocation2 + $0xc0] sm:$0xf]
    %v114 = vld [vmem:[#allocation2 + $0xc4] sm:$0xf]
    %v115 = vld [vmem:[#allocation2 + $0xc8] sm:$0xf]
    %v116 = vld [vmem:[#allocation2 + $0xcc] sm:$0xf]
    %v117 = vld [vmem:[#allocation2 + $0xd0] sm:$0xf]
    %v118 = vld [vmem:[#allocation2 + $0xd4] sm:$0xf]
    %v119 = vld [vmem:[#allocation2 + $0xd8] sm:$0xf]
    %v120 = vld [vmem:[#allocation2 + $0xdc] sm:$0xf]
    %v121 = vld [vmem:[#allocation2 + $0xe0] sm:$0xf]
    %v122 = vld [vmem:[#allocation2 + $0xe4] sm:$0xf]
    %v123 = vld [vmem:[#allocation2 + $0xe8] sm:$0xf]
    %v124 = vld [vmem:[#allocation2 + $0xec] sm:$0xf]
    %v125 = vld [vmem:[#allocation2 + $0xf0] sm:$0xf]
    %v126 = vld [vmem:[#allocation2 + $0xf4] sm:$0xf]
    %v127 = vld [vmem:[#allocation2 + $0xf8] sm:$0xf]
    %v128 = vld [vmem:[#allocation2 + $0xfc] sm:$0xf]
    %v129 = vld [vmem:[#allocation2 + $0x100] sm:$0xf]
    %v130 = vld [vmem:[#allocation2 + $0x104] sm:$0xf]
    %v131 = vld [vmem:[#allocation2 + $0x108] sm:$0xf]
    %v132 = vld [vmem:[#allocation2 + $0x10c] sm:$0xf]
    %v133 = vld [vmem:[#allocation2 + $0x110] sm:$0xf]
    %v134 = vld [vmem:[#allocation2 + $0x114] sm:$0xf]
    %v135 = vld [vmem:[#allocation2 + $0x118] sm:$0xf]
    %v136 = vld [vmem:[#allocation2 + $0x11c] sm:$0xf]
    %v137 = vld [vmem:[#allocation2 + $0x120] sm:$0xf]
    %v138 = vld [vmem:[#allocation2 + $0x124] sm:$0xf]
    %v139 = vld [vmem:[#allocation2 + $0x128] sm:$0xf]
    %v140 = vld [vmem:[#allocation2 + $0x12c] sm:$0xf]
    %v141 = vld [vmem:[#allocation2 + $0x130] sm:$0xf]
    %v142 = vld [vmem:[#allocation2 + $0x134] sm:$0xf]
    %v143 = vld [vmem:[#allocation2 + $0x138] sm:$0xf]
    %v144 = vld [vmem:[#allocation2 + $0x13c] sm:$0xf]
    %v145 = vld [vmem:[#allocation2 + $0x140] sm:$0xf]
    %v146 = vld [vmem:[#allocation2 + $0x144] sm:$0xf]
    %v147 = vld [vmem:[#allocation2 + $0x148] sm:$0xf]
    %v148 = vld [vmem:[#allocation2 + $0x14c] sm:$0xf]
    %v149 = vld [vmem:[#allocation2 + $0x150] sm:$0xf]
    %v150 = vld [vmem:[#allocation2 + $0x154] sm:$0xf]
    %v151 = vld [vmem:[#allocation2 + $0x158] sm:$0xf]
    %v152 = vld [vmem:[#allocation2 + $0x15c] sm:$0xf]
    %v153 = vld [vmem:[#allocation2 + $0x160] sm:$0xf]
    %v154 = vld [vmem:[#allocation2 + $0x164] sm:$0xf]
    %v155 = vld [vmem:[#allocation2 + $0x168] sm:$0xf]
    %v156 = vld [vmem:[#allocation2 + $0x16c] sm:$0xf]
    %v157 = vld [vmem:[#allocation2 + $0x170] sm:$0xf]
    %v158 = vld [vmem:[#allocation2 + $0x174] sm:$0xf]
    %v159 = vld [vmem:[#allocation2 + $0x178] sm:$0xf]
    %v160 = vld [vmem:[#allocation2 + $0x17c] sm:$0xf]
    %v161 = vld [vmem:[#allocation2 + $0x180] sm:$0xf]
    %v162 = vld [vmem:[#allocation2 + $0x184] sm:$0xf]
    %v163 = vld [vmem:[#allocation2 + $0x188] sm:$0xf]
    %v164 = vld [vmem:[#allocation2 + $0x18c] sm:$0xf]
    %v165 = vld [vmem:[#allocation2 + $0x190] sm:$0xf]
    %v166 = vld [vmem:[#allocation2 + $0x194] sm:$0xf]
    %v167 = vld [vmem:[#allocation2 + $0x198] sm:$0xf]
    %v168 = vld [vmem:[#allocation2 + $0x19c] sm:$0xf]
    %v169 = vld [vmem:[#allocation2 + $0x1a0] sm:$0xf]
    %v170 = vld [vmem:[#allocation2 + $0x1a4] sm:$0xf]
    %v171 = vld [vmem:[#allocation2 + $0x1a8] sm:$0xf]
    %v172 = vld [vmem:[#allocation2 + $0x1ac] sm:$0xf]
    %v173 = vld [vmem:[#allocation2 + $0x1b0] sm:$0xf]
    %v174 = vld [vmem:[#allocation2 + $0x1b4] sm:$0xf]
    %v175 = vld [vmem:[#allocation2 + $0x1b8] sm:$0xf]
    %v176 = vld [vmem:[#allocation2 + $0x1bc] sm:$0xf]
    %v177 = vld [vmem:[#allocation2 + $0x1c0] sm:$0xf]
    %v178 = vld [vmem:[#allocation2 + $0x1c4] sm:$0xf]
    %v179 = vld [vmem:[#allocation2 + $0x1c8] sm:$0xf]
    %v180 = vld [vmem:[#allocation2 + $0x1cc] sm:$0xf]
    %v181 = vld [vmem:[#allocation2 + $0x1d0] sm:$0xf]
    %v182 = vld [vmem:[#allocation2 + $0x1d4] sm:$0xf]
    %v183 = vld [vmem:[#allocation2 + $0x1d8] sm:$0xf]
    %v184 = vld [vmem:[#allocation2 + $0x1dc] sm:$0xf]
    %v185 = vld [vmem:[#allocation2 + $0x1e0] sm:$0xf]
    %v186 = vld [vmem:[#allocation2 + $0x1e4] sm:$0xf]
    %v187 = vld [vmem:[#allocation2 + $0x1e8] sm:$0xf]
    %v188 = vld [vmem:[#allocation2 + $0x1ec] sm:$0xf]
    %v189 = vld [vmem:[#allocation2 + $0x1f0] sm:$0xf]
    %v190 = vld [vmem:[#allocation2 + $0x1f4] sm:$0xf]
    %v191 = vld [vmem:[#allocation2 + $0x1f8] sm:$0xf]
    %v192 = vld [vmem:[#allocation2 + $0x1fc] sm:$0xf]
    %v193 = vld [vmem:[#allocation4] sm:$0xf]
    %v194 = vld [vmem:[#allocation4 + $0x4] sm:$0xf]
    %v195 = vld [vmem:[#allocation4 + $0x8] sm:$0xf]
    %v196 = vld [vmem:[#allocation4 + $0xc] sm:$0xf]
    %v197 = vld [vmem:[#allocation4 + $0x10] sm:$0xf]
    %v198 = vld [vmem:[#allocation4 + $0x14] sm:$0xf]
    %v199 = vld [vmem:[#allocation4 + $0x18] sm:$0xf]
    %v200 = vld [vmem:[#allocation4 + $0x1c] sm:$0xf]
    %v201 = vld [vmem:[#allocation4 + $0x20] sm:$0xf]
    %v202 = vld [vmem:[#allocation4 + $0x24] sm:$0xf]
    %v203 = vld [vmem:[#allocation4 + $0x28] sm:$0xf]
    %v204 = vld [vmem:[#allocation4 + $0x2c] sm:$0xf]
    %v205 = vld [vmem:[#allocation4 + $0x30] sm:$0xf]
    %v206 = vld [vmem:[#allocation4 + $0x34] sm:$0xf]
    %v207 = vld [vmem:[#allocation4 + $0x38] sm:$0xf]
    %v208 = vld [vmem:[#allocation4 + $0x3c] sm:$0xf]
    %v209 = vld [vmem:[#allocation4 + $0x40] sm:$0xf]
    %v210 = vld [vmem:[#allocation4 + $0x44] sm:$0xf]
    %v211 = vld [vmem:[#allocation4 + $0x48] sm:$0xf]
    %v212 = vld [vmem:[#allocation4 + $0x4c] sm:$0xf]
    %v213 = vld [vmem:[#allocation4 + $0x50] sm:$0xf]
    %v214 = vld [vmem:[#allocation4 + $0x54] sm:$0xf]
    %v215 = vld [vmem:[#allocation4 + $0x58] sm:$0xf]
    %v216 = vld [vmem:[#allocation4 + $0x5c] sm:$0xf]
    %v217 = vld [vmem:[#allocation4 + $0x60] sm:$0xf]
    %v218 = vld [vmem:[#allocation4 + $0x64] sm:$0xf]
    %v219 = vld [vmem:[#allocation4 + $0x68] sm:$0xf]
    %v220 = vld [vmem:[#allocation4 + $0x6c] sm:$0xf]
    %v221 = vld [vmem:[#allocation4 + $0x70] sm:$0xf]
    %v222 = vld [vmem:[#allocation4 + $0x74] sm:$0xf]
    %v223 = vld [vmem:[#allocation4 + $0x78] sm:$0xf]
    %v224 = vld [vmem:[#allocation4 + $0x7c] sm:$0xf]
    %v225 = vld [vmem:[#allocation4 + $0x80] sm:$0xf]
    %v226 = vld [vmem:[#allocation4 + $0x84] sm:$0xf]
    %v227 = vld [vmem:[#allocation4 + $0x88] sm:$0xf]
    %v228 = vld [vmem:[#allocation4 + $0x8c] sm:$0xf]
    %v229 = vld [vmem:[#allocation4 + $0x90] sm:$0xf]
    %v230 = vld [vmem:[#allocation4 + $0x94] sm:$0xf]
    %v231 = vld [vmem:[#allocation4 + $0x98] sm:$0xf]
    %v232 = vld [vmem:[#allocation4 + $0x9c] sm:$0xf]
    %v233 = vld [vmem:[#allocation4 + $0xa0] sm:$0xf]
    %v234 = vld [vmem:[#allocation4 + $0xa4] sm:$0xf]
    %v235 = vld [vmem:[#allocation4 + $0xa8] sm:$0xf]
    %v236 = vld [vmem:[#allocation4 + $0xac] sm:$0xf]
    %v237 = vld [vmem:[#allocation4 + $0xb0] sm:$0xf]
    %v238 = vld [vmem:[#allocation4 + $0xb4] sm:$0xf]
    %v239 = vld [vmem:[#allocation4 + $0xb8] sm:$0xf]
    %v240 = vld [vmem:[#allocation4 + $0xbc] sm:$0xf]
    %v241 = vld [vmem:[#allocation4 + $0xc0] sm:$0xf]
    %v242 = vld [vmem:[#allocation4 + $0xc4] sm:$0xf]
    %v243 = vld [vmem:[#allocation4 + $0xc8] sm:$0xf]
    %v244 = vld [vmem:[#allocation4 + $0xcc] sm:$0xf]
    %v245 = vld [vmem:[#allocation4 + $0xd0] sm:$0xf]
    %v246 = vld [vmem:[#allocation4 + $0xd4] sm:$0xf]
    %v247 = vld [vmem:[#allocation4 + $0xd8] sm:$0xf]
    %v248 = vld [vmem:[#allocation4 + $0xdc] sm:$0xf]
    %v249 = vld [vmem:[#allocation4 + $0xe0] sm:$0xf]
    %v250 = vld [vmem:[#allocation4 + $0xe4] sm:$0xf]
    %v251 = vld [vmem:[#allocation4 + $0xe8] sm:$0xf]
    %v252 = vld [vmem:[#allocation4 + $0xec] sm:$0xf]
    %v253 = vld [vmem:[#allocation4 + $0xf0] sm:$0xf]
    %v254 = vld [vmem:[#allocation4 + $0xf4] sm:$0xf]
    %v255 = vld [vmem:[#allocation4 + $0xf8] sm:$0xf]
    %v256 = vld [vmem:[#allocation4 + $0xfc] sm:$0xf]
    %v257 = vld [vmem:[#allocation4 + $0x100] sm:$0xf]
    %v258 = vld [vmem:[#allocation4 + $0x104] sm:$0xf]
    %v259 = vld [vmem:[#allocation4 + $0x108] sm:$0xf]
    %v260 = vld [vmem:[#allocation4 + $0x10c] sm:$0xf]
    %v261 = vld [vmem:[#allocation4 + $0x110] sm:$0xf]
    %v262 = vld [vmem:[#allocation4 + $0x114] sm:$0xf]
    %v263 = vld [vmem:[#allocation4 + $0x118] sm:$0xf]
    %v264 = vld [vmem:[#allocation4 + $0x11c] sm:$0xf]
    %v265 = vld [vmem:[#allocation4 + $0x120] sm:$0xf]
    %v266 = vld [vmem:[#allocation4 + $0x124] sm:$0xf]
    %v267 = vld [vmem:[#allocation4 + $0x128] sm:$0xf]
    %v268 = vld [vmem:[#allocation4 + $0x12c] sm:$0xf]
    %v269 = vld [vmem:[#allocation4 + $0x130] sm:$0xf]
    %v270 = vld [vmem:[#allocation4 + $0x134] sm:$0xf]
    %v271 = vld [vmem:[#allocation4 + $0x138] sm:$0xf]
    %v272 = vld [vmem:[#allocation4 + $0x13c] sm:$0xf]
    %v273 = vld [vmem:[#allocation4 + $0x140] sm:$0xf]
    %v274 = vld [vmem:[#allocation4 + $0x144] sm:$0xf]
    %v275 = vld [vmem:[#allocation4 + $0x148] sm:$0xf]
    %v276 = vld [vmem:[#allocation4 + $0x14c] sm:$0xf]
    %v277 = vld [vmem:[#allocation4 + $0x150] sm:$0xf]
    %v278 = vld [vmem:[#allocation4 + $0x154] sm:$0xf]
    %v279 = vld [vmem:[#allocation4 + $0x158] sm:$0xf]
    %v280 = vld [vmem:[#allocation4 + $0x15c] sm:$0xf]
    %v281 = vld [vmem:[#allocation4 + $0x160] sm:$0xf]
    %v282 = vld [vmem:[#allocation4 + $0x164] sm:$0xf]
    %v283 = vld [vmem:[#allocation4 + $0x168] sm:$0xf]
    %v284 = vld [vmem:[#allocation4 + $0x16c] sm:$0xf]
    %v285 = vld [vmem:[#allocation4 + $0x170] sm:$0xf]
    %v286 = vld [vmem:[#allocation4 + $0x174] sm:$0xf]
    %v287 = vld [vmem:[#allocation4 + $0x178] sm:$0xf]
    %v288 = vld [vmem:[#allocation4 + $0x17c] sm:$0xf]
    %v289 = vld [vmem:[#allocation4 + $0x180] sm:$0xf]
    %v290 = vld [vmem:[#allocation4 + $0x184] sm:$0xf]
    %v291 = vld [vmem:[#allocation4 + $0x188] sm:$0xf]
    %v292 = vld [vmem:[#allocation4 + $0x18c] sm:$0xf]
    %v293 = vld [vmem:[#allocation4 + $0x190] sm:$0xf]
    %v294 = vld [vmem:[#allocation4 + $0x194] sm:$0xf]
    %v295 = vld [vmem:[#allocation4 + $0x198] sm:$0xf]
    %v296 = vld [vmem:[#allocation4 + $0x19c] sm:$0xf]
    %v297 = vld [vmem:[#allocation4 + $0x1a0] sm:$0xf]
    %v298 = vld [vmem:[#allocation4 + $0x1a4] sm:$0xf]
    %v299 = vld [vmem:[#allocation4 + $0x1a8] sm:$0xf]
    %v300 = vld [vmem:[#allocation4 + $0x1ac] sm:$0xf]
    %v301 = vld [vmem:[#allocation4 + $0x1b0] sm:$0xf]
    %v302 = vld [vmem:[#allocation4 + $0x1b4] sm:$0xf]
    %v303 = vld [vmem:[#allocation4 + $0x1b8] sm:$0xf]
    %v304 = vld [vmem:[#allocation4 + $0x1bc] sm:$0xf]
    %v305 = vld [vmem:[#allocation4 + $0x1c0] sm:$0xf]
    %v306 = vld [vmem:[#allocation4 + $0x1c4] sm:$0xf]
    %v307 = vld [vmem:[#allocation4 + $0x1c8] sm:$0xf]
    %v308 = vld [vmem:[#allocation4 + $0x1cc] sm:$0xf]
    %v309 = vld [vmem:[#allocation4 + $0x1d0] sm:$0xf]
    %v310 = vld [vmem:[#allocation4 + $0x1d4] sm:$0xf]
    %v311 = vld [vmem:[#allocation4 + $0x1d8] sm:$0xf]
    %v312 = vld [vmem:[#allocation4 + $0x1dc] sm:$0xf]
    %v313 = vld [vmem:[#allocation4 + $0x1e0] sm:$0xf]
    %v314 = vld [vmem:[#allocation4 + $0x1e4] sm:$0xf]
    %v315 = vld [vmem:[#allocation4 + $0x1e8] sm:$0xf]
    %v316 = vld [vmem:[#allocation4 + $0x1ec] sm:$0xf]
    %v317 = vld [vmem:[#allocation4 + $0x1f0] sm:$0xf]
    %v318 = vld [vmem:[#allocation4 + $0x1f4] sm:$0xf]
    %v319 = vld [vmem:[#allocation4 + $0x1f8] sm:$0xf]
    %v320 = vld [vmem:[#allocation4 + $0x1fc] sm:$0xf]
    %v321 = vld [vmem:[%s3] sm:$0xff]
    %v322 = vld [vmem:[%s4] sm:$0xff]
    %v323 = vld [vmem:[%s5] sm:$0xff]
    %v324 = vld [vmem:[%s5 + $0x8] sm:$0xff]
    %v325 = vld [vmem:[%s5 + $0x10] sm:$0xff]
    %v326 = vld [vmem:[%s5 + $0x18] sm:$0xff]
    %v327 = vld [vmem:[%s5 + $0x20] sm:$0xff]
    %v328 = vld [vmem:[%s5 + $0x28] sm:$0xff]
    %v329 = vld [vmem:[%s5 + $0x30] sm:$0xff]
    %v330 = vld [vmem:[%s5 + $0x38] sm:$0xff]
    %v331 = vld [vmem:[%s5 + $0x40] sm:$0xff]
    %v332 = vld [vmem:[%s5 + $0x48] sm:$0xff]
    %v333 = vld [vmem:[%s5 + $0x50] sm:$0xff]
    %v334 = vld [vmem:[%s5 + $0x58] sm:$0xff]
    %v335 = vld [vmem:[%s5 + $0x60] sm:$0xff]
    %v336 = vld [vmem:[%s5 + $0x68] sm:$0xff]
    %v337 = vld [vmem:[%s5 + $0x70] sm:$0xff]
    %v338 = vld [vmem:[%s5 + $0x78] sm:$0xff]
    %v339 = vld [vmem:[%s6] sm:$0x1]
    %v341 = vlaneseq
    %v342 = vshrl.u32 %v341, 7
    %v343 = vsub.s32 0, %v342
    %v344 = vrot.slane %v339, %v343
    %346 = vmatprep.subr.mxu0 0.0
    %347 = vmatpush1.msra.mxu0 %v323
    %348 = vmatprep.subr.mxu0 0.0
    %349 = vmatpush1.msra.mxu0 %v324
    %350 = vmatprep.subr.mxu0 0.0
    %351 = vmatpush1.msra.mxu0 %v325
    %352 = vmatprep.subr.mxu0 0.0
    %353 = vmatpush1.msra.mxu0 %v326
    %354 = vmatprep.subr.mxu0 0.0
    %355 = vmatpush1.msra.mxu0 %v327
    %356 = vmatprep.subr.mxu0 0.0
    %357 = vmatpush1.msra.mxu0 %v328
    %358 = vmatprep.subr.mxu0 0.0
    %359 = vmatpush1.msra.mxu0 %v329
    %360 = vmatprep.subr.mxu0 0.0
    %361 = vmatpush1.msra.mxu0 %v330
    %362 = vmatprep.subr.mxu0 0.0
    %363 = vmatpush1.msra.mxu0 %v331
    %364 = vmatprep.subr.mxu0 0.0
    %365 = vmatpush1.msra.mxu0 %v332
    %366 = vmatprep.subr.mxu0 0.0
    %367 = vmatpush1.msra.mxu0 %v333
    %368 = vmatprep.subr.mxu0 0.0
    %369 = vmatpush1.msra.mxu0 %v334
    %370 = vmatprep.subr.mxu0 0.0
    %371 = vmatpush1.msra.mxu0 %v335
    %372 = vmatprep.subr.mxu0 0.0
    %373 = vmatpush1.msra.mxu0 %v336
    %374 = vmatprep.subr.mxu0 0.0
    %375 = vmatpush1.msra.mxu0 %v337
    %376 = vmatprep.subr.mxu0 0.0
    %377 = vmatpush1.msra.mxu0 %v338
    %378 = vmatprep.subr.mxu0 0.0
    %379 = vmatpush1.msra.mxu0 0.0
    %380 = vmatprep.subr.mxu0 0.0
    %381 = vmatpush1.msra.mxu0 0.0
    %382 = vmatprep.subr.mxu0 0.0
    %383 = vmatpush1.msra.mxu0 0.0
    %384 = vmatprep.subr.mxu0 0.0
    %385 = vmatpush1.msra.mxu0 0.0
    %386 = vmatprep.subr.mxu0 0.0
    %387 = vmatpush1.msra.mxu0 0.0
    %388 = vmatprep.subr.mxu0 0.0
    %389 = vmatpush1.msra.mxu0 0.0
    %390 = vmatprep.subr.mxu0 0.0
    %391 = vmatpush1.msra.mxu0 0.0
    %392 = vmatprep.subr.mxu0 0.0
    %393 = vmatpush1.msra.mxu0 0.0
    %394 = vmatprep.subr.mxu0 0.0
    %395 = vmatpush1.msra.mxu0 0.0
    %396 = vmatprep.subr.mxu0 0.0
    %397 = vmatpush1.msra.mxu0 0.0
    %398 = vmatprep.subr.mxu0 0.0
    %399 = vmatpush1.msra.mxu0 0.0
    %400 = vmatprep.subr.mxu0 0.0
    %401 = vmatpush1.msra.mxu0 0.0
    %402 = vmatprep.subr.mxu0 0.0
    %403 = vmatpush1.msra.mxu0 0.0
    %404 = vmatprep.subr.mxu0 0.0
    %405 = vmatpush1.msra.mxu0 0.0
    %406 = vmatprep.subr.mxu0 0.0
    %407 = vmatpush1.msra.mxu0 0.0
    %408 = vmatprep.subr.mxu0 0.0
    %409 = vmatpush1.msra.mxu0 0.0
    %410 = vmatprep.mubr.f32.mxu0 0.0
    %411 = vmatmul.mubr.f32.gmra.mrb[0].mxu0 %v64
    %v412 = vpop.f32.mrb[0].mxu0
    %v413 = vadd.f32 %v344, %v412
    %v414 = vpop.f32.mrb[0].mxu0
    %415 = vdwg.mxu0
    %v416 = vpack.c.bf16 %v413, %v413
    %v418 = vcombine.high %v322, %v322
    %v420 = vunpack.c.l.s4 1966171168
    %v421 = vunpack.c.0.s8 %v420
    %v422 = vlaneseq
    %v423 = vshrl.u32 %v422, 7
    %v424 = vsub.s32 %v421, %v423
    %v425 = vrot.slane %v322, %v424
    %v427 = vunpack.c.l.s4 1966171168
    %v428 = vunpack.c.0.s8 %v427
    %v429 = vlaneseq
    %v430 = vshrl.u32 %v429, 7
    %v431 = vsub.s32 %v428, %v430
    %v432 = vrot.slane %v418, %v431
    %v433 = vcombine.high %v425, %v425
    %v434 = vcombine.high %v432, %v432
    %v436 = vunpack.c.l.s4 1966171168
    %v437 = vunpack.c.0.s8 %v436
    %v438 = vlaneseq
    %v439 = vshrl.u32 %v438, 7
    %v440 = vsub.s32 %v437, %v439
    %v441 = vrot.slane %v425, %v440
    %v443 = vunpack.c.l.s4 1966171168
    %v444 = vunpack.c.0.s8 %v443
    %v445 = vlaneseq
    %v446 = vshrl.u32 %v445, 7
    %v447 = vsub.s32 %v444, %v446
    %v448 = vrot.slane %v432, %v447
    %v450 = vunpack.c.l.s4 1966171168
    %v451 = vunpack.c.0.s8 %v450
    %v452 = vlaneseq
    %v453 = vshrl.u32 %v452, 7
    %v454 = vsub.s32 %v451, %v453
    %v455 = vrot.slane %v433, %v454
    %v457 = vunpack.c.l.s4 1966171168
    %v458 = vunpack.c.0.s8 %v457
    %v459 = vlaneseq
    %v460 = vshrl.u32 %v459, 7
    %v461 = vsub.s32 %v458, %v460
    %v462 = vrot.slane %v434, %v461
    %v463 = vcombine.high %v441, %v441
    %v464 = vcombine.high %v448, %v448
    %v465 = vcombine.high %v455, %v455
    %v466 = vcombine.high %v462, %v462
    %475 = vxpose.xlu0.b32.start [1/16] %v441, 128
    %476 = vxpose.xlu0.b32.cont [2/16] 0.0, 128
    %477 = vxpose.xlu0.b32.cont [3/16] 0.0, 128
    %478 = vxpose.xlu0.b32.cont [4/16] 0.0, 128
    %479 = vxpose.xlu0.b32.cont [5/16] 0.0, 128
    %480 = vxpose.xlu0.b32.cont [6/16] 0.0, 128
    %481 = vxpose.xlu0.b32.cont [7/16] 0.0, 128
    %482 = vxpose.xlu0.b32.cont [8/16] 0.0, 128
    %483 = vxpose.xlu0.b32.cont [9/16] 0.0, 128
    %484 = vxpose.xlu0.b32.cont [10/16] 0.0, 128
    %485 = vxpose.xlu0.b32.cont [11/16] 0.0, 128
    %486 = vxpose.xlu0.b32.cont [12/16] 0.0, 128
    %487 = vxpose.xlu0.b32.cont [13/16] 0.0, 128
    %488 = vxpose.xlu0.b32.cont [14/16] 0.0, 128
    %489 = vxpose.xlu0.b32.cont [15/16] 0.0, 128
    %490 = vxpose.xlu0.b32.end [16/16] 0.0, 128
    %v491 = vpop.trf.xlu0
    %v492 = vpop.trf.xlu0
    %v493 = vpop.trf.xlu0
    %v494 = vpop.trf.xlu0
    %v495 = vpop.trf.xlu0
    %v496 = vpop.trf.xlu0
    %v497 = vpop.trf.xlu0
    %v498 = vpop.trf.xlu0
    %v499 = vpop.trf.xlu0
    %v500 = vpop.trf.xlu0
    %v501 = vpop.trf.xlu0
    %v502 = vpop.trf.xlu0
    %v503 = vpop.trf.xlu0
    %v504 = vpop.trf.xlu0
    %v505 = vpop.trf.xlu0
    %v506 = vpop.trf.xlu0
    %507 = vxpose.xlu0.b32.start [1/16] %v455, 128
    %508 = vxpose.xlu0.b32.cont [2/16] 0.0, 128
    %509 = vxpose.xlu0.b32.cont [3/16] 0.0, 128
    %510 = vxpose.xlu0.b32.cont [4/16] 0.0, 128
    %511 = vxpose.xlu0.b32.cont [5/16] 0.0, 128
    %512 = vxpose.xlu0.b32.cont [6/16] 0.0, 128
    %513 = vxpose.xlu0.b32.cont [7/16] 0.0, 128
    %514 = vxpose.xlu0.b32.cont [8/16] 0.0, 128
    %515 = vxpose.xlu0.b32.cont [9/16] 0.0, 128
    %516 = vxpose.xlu0.b32.cont [10/16] 0.0, 128
    %517 = vxpose.xlu0.b32.cont [11/16] 0.0, 128
    %518 = vxpose.xlu0.b32.cont [12/16] 0.0, 128
    %519 = vxpose.xlu0.b32.cont [13/16] 0.0, 128
    %520 = vxpose.xlu0.b32.cont [14/16] 0.0, 128
    %521 = vxpose.xlu0.b32.cont [15/16] 0.0, 128
    %522 = vxpose.xlu0.b32.end [16/16] 0.0, 128
    %v523 = vpop.trf.xlu0
    %v524 = vpop.trf.xlu0
    %v525 = vpop.trf.xlu0
    %v526 = vpop.trf.xlu0
    %v527 = vpop.trf.xlu0
    %v528 = vpop.trf.xlu0
    %v529 = vpop.trf.xlu0
    %v530 = vpop.trf.xlu0
    %v531 = vpop.trf.xlu0
    %v532 = vpop.trf.xlu0
    %v533 = vpop.trf.xlu0
    %v534 = vpop.trf.xlu0
    %v535 = vpop.trf.xlu0
    %v536 = vpop.trf.xlu0
    %v537 = vpop.trf.xlu0
    %v538 = vpop.trf.xlu0
    %539 = vxpose.xlu0.b32.start [1/16] %v463, 128
    %540 = vxpose.xlu0.b32.cont [2/16] 0.0, 128
    %541 = vxpose.xlu0.b32.cont [3/16] 0.0, 128
    %542 = vxpose.xlu0.b32.cont [4/16] 0.0, 128
    %543 = vxpose.xlu0.b32.cont [5/16] 0.0, 128
    %544 = vxpose.xlu0.b32.cont [6/16] 0.0, 128
    %545 = vxpose.xlu0.b32.cont [7/16] 0.0, 128
    %546 = vxpose.xlu0.b32.cont [8/16] 0.0, 128
    %547 = vxpose.xlu0.b32.cont [9/16] 0.0, 128
    %548 = vxpose.xlu0.b32.cont [10/16] 0.0, 128
    %549 = vxpose.xlu0.b32.cont [11/16] 0.0, 128
    %550 = vxpose.xlu0.b32.cont [12/16] 0.0, 128
    %551 = vxpose.xlu0.b32.cont [13/16] 0.0, 128
    %552 = vxpose.xlu0.b32.cont [14/16] 0.0, 128
    %553 = vxpose.xlu0.b32.cont [15/16] 0.0, 128
    %554 = vxpose.xlu0.b32.end [16/16] 0.0, 128
    %v555 = vpop.trf.xlu0
    %v556 = vpop.trf.xlu0
    %v557 = vpop.trf.xlu0
    %v558 = vpop.trf.xlu0
    %v559 = vpop.trf.xlu0
    %v560 = vpop.trf.xlu0
    %v561 = vpop.trf.xlu0
    %v562 = vpop.trf.xlu0
    %v563 = vpop.trf.xlu0
    %v564 = vpop.trf.xlu0
    %v565 = vpop.trf.xlu0
    %v566 = vpop.trf.xlu0
    %v567 = vpop.trf.xlu0
    %v568 = vpop.trf.xlu0
    %v569 = vpop.trf.xlu0
    %v570 = vpop.trf.xlu0
    %571 = vxpose.xlu0.b32.start [1/16] %v465, 128
    %572 = vxpose.xlu0.b32.cont [2/16] 0.0, 128
    %573 = vxpose.xlu0.b32.cont [3/16] 0.0, 128
    %574 = vxpose.xlu0.b32.cont [4/16] 0.0, 128
    %575 = vxpose.xlu0.b32.cont [5/16] 0.0, 128
    %576 = vxpose.xlu0.b32.cont [6/16] 0.0, 128
    %577 = vxpose.xlu0.b32.cont [7/16] 0.0, 128
    %578 = vxpose.xlu0.b32.cont [8/16] 0.0, 128
    %579 = vxpose.xlu0.b32.cont [9/16] 0.0, 128
    %580 = vxpose.xlu0.b32.cont [10/16] 0.0, 128
    %581 = vxpose.xlu0.b32.cont [11/16] 0.0, 128
    %582 = vxpose.xlu0.b32.cont [12/16] 0.0, 128
    %583 = vxpose.xlu0.b32.cont [13/16] 0.0, 128
    %584 = vxpose.xlu0.b32.cont [14/16] 0.0, 128
    %585 = vxpose.xlu0.b32.cont [15/16] 0.0, 128
    %586 = vxpose.xlu0.b32.end [16/16] 0.0, 128
    %v587 = vpop.trf.xlu0
    %v588 = vpop.trf.xlu0
    %v589 = vpop.trf.xlu0
    %v590 = vpop.trf.xlu0
    %v591 = vpop.trf.xlu0
    %v592 = vpop.trf.xlu0
    %v593 = vpop.trf.xlu0
    %v594 = vpop.trf.xlu0
    %v595 = vpop.trf.xlu0
    %v596 = vpop.trf.xlu0
    %v597 = vpop.trf.xlu0
    %v598 = vpop.trf.xlu0
    %v599 = vpop.trf.xlu0
    %v600 = vpop.trf.xlu0
    %v601 = vpop.trf.xlu0
    %v602 = vpop.trf.xlu0
    %603 = vxpose.xlu0.b32.start [1/16] %v448, 128
    %604 = vxpose.xlu0.b32.cont [2/16] 0.0, 128
    %605 = vxpose.xlu0.b32.cont [3/16] 0.0, 128
    %606 = vxpose.xlu0.b32.cont [4/16] 0.0, 128
    %607 = vxpose.xlu0.b32.cont [5/16] 0.0, 128
    %608 = vxpose.xlu0.b32.cont [6/16] 0.0, 128
    %609 = vxpose.xlu0.b32.cont [7/16] 0.0, 128
    %610 = vxpose.xlu0.b32.cont [8/16] 0.0, 128
    %611 = vxpose.xlu0.b32.cont [9/16] 0.0, 128
    %612 = vxpose.xlu0.b32.cont [10/16] 0.0, 128
    %613 = vxpose.xlu0.b32.cont [11/16] 0.0, 128
    %614 = vxpose.xlu0.b32.cont [12/16] 0.0, 128
    %615 = vxpose.xlu0.b32.cont [13/16] 0.0, 128
    %616 = vxpose.xlu0.b32.cont [14/16] 0.0, 128
    %617 = vxpose.xlu0.b32.cont [15/16] 0.0, 128
    %618 = vxpose.xlu0.b32.end [16/16] 0.0, 128
    %v619 = vpop.trf.xlu0
    %v620 = vpop.trf.xlu0
    %v621 = vpop.trf.xlu0
    %v622 = vpop.trf.xlu0
    %v623 = vpop.trf.xlu0
    %v624 = vpop.trf.xlu0
    %v625 = vpop.trf.xlu0
    %v626 = vpop.trf.xlu0
    %v627 = vpop.trf.xlu0
    %v628 = vpop.trf.xlu0
    %v629 = vpop.trf.xlu0
    %v630 = vpop.trf.xlu0
    %v631 = vpop.trf.xlu0
    %v632 = vpop.trf.xlu0
    %v633 = vpop.trf.xlu0
    %v634 = vpop.trf.xlu0
    %635 = vxpose.xlu0.b32.start [1/16] %v462, 128
    %636 = vxpose.xlu0.b32.cont [2/16] 0.0, 128
    %637 = vxpose.xlu0.b32.cont [3/16] 0.0, 128
    %638 = vxpose.xlu0.b32.cont [4/16] 0.0, 128
    %639 = vxpose.xlu0.b32.cont [5/16] 0.0, 128
    %640 = vxpose.xlu0.b32.cont [6/16] 0.0, 128
    %641 = vxpose.xlu0.b32.cont [7/16] 0.0, 128
    %642 = vxpose.xlu0.b32.cont [8/16] 0.0, 128
    %643 = vxpose.xlu0.b32.cont [9/16] 0.0, 128
    %644 = vxpose.xlu0.b32.cont [10/16] 0.0, 128
    %645 = vxpose.xlu0.b32.cont [11/16] 0.0, 128
    %646 = vxpose.xlu0.b32.cont [12/16] 0.0, 128
    %647 = vxpose.xlu0.b32.cont [13/16] 0.0, 128
    %648 = vxpose.xlu0.b32.cont [14/16] 0.0, 128
    %649 = vxpose.xlu0.b32.cont [15/16] 0.0, 128
    %650 = vxpose.xlu0.b32.end [16/16] 0.0, 128
    %v651 = vpop.trf.xlu0
    %v652 = vpop.trf.xlu0
    %v653 = vpop.trf.xlu0
    %v654 = vpop.trf.xlu0
    %v655 = vpop.trf.xlu0
    %v656 = vpop.trf.xlu0
    %v657 = vpop.trf.xlu0
    %v658 = vpop.trf.xlu0
    %v659 = vpop.trf.xlu0
    %v660 = vpop.trf.xlu0
    %v661 = vpop.trf.xlu0
    %v662 = vpop.trf.xlu0
    %v663 = vpop.trf.xlu0
    %v664 = vpop.trf.xlu0
    %v665 = vpop.trf.xlu0
    %v666 = vpop.trf.xlu0
    %667 = vxpose.xlu0.b32.start [1/16] %v464, 128
    %668 = vxpose.xlu0.b32.cont [2/16] 0.0, 128
    %669 = vxpose.xlu0.b32.cont [3/16] 0.0, 128
    %670 = vxpose.xlu0.b32.cont [4/16] 0.0, 128
    %671 = vxpose.xlu0.b32.cont [5/16] 0.0, 128
    %672 = vxpose.xlu0.b32.cont [6/16] 0.0, 128
    %673 = vxpose.xlu0.b32.cont [7/16] 0.0, 128
    %674 = vxpose.xlu0.b32.cont [8/16] 0.0, 128
    %675 = vxpose.xlu0.b32.cont [9/16] 0.0, 128
    %676 = vxpose.xlu0.b32.cont [10/16] 0.0, 128
    %677 = vxpose.xlu0.b32.cont [11/16] 0.0, 128
    %678 = vxpose.xlu0.b32.cont [12/16] 0.0, 128
    %679 = vxpose.xlu0.b32.cont [13/16] 0.0, 128
    %680 = vxpose.xlu0.b32.cont [14/16] 0.0, 128
    %681 = vxpose.xlu0.b32.cont [15/16] 0.0, 128
    %682 = vxpose.xlu0.b32.end [16/16] 0.0, 128
    %v683 = vpop.trf.xlu0
    %v684 = vpop.trf.xlu0
    %v685 = vpop.trf.xlu0
    %v686 = vpop.trf.xlu0
    %v687 = vpop.trf.xlu0
    %v688 = vpop.trf.xlu0
    %v689 = vpop.trf.xlu0
    %v690 = vpop.trf.xlu0
    %v691 = vpop.trf.xlu0
    %v692 = vpop.trf.xlu0
    %v693 = vpop.trf.xlu0
    %v694 = vpop.trf.xlu0
    %v695 = vpop.trf.xlu0
    %v696 = vpop.trf.xlu0
    %v697 = vpop.trf.xlu0
    %v698 = vpop.trf.xlu0
    %699 = vxpose.xlu0.b32.start [1/16] %v466, 128
    %700 = vxpose.xlu0.b32.cont [2/16] 0.0, 128
    %701 = vxpose.xlu0.b32.cont [3/16] 0.0, 128
    %702 = vxpose.xlu0.b32.cont [4/16] 0.0, 128
    %703 = vxpose.xlu0.b32.cont [5/16] 0.0, 128
    %704 = vxpose.xlu0.b32.cont [6/16] 0.0, 128
    %705 = vxpose.xlu0.b32.cont [7/16] 0.0, 128
    %706 = vxpose.xlu0.b32.cont [8/16] 0.0, 128
    %707 = vxpose.xlu0.b32.cont [9/16] 0.0, 128
    %708 = vxpose.xlu0.b32.cont [10/16] 0.0, 128
    %709 = vxpose.xlu0.b32.cont [11/16] 0.0, 128
    %710 = vxpose.xlu0.b32.cont [12/16] 0.0, 128
    %711 = vxpose.xlu0.b32.cont [13/16] 0.0, 128
    %712 = vxpose.xlu0.b32.cont [14/16] 0.0, 128
    %713 = vxpose.xlu0.b32.cont [15/16] 0.0, 128
    %714 = vxpose.xlu0.b32.end [16/16] 0.0, 128
    %v715 = vpop.trf.xlu0
    %v716 = vpop.trf.xlu0
    %v717 = vpop.trf.xlu0
    %v718 = vpop.trf.xlu0
    %v719 = vpop.trf.xlu0
    %v720 = vpop.trf.xlu0
    %v721 = vpop.trf.xlu0
    %v722 = vpop.trf.xlu0
    %v723 = vpop.trf.xlu0
    %v724 = vpop.trf.xlu0
    %v725 = vpop.trf.xlu0
    %v726 = vpop.trf.xlu0
    %v727 = vpop.trf.xlu0
    %v728 = vpop.trf.xlu0
    %v729 = vpop.trf.xlu0
    %v730 = vpop.trf.xlu0
    %v731 = vpack.c.bf16 %v492, %v491
    %v732 = vpack.c.bf16 %v494, %v493
    %v733 = vpack.c.bf16 %v496, %v495
    %v734 = vpack.c.bf16 %v498, %v497
    %v735 = vpack.c.bf16 %v500, %v499
    %v736 = vpack.c.bf16 %v502, %v501
    %v737 = vpack.c.bf16 %v504, %v503
    %v738 = vpack.c.bf16 %v506, %v505
    %v739 = vpack.c.bf16 %v524, %v523
    %v740 = vpack.c.bf16 %v526, %v525
    %v741 = vpack.c.bf16 %v528, %v527
    %v742 = vpack.c.bf16 %v530, %v529
    %v743 = vpack.c.bf16 %v532, %v531
    %v744 = vpack.c.bf16 %v534, %v533
    %v745 = vpack.c.bf16 %v536, %v535
    %v746 = vpack.c.bf16 %v538, %v537
    %v747 = vpack.c.bf16 %v556, %v555
    %v748 = vpack.c.bf16 %v558, %v557
    %v749 = vpack.c.bf16 %v560, %v559
    %v750 = vpack.c.bf16 %v562, %v561
    %v751 = vpack.c.bf16 %v564, %v563
    %v752 = vpack.c.bf16 %v566, %v565
    %v753 = vpack.c.bf16 %v568, %v567
    %v754 = vpack.c.bf16 %v570, %v569
    %v755 = vpack.c.bf16 %v588, %v587
    %v756 = vpack.c.bf16 %v590, %v589
    %v757 = vpack.c.bf16 %v592, %v591
    %v758 = vpack.c.bf16 %v594, %v593
    %v759 = vpack.c.bf16 %v596, %v595
    %v760 = vpack.c.bf16 %v598, %v597
    %v761 = vpack.c.bf16 %v600, %v599
    %v762 = vpack.c.bf16 %v602, %v601
    %v763 = vpack.c.bf16 %v620, %v619
    %v764 = vpack.c.bf16 %v622, %v621
    %v765 = vpack.c.bf16 %v624, %v623
    %v766 = vpack.c.bf16 %v626, %v625
    %v767 = vpack.c.bf16 %v628, %v627
    %v768 = vpack.c.bf16 %v630, %v629
    %v769 = vpack.c.bf16 %v632, %v631
    %v770 = vpack.c.bf16 %v634, %v633
    %v771 = vpack.c.bf16 %v652, %v651
    %v772 = vpack.c.bf16 %v654, %v653
    %v773 = vpack.c.bf16 %v656, %v655
    %v774 = vpack.c.bf16 %v658, %v657
    %v775 = vpack.c.bf16 %v660, %v659
    %v776 = vpack.c.bf16 %v662, %v661
    %v777 = vpack.c.bf16 %v664, %v663
    %v778 = vpack.c.bf16 %v666, %v665
    %v779 = vpack.c.bf16 %v684, %v683
    %v780 = vpack.c.bf16 %v686, %v685
    %v781 = vpack.c.bf16 %v688, %v687
    %v782 = vpack.c.bf16 %v690, %v689
    %v783 = vpack.c.bf16 %v692, %v691
    %v784 = vpack.c.bf16 %v694, %v693
    %v785 = vpack.c.bf16 %v696, %v695
    %v786 = vpack.c.bf16 %v698, %v697
    %v787 = vpack.c.bf16 %v716, %v715
    %v788 = vpack.c.bf16 %v718, %v717
    %v789 = vpack.c.bf16 %v720, %v719
    %v790 = vpack.c.bf16 %v722, %v721
    %v791 = vpack.c.bf16 %v724, %v723
    %v792 = vpack.c.bf16 %v726, %v725
    %v793 = vpack.c.bf16 %v728, %v727
    %v794 = vpack.c.bf16 %v730, %v729
    %v795 = vld [vmem:[%s7] sm:$0x1]
    %v796 = vpack.c.bf16 %v795, %v795
    %v799 = vunpack.c.l.s4 1966171168
    %v800 = vunpack.c.0.s8 %v799
    %v801 = vlaneseq
    %v802 = vshrl.u32 %v801, 7
    %v803 = vsub.s32 %v800, %v802
    %v804 = vrot.slane %v416, %v803
    %v805 = vcombine.high %v804, %v804
    %v807 = vunpack.c.l.s4 1966171168
    %v808 = vunpack.c.0.s8 %v807
    %v809 = vlaneseq
    %v810 = vshrl.u32 %v809, 7
    %v811 = vsub.s32 %v808, %v810
    %v812 = vrot.slane %v804, %v811
    %v814 = vunpack.c.l.s4 1966171168
    %v815 = vunpack.c.0.s8 %v814
    %v816 = vlaneseq
    %v817 = vshrl.u32 %v816, 7
    %v818 = vsub.s32 %v815, %v817
    %v819 = vrot.slane %v805, %v818
    %v820 = vcombine.high %v812, %v812
    %v821 = vcombine.high %v819, %v819
    %v822 = vunpack.i.l.s16 %v812
    %v823 = vunpack.i.h.s16 %v812
    %v824 = vunpack.i.l.s16 %v819
    %v825 = vunpack.i.h.s16 %v819
    %v826 = vunpack.i.l.s16 %v820
    %v827 = vunpack.i.h.s16 %v820
    %v828 = vunpack.i.l.s16 %v821
    %v829 = vunpack.i.h.s16 %v821
    %v830 = vpack.i.b16 %v822, %v822
    %v831 = vpack.i.b16 %v823, %v823
    %v832 = vpack.i.b16 %v824, %v824
    %v833 = vpack.i.b16 %v825, %v825
    %v834 = vpack.i.b16 %v826, %v826
    %v835 = vpack.i.b16 %v827, %v827
    %v836 = vpack.i.b16 %v828, %v828
    %v837 = vpack.i.b16 %v829, %v829
    %v838 = vlaneseq
    %v839 = vshrl.u32 %v838, 7
    %v840 = vsub.s32 0, %v839
    %v841 = vrot.slane %v830, %v840
    %v842 = vlaneseq
    %v843 = vshrl.u32 %v842, 7
    %v844 = vsub.s32 0, %v843
    %v845 = vrot.slane %v831, %v844
    %v846 = vlaneseq
    %v847 = vshrl.u32 %v846, 7
    %v848 = vsub.s32 0, %v847
    %v849 = vrot.slane %v832, %v848
    %v850 = vlaneseq
    %v851 = vshrl.u32 %v850, 7
    %v852 = vsub.s32 0, %v851
    %v853 = vrot.slane %v833, %v852
    %v854 = vlaneseq
    %v855 = vshrl.u32 %v854, 7
    %v856 = vsub.s32 0, %v855
    %v857 = vrot.slane %v834, %v856
    %v858 = vlaneseq
    %v859 = vshrl.u32 %v858, 7
    %v860 = vsub.s32 0, %v859
    %v861 = vrot.slane %v835, %v860
    %v862 = vlaneseq
    %v863 = vshrl.u32 %v862, 7
    %v864 = vsub.s32 0, %v863
    %v865 = vrot.slane %v836, %v864
    %v866 = vlaneseq
    %v867 = vshrl.u32 %v866, 7
    %v868 = vsub.s32 0, %v867
    %v869 = vrot.slane %v837, %v868
    %v871 = vpack.i.b16 %v841, %v841
    %v873 = vlaneseq
    %v874 = vshrl.u32 %v873, 7
    %v875 = vsub.s32 0, %v874
    %v876 = vrot.slane %v871, %v875
    %v878 = vpack.i.b16 %v845, %v845
    %v880 = vlaneseq
    %v881 = vshrl.u32 %v880, 7
    %v882 = vsub.s32 0, %v881
    %v883 = vrot.slane %v878, %v882
    %v885 = vpack.i.b16 %v849, %v849
    %v887 = vlaneseq
    %v888 = vshrl.u32 %v887, 7
    %v889 = vsub.s32 0, %v888
    %v890 = vrot.slane %v885, %v889
    %v892 = vpack.i.b16 %v853, %v853
    %v894 = vlaneseq
    %v895 = vshrl.u32 %v894, 7
    %v896 = vsub.s32 0, %v895
    %v897 = vrot.slane %v892, %v896
    %v899 = vpack.i.b16 %v857, %v857
    %v901 = vlaneseq
    %v902 = vshrl.u32 %v901, 7
    %v903 = vsub.s32 0, %v902
    %v904 = vrot.slane %v899, %v903
    %v906 = vpack.i.b16 %v861, %v861
    %v908 = vlaneseq
    %v909 = vshrl.u32 %v908, 7
    %v910 = vsub.s32 0, %v909
    %v911 = vrot.slane %v906, %v910
    %v913 = vpack.i.b16 %v865, %v865
    %v915 = vlaneseq
    %v916 = vshrl.u32 %v915, 7
    %v917 = vsub.s32 0, %v916
    %v918 = vrot.slane %v913, %v917
    %v920 = vpack.i.b16 %v869, %v869
    %v922 = vlaneseq
    %v923 = vshrl.u32 %v922, 7
    %v924 = vsub.s32 0, %v923
    %v925 = vrot.slane %v920, %v924
    %v934 = vunpack.c.l.b16 %v876
    %v935 = vunpack.c.l.b16 %v883
    %v936 = vunpack.c.l.b16 %v890
    %v937 = vunpack.c.l.b16 %v897
    %v938 = vunpack.c.l.b16 %v904
    %v939 = vunpack.c.l.b16 %v911
    %v940 = vunpack.c.l.b16 %v918
    %v941 = vunpack.c.l.b16 %v925
    %v942 = vpack.c.b16 %v934, %v934
    %v943 = vpack.c.b16 %v935, %v935
    %v944 = vpack.c.b16 %v936, %v936
    %v945 = vpack.c.b16 %v937, %v937
    %v946 = vpack.c.b16 %v938, %v938
    %v947 = vpack.c.b16 %v939, %v939
    %v948 = vpack.c.b16 %v940, %v940
    %v949 = vpack.c.b16 %v941, %v941
    %v958 = vadd.bf16 %v193, %v942
    %v959 = vadd.bf16 %v194, %v942
    %v960 = vadd.bf16 %v195, %v942
    %v961 = vadd.bf16 %v196, %v942
    %v962 = vadd.bf16 %v197, %v942
    %v963 = vadd.bf16 %v198, %v942
    %v964 = vadd.bf16 %v199, %v942
    %v965 = vadd.bf16 %v200, %v942
    %v966 = vadd.bf16 %v201, %v942
    %v967 = vadd.bf16 %v202, %v942
    %v968 = vadd.bf16 %v203, %v942
    %v969 = vadd.bf16 %v204, %v942
    %v970 = vadd.bf16 %v205, %v942
    %v971 = vadd.bf16 %v206, %v942
    %v972 = vadd.bf16 %v207, %v942
    %v973 = vadd.bf16 %v208, %v942
    %v974 = vadd.bf16 %v209, %v943
    %v975 = vadd.bf16 %v210, %v943
    %v976 = vadd.bf16 %v211, %v943
    %v977 = vadd.bf16 %v212, %v943
    %v978 = vadd.bf16 %v213, %v943
    %v979 = vadd.bf16 %v214, %v943
    %v980 = vadd.bf16 %v215, %v943
    %v981 = vadd.bf16 %v216, %v943
    %v982 = vadd.bf16 %v217, %v943
    %v983 = vadd.bf16 %v218, %v943
    %v984 = vadd.bf16 %v219, %v943
    %v985 = vadd.bf16 %v220, %v943
    %v986 = vadd.bf16 %v221, %v943
    %v987 = vadd.bf16 %v222, %v943
    %v988 = vadd.bf16 %v223, %v943
    %v989 = vadd.bf16 %v224, %v943
    %v990 = vadd.bf16 %v225, %v944
    %v991 = vadd.bf16 %v226, %v944
    %v992 = vadd.bf16 %v227, %v944
    %v993 = vadd.bf16 %v228, %v944
    %v994 = vadd.bf16 %v229, %v944
    %v995 = vadd.bf16 %v230, %v944
    %v996 = vadd.bf16 %v231, %v944
    %v997 = vadd.bf16 %v232, %v944
    %v998 = vadd.bf16 %v233, %v944
    %v999 = vadd.bf16 %v234, %v944
    %v1000 = vadd.bf16 %v235, %v944
    %v1001 = vadd.bf16 %v236, %v944
    %v1002 = vadd.bf16 %v237, %v944
    %v1003 = vadd.bf16 %v238, %v944
    %v1004 = vadd.bf16 %v239, %v944
    %v1005 = vadd.bf16 %v240, %v944
    %v1006 = vadd.bf16 %v241, %v945
    %v1007 = vadd.bf16 %v242, %v945
    %v1008 = vadd.bf16 %v243, %v945
    %v1009 = vadd.bf16 %v244, %v945
    %v1010 = vadd.bf16 %v245, %v945
    %v1011 = vadd.bf16 %v246, %v945
    %v1012 = vadd.bf16 %v247, %v945
    %v1013 = vadd.bf16 %v248, %v945
    %v1014 = vadd.bf16 %v249, %v945
    %v1015 = vadd.bf16 %v250, %v945
    %v1016 = vadd.bf16 %v251, %v945
    %v1017 = vadd.bf16 %v252, %v945
    %v1018 = vadd.bf16 %v253, %v945
    %v1019 = vadd.bf16 %v254, %v945
    %v1020 = vadd.bf16 %v255, %v945
    %v1021 = vadd.bf16 %v256, %v945
    %v1022 = vadd.bf16 %v257, %v946
    %v1023 = vadd.bf16 %v258, %v946
    %v1024 = vadd.bf16 %v259, %v946
    %v1025 = vadd.bf16 %v260, %v946
    %v1026 = vadd.bf16 %v261, %v946
    %v1027 = vadd.bf16 %v262, %v946
    %v1028 = vadd.bf16 %v263, %v946
    %v1029 = vadd.bf16 %v264, %v946
    %v1030 = vadd.bf16 %v265, %v946
    %v1031 = vadd.bf16 %v266, %v946
    %v1032 = vadd.bf16 %v267, %v946
    %v1033 = vadd.bf16 %v268, %v946
    %v1034 = vadd.bf16 %v269, %v946
    %v1035 = vadd.bf16 %v270, %v946
    %v1036 = vadd.bf16 %v271, %v946
    %v1037 = vadd.bf16 %v272, %v946
    %v1038 = vadd.bf16 %v273, %v947
    %v1039 = vadd.bf16 %v274, %v947
    %v1040 = vadd.bf16 %v275, %v947
    %v1041 = vadd.bf16 %v276, %v947
    %v1042 = vadd.bf16 %v277, %v947
    %v1043 = vadd.bf16 %v278, %v947
    %v1044 = vadd.bf16 %v279, %v947
    %v1045 = vadd.bf16 %v280, %v947
    %v1046 = vadd.bf16 %v281, %v947
    %v1047 = vadd.bf16 %v282, %v947
    %v1048 = vadd.bf16 %v283, %v947
    %v1049 = vadd.bf16 %v284, %v947
    %v1050 = vadd.bf16 %v285, %v947
    %v1051 = vadd.bf16 %v286, %v947
    %v1052 = vadd.bf16 %v287, %v947
    %v1053 = vadd.bf16 %v288, %v947
    %v1054 = vadd.bf16 %v289, %v948
    %v1055 = vadd.bf16 %v290, %v948
    %v1056 = vadd.bf16 %v291, %v948
    %v1057 = vadd.bf16 %v292, %v948
    %v1058 = vadd.bf16 %v293, %v948
    %v1059 = vadd.bf16 %v294, %v948
    %v1060 = vadd.bf16 %v295, %v948
    %v1061 = vadd.bf16 %v296, %v948
    %v1062 = vadd.bf16 %v297, %v948
    %v1063 = vadd.bf16 %v298, %v948
    %v1064 = vadd.bf16 %v299, %v948
    %v1065 = vadd.bf16 %v300, %v948
    %v1066 = vadd.bf16 %v301, %v948
    %v1067 = vadd.bf16 %v302, %v948
    %v1068 = vadd.bf16 %v303, %v948
    %v1069 = vadd.bf16 %v304, %v948
    %v1070 = vadd.bf16 %v305, %v949
    %v1071 = vadd.bf16 %v306, %v949
    %v1072 = vadd.bf16 %v307, %v949
    %v1073 = vadd.bf16 %v308, %v949
    %v1074 = vadd.bf16 %v309, %v949
    %v1075 = vadd.bf16 %v310, %v949
    %v1076 = vadd.bf16 %v311, %v949
    %v1077 = vadd.bf16 %v312, %v949
    %v1078 = vadd.bf16 %v313, %v949
    %v1079 = vadd.bf16 %v314, %v949
    %v1080 = vadd.bf16 %v315, %v949
    %v1081 = vadd.bf16 %v316, %v949
    %v1082 = vadd.bf16 %v317, %v949
    %v1083 = vadd.bf16 %v318, %v949
    %v1084 = vadd.bf16 %v319, %v949
    %v1085 = vadd.bf16 %v320, %v949
    %1087 = vset.pattern.permute.xlu0 0
    %1088 = vperm.xlu0 %1087, %v731
    %v1089 = vpop.permute.xlu0 %1088
    %1092 = vset.pattern.permute.xlu0 0
    %1093 = vperm.xlu0 %1092, %v732
    %v1094 = vpop.permute.xlu0 %1093
    %1097 = vset.pattern.permute.xlu0 0
    %1098 = vperm.xlu0 %1097, %v733
    %v1099 = vpop.permute.xlu0 %1098
    %1102 = vset.pattern.permute.xlu0 0
    %1103 = vperm.xlu0 %1102, %v734
    %v1104 = vpop.permute.xlu0 %1103
    %1107 = vset.pattern.permute.xlu0 0
    %1108 = vperm.xlu0 %1107, %v735
    %v1109 = vpop.permute.xlu0 %1108
    %1112 = vset.pattern.permute.xlu0 0
    %1113 = vperm.xlu0 %1112, %v736
    %v1114 = vpop.permute.xlu0 %1113
    %1117 = vset.pattern.permute.xlu0 0
    %1118 = vperm.xlu0 %1117, %v737
    %v1119 = vpop.permute.xlu0 %1118
    %1122 = vset.pattern.permute.xlu0 0
    %1123 = vperm.xlu0 %1122, %v738
    %v1124 = vpop.permute.xlu0 %1123
    %1127 = vset.pattern.permute.xlu0 0
    %1128 = vperm.xlu0 %1127, %v739
    %v1129 = vpop.permute.xlu0 %1128
    %1132 = vset.pattern.permute.xlu0 0
    %1133 = vperm.xlu0 %1132, %v740
    %v1134 = vpop.permute.xlu0 %1133
    %1137 = vset.pattern.permute.xlu0 0
    %1138 = vperm.xlu0 %1137, %v741
    %v1139 = vpop.permute.xlu0 %1138
    %1142 = vset.pattern.permute.xlu0 0
    %1143 = vperm.xlu0 %1142, %v742
    %v1144 = vpop.permute.xlu0 %1143
    %1147 = vset.pattern.permute.xlu0 0
    %1148 = vperm.xlu0 %1147, %v743
    %v1149 = vpop.permute.xlu0 %1148
    %1152 = vset.pattern.permute.xlu0 0
    %1153 = vperm.xlu0 %1152, %v744
    %v1154 = vpop.permute.xlu0 %1153
    %1157 = vset.pattern.permute.xlu0 0
    %1158 = vperm.xlu0 %1157, %v745
    %v1159 = vpop.permute.xlu0 %1158
    %1162 = vset.pattern.permute.xlu0 0
    %1163 = vperm.xlu0 %1162, %v746
    %v1164 = vpop.permute.xlu0 %1163
    %1167 = vset.pattern.permute.xlu0 0
    %1168 = vperm.xlu0 %1167, %v747
    %v1169 = vpop.permute.xlu0 %1168
    %1172 = vset.pattern.permute.xlu0 0
    %1173 = vperm.xlu0 %1172, %v748
    %v1174 = vpop.permute.xlu0 %1173
    %1177 = vset.pattern.permute.xlu0 0
    %1178 = vperm.xlu0 %1177, %v749
    %v1179 = vpop.permute.xlu0 %1178
    %1182 = vset.pattern.permute.xlu0 0
    %1183 = vperm.xlu0 %1182, %v750
    %v1184 = vpop.permute.xlu0 %1183
    %1187 = vset.pattern.permute.xlu0 0
    %1188 = vperm.xlu0 %1187, %v751
    %v1189 = vpop.permute.xlu0 %1188
    %1192 = vset.pattern.permute.xlu0 0
    %1193 = vperm.xlu0 %1192, %v752
    %v1194 = vpop.permute.xlu0 %1193
    %1197 = vset.pattern.permute.xlu0 0
    %1198 = vperm.xlu0 %1197, %v753
    %v1199 = vpop.permute.xlu0 %1198
    %1202 = vset.pattern.permute.xlu0 0
    %1203 = vperm.xlu0 %1202, %v754
    %v1204 = vpop.permute.xlu0 %1203
    %1207 = vset.pattern.permute.xlu0 0
    %1208 = vperm.xlu0 %1207, %v755
    %v1209 = vpop.permute.xlu0 %1208
    %1212 = vset.pattern.permute.xlu0 0
    %1213 = vperm.xlu0 %1212, %v756
    %v1214 = vpop.permute.xlu0 %1213
    %1217 = vset.pattern.permute.xlu0 0
    %1218 = vperm.xlu0 %1217, %v757
    %v1219 = vpop.permute.xlu0 %1218
    %1222 = vset.pattern.permute.xlu0 0
    %1223 = vperm.xlu0 %1222, %v758
    %v1224 = vpop.permute.xlu0 %1223
    %1227 = vset.pattern.permute.xlu0 0
    %1228 = vperm.xlu0 %1227, %v759
    %v1229 = vpop.permute.xlu0 %1228
    %1232 = vset.pattern.permute.xlu0 0
    %1233 = vperm.xlu0 %1232, %v760
    %v1234 = vpop.permute.xlu0 %1233
    %1237 = vset.pattern.permute.xlu0 0
    %1238 = vperm.xlu0 %1237, %v761
    %v1239 = vpop.permute.xlu0 %1238
    %1242 = vset.pattern.permute.xlu0 0
    %1243 = vperm.xlu0 %1242, %v762
    %v1244 = vpop.permute.xlu0 %1243
    %1247 = vset.pattern.permute.xlu0 0
    %1248 = vperm.xlu0 %1247, %v763
    %v1249 = vpop.permute.xlu0 %1248
    %1252 = vset.pattern.permute.xlu0 0
    %1253 = vperm.xlu0 %1252, %v764
    %v1254 = vpop.permute.xlu0 %1253
    %1257 = vset.pattern.permute.xlu0 0
    %1258 = vperm.xlu0 %1257, %v765
    %v1259 = vpop.permute.xlu0 %1258
    %1262 = vset.pattern.permute.xlu0 0
    %1263 = vperm.xlu0 %1262, %v766
    %v1264 = vpop.permute.xlu0 %1263
    %1267 = vset.pattern.permute.xlu0 0
    %1268 = vperm.xlu0 %1267, %v767
    %v1269 = vpop.permute.xlu0 %1268
    %1272 = vset.pattern.permute.xlu0 0
    %1273 = vperm.xlu0 %1272, %v768
    %v1274 = vpop.permute.xlu0 %1273
    %1277 = vset.pattern.permute.xlu0 0
    %1278 = vperm.xlu0 %1277, %v769
    %v1279 = vpop.permute.xlu0 %1278
    %1282 = vset.pattern.permute.xlu0 0
    %1283 = vperm.xlu0 %1282, %v770
    %v1284 = vpop.permute.xlu0 %1283
    %1287 = vset.pattern.permute.xlu0 0
    %1288 = vperm.xlu0 %1287, %v771
    %v1289 = vpop.permute.xlu0 %1288
    %1292 = vset.pattern.permute.xlu0 0
    %1293 = vperm.xlu0 %1292, %v772
    %v1294 = vpop.permute.xlu0 %1293
    %1297 = vset.pattern.permute.xlu0 0
    %1298 = vperm.xlu0 %1297, %v773
    %v1299 = vpop.permute.xlu0 %1298
    %1302 = vset.pattern.permute.xlu0 0
    %1303 = vperm.xlu0 %1302, %v774
    %v1304 = vpop.permute.xlu0 %1303
    %1307 = vset.pattern.permute.xlu0 0
    %1308 = vperm.xlu0 %1307, %v775
    %v1309 = vpop.permute.xlu0 %1308
    %1312 = vset.pattern.permute.xlu0 0
    %1313 = vperm.xlu0 %1312, %v776
    %v1314 = vpop.permute.xlu0 %1313
    %1317 = vset.pattern.permute.xlu0 0
    %1318 = vperm.xlu0 %1317, %v777
    %v1319 = vpop.permute.xlu0 %1318
    %1322 = vset.pattern.permute.xlu0 0
    %1323 = vperm.xlu0 %1322, %v778
    %v1324 = vpop.permute.xlu0 %1323
    %1327 = vset.pattern.permute.xlu0 0
    %1328 = vperm.xlu0 %1327, %v779
    %v1329 = vpop.permute.xlu0 %1328
    %1332 = vset.pattern.permute.xlu0 0
    %1333 = vperm.xlu0 %1332, %v780
    %v1334 = vpop.permute.xlu0 %1333
    %1337 = vset.pattern.permute.xlu0 0
    %1338 = vperm.xlu0 %1337, %v781
    %v1339 = vpop.permute.xlu0 %1338
    %1342 = vset.pattern.permute.xlu0 0
    %1343 = vperm.xlu0 %1342, %v782
    %v1344 = vpop.permute.xlu0 %1343
    %1347 = vset.pattern.permute.xlu0 0
    %1348 = vperm.xlu0 %1347, %v783
    %v1349 = vpop.permute.xlu0 %1348
    %1352 = vset.pattern.permute.xlu0 0
    %1353 = vperm.xlu0 %1352, %v784
    %v1354 = vpop.permute.xlu0 %1353
    %1357 = vset.pattern.permute.xlu0 0
    %1358 = vperm.xlu0 %1357, %v785
    %v1359 = vpop.permute.xlu0 %1358
    %1362 = vset.pattern.permute.xlu0 0
    %1363 = vperm.xlu0 %1362, %v786
    %v1364 = vpop.permute.xlu0 %1363
    %1367 = vset.pattern.permute.xlu0 0
    %1368 = vperm.xlu0 %1367, %v787
    %v1369 = vpop.permute.xlu0 %1368
    %1372 = vset.pattern.permute.xlu0 0
    %1373 = vperm.xlu0 %1372, %v788
    %v1374 = vpop.permute.xlu0 %1373
    %1377 = vset.pattern.permute.xlu0 0
    %1378 = vperm.xlu0 %1377, %v789
    %v1379 = vpop.permute.xlu0 %1378
    %1382 = vset.pattern.permute.xlu0 0
    %1383 = vperm.xlu0 %1382, %v790
    %v1384 = vpop.permute.xlu0 %1383
    %1387 = vset.pattern.permute.xlu0 0
    %1388 = vperm.xlu0 %1387, %v791
    %v1389 = vpop.permute.xlu0 %1388
    %1392 = vset.pattern.permute.xlu0 0
    %1393 = vperm.xlu0 %1392, %v792
    %v1394 = vpop.permute.xlu0 %1393
    %1397 = vset.pattern.permute.xlu0 0
    %1398 = vperm.xlu0 %1397, %v793
    %v1399 = vpop.permute.xlu0 %1398
    %1402 = vset.pattern.permute.xlu0 0
    %1403 = vperm.xlu0 %1402, %v794
    %v1404 = vpop.permute.xlu0 %1403
    %v1407 = vpack.i.b16 %v796, %v796
    %v1409 = vlaneseq
    %v1410 = vshrl.u32 %v1409, 7
    %v1411 = vsub.s32 0, %v1410
    %v1412 = vrot.slane %v1407, %v1411
    %v1413 = vmul.bf16 %v1089, %v1412
    %v1414 = vmul.bf16 %v1094, %v1412
    %v1415 = vmul.bf16 %v1099, %v1412
    %v1416 = vmul.bf16 %v1104, %v1412
    %v1417 = vmul.bf16 %v1109, %v1412
    %v1418 = vmul.bf16 %v1114, %v1412
    %v1419 = vmul.bf16 %v1119, %v1412
    %v1420 = vmul.bf16 %v1124, %v1412
    %v1421 = vmul.bf16 %v1129, %v1412
    %v1422 = vmul.bf16 %v1134, %v1412
    %v1423 = vmul.bf16 %v1139, %v1412
    %v1424 = vmul.bf16 %v1144, %v1412
    %v1425 = vmul.bf16 %v1149, %v1412
    %v1426 = vmul.bf16 %v1154, %v1412
    %v1427 = vmul.bf16 %v1159, %v1412
    %v1428 = vmul.bf16 %v1164, %v1412
    %v1429 = vmul.bf16 %v1169, %v1412
    %v1430 = vmul.bf16 %v1174, %v1412
    %v1431 = vmul.bf16 %v1179, %v1412
    %v1432 = vmul.bf16 %v1184, %v1412
    %v1433 = vmul.bf16 %v1189, %v1412
    %v1434 = vmul.bf16 %v1194, %v1412
    %v1435 = vmul.bf16 %v1199, %v1412
    %v1436 = vmul.bf16 %v1204, %v1412
    %v1437 = vmul.bf16 %v1209, %v1412
    %v1438 = vmul.bf16 %v1214, %v1412
    %v1439 = vmul.bf16 %v1219, %v1412
    %v1440 = vmul.bf16 %v1224, %v1412
    %v1441 = vmul.bf16 %v1229, %v1412
    %v1442 = vmul.bf16 %v1234, %v1412
    %v1443 = vmul.bf16 %v1239, %v1412
    %v1444 = vmul.bf16 %v1244, %v1412
    %v1445 = vmul.bf16 %v1249, %v1412
    %v1446 = vmul.bf16 %v1254, %v1412
    %v1447 = vmul.bf16 %v1259, %v1412
    %v1448 = vmul.bf16 %v1264, %v1412
    %v1449 = vmul.bf16 %v1269, %v1412
    %v1450 = vmul.bf16 %v1274, %v1412
    %v1451 = vmul.bf16 %v1279, %v1412
    %v1452 = vmul.bf16 %v1284, %v1412
    %v1453 = vmul.bf16 %v1289, %v1412
    %v1454 = vmul.bf16 %v1294, %v1412
    %v1455 = vmul.bf16 %v1299, %v1412
    %v1456 = vmul.bf16 %v1304, %v1412
    %v1457 = vmul.bf16 %v1309, %v1412
    %v1458 = vmul.bf16 %v1314, %v1412
    %v1459 = vmul.bf16 %v1319, %v1412
    %v1460 = vmul.bf16 %v1324, %v1412
    %v1461 = vmul.bf16 %v1329, %v1412
    %v1462 = vmul.bf16 %v1334, %v1412
    %v1463 = vmul.bf16 %v1339, %v1412
    %v1464 = vmul.bf16 %v1344, %v1412
    %v1465 = vmul.bf16 %v1349, %v1412
    %v1466 = vmul.bf16 %v1354, %v1412
    %v1467 = vmul.bf16 %v1359, %v1412
    %v1468 = vmul.bf16 %v1364, %v1412
    %v1469 = vmul.bf16 %v1369, %v1412
    %v1470 = vmul.bf16 %v1374, %v1412
    %v1471 = vmul.bf16 %v1379, %v1412
    %v1472 = vmul.bf16 %v1384, %v1412
    %v1473 = vmul.bf16 %v1389, %v1412
    %v1474 = vmul.bf16 %v1394, %v1412
    %v1475 = vmul.bf16 %v1399, %v1412
    %v1476 = vmul.bf16 %v1404, %v1412
    %v1541 = vunpack.c.l.b16 %v1413
    %v1542 = vunpack.c.h.b16 %v1413
    %v1543 = vunpack.c.l.b16 %v1414
    %v1544 = vunpack.c.h.b16 %v1414
    %v1545 = vunpack.c.l.b16 %v1415
    %v1546 = vunpack.c.h.b16 %v1415
    %v1547 = vunpack.c.l.b16 %v1416
    %v1548 = vunpack.c.h.b16 %v1416
    %v1549 = vunpack.c.l.b16 %v1417
    %v1550 = vunpack.c.h.b16 %v1417
    %v1551 = vunpack.c.l.b16 %v1418
    %v1552 = vunpack.c.h.b16 %v1418
    %v1553 = vunpack.c.l.b16 %v1419
    %v1554 = vunpack.c.h.b16 %v1419
    %v1555 = vunpack.c.l.b16 %v1420
    %v1556 = vunpack.c.h.b16 %v1420
    %v1557 = vunpack.c.l.b16 %v1421
    %v1558 = vunpack.c.h.b16 %v1421
    %v1559 = vunpack.c.l.b16 %v1422
    %v1560 = vunpack.c.h.b16 %v1422
    %v1561 = vunpack.c.l.b16 %v1423
    %v1562 = vunpack.c.h.b16 %v1423
    %v1563 = vunpack.c.l.b16 %v1424
    %v1564 = vunpack.c.h.b16 %v1424
    %v1565 = vunpack.c.l.b16 %v1425
    %v1566 = vunpack.c.h.b16 %v1425
    %v1567 = vunpack.c.l.b16 %v1426
    %v1568 = vunpack.c.h.b16 %v1426
    %v1569 = vunpack.c.l.b16 %v1427
    %v1570 = vunpack.c.h.b16 %v1427
    %v1571 = vunpack.c.l.b16 %v1428
    %v1572 = vunpack.c.h.b16 %v1428
    %v1573 = vunpack.c.l.b16 %v1429
    %v1574 = vunpack.c.h.b16 %v1429
    %v1575 = vunpack.c.l.b16 %v1430
    %v1576 = vunpack.c.h.b16 %v1430
    %v1577 = vunpack.c.l.b16 %v1431
    %v1578 = vunpack.c.h.b16 %v1431
    %v1579 = vunpack.c.l.b16 %v1432
    %v1580 = vunpack.c.h.b16 %v1432
    %v1581 = vunpack.c.l.b16 %v1433
    %v1582 = vunpack.c.h.b16 %v1433
    %v1583 = vunpack.c.l.b16 %v1434
    %v1584 = vunpack.c.h.b16 %v1434
    %v1585 = vunpack.c.l.b16 %v1435
    %v1586 = vunpack.c.h.b16 %v1435
    %v1587 = vunpack.c.l.b16 %v1436
    %v1588 = vunpack.c.h.b16 %v1436
    %v1589 = vunpack.c.l.b16 %v1437
    %v1590 = vunpack.c.h.b16 %v1437
    %v1591 = vunpack.c.l.b16 %v1438
    %v1592 = vunpack.c.h.b16 %v1438
    %v1593 = vunpack.c.l.b16 %v1439
    %v1594 = vunpack.c.h.b16 %v1439
    %v1595 = vunpack.c.l.b16 %v1440
    %v1596 = vunpack.c.h.b16 %v1440
    %v1597 = vunpack.c.l.b16 %v1441
    %v1598 = vunpack.c.h.b16 %v1441
    %v1599 = vunpack.c.l.b16 %v1442
    %v1600 = vunpack.c.h.b16 %v1442
    %v1601 = vunpack.c.l.b16 %v1443
    %v1602 = vunpack.c.h.b16 %v1443
    %v1603 = vunpack.c.l.b16 %v1444
    %v1604 = vunpack.c.h.b16 %v1444
    %v1605 = vunpack.c.l.b16 %v1445
    %v1606 = vunpack.c.h.b16 %v1445
    %v1607 = vunpack.c.l.b16 %v1446
    %v1608 = vunpack.c.h.b16 %v1446
    %v1609 = vunpack.c.l.b16 %v1447
    %v1610 = vunpack.c.h.b16 %v1447
    %v1611 = vunpack.c.l.b16 %v1448
    %v1612 = vunpack.c.h.b16 %v1448
    %v1613 = vunpack.c.l.b16 %v1449
    %v1614 = vunpack.c.h.b16 %v1449
    %v1615 = vunpack.c.l.b16 %v1450
    %v1616 = vunpack.c.h.b16 %v1450
    %v1617 = vunpack.c.l.b16 %v1451
    %v1618 = vunpack.c.h.b16 %v1451
    %v1619 = vunpack.c.l.b16 %v1452
    %v1620 = vunpack.c.h.b16 %v1452
    %v1621 = vunpack.c.l.b16 %v1453
    %v1622 = vunpack.c.h.b16 %v1453
    %v1623 = vunpack.c.l.b16 %v1454
    %v1624 = vunpack.c.h.b16 %v1454
    %v1625 = vunpack.c.l.b16 %v1455
    %v1626 = vunpack.c.h.b16 %v1455
    %v1627 = vunpack.c.l.b16 %v1456
    %v1628 = vunpack.c.h.b16 %v1456
    %v1629 = vunpack.c.l.b16 %v1457
    %v1630 = vunpack.c.h.b16 %v1457
    %v1631 = vunpack.c.l.b16 %v1458
    %v1632 = vunpack.c.h.b16 %v1458
    %v1633 = vunpack.c.l.b16 %v1459
    %v1634 = vunpack.c.h.b16 %v1459
    %v1635 = vunpack.c.l.b16 %v1460
    %v1636 = vunpack.c.h.b16 %v1460
    %v1637 = vunpack.c.l.b16 %v1461
    %v1638 = vunpack.c.h.b16 %v1461
    %v1639 = vunpack.c.l.b16 %v1462
    %v1640 = vunpack.c.h.b16 %v1462
    %v1641 = vunpack.c.l.b16 %v1463
    %v1642 = vunpack.c.h.b16 %v1463
    %v1643 = vunpack.c.l.b16 %v1464
    %v1644 = vunpack.c.h.b16 %v1464
    %v1645 = vunpack.c.l.b16 %v1465
    %v1646 = vunpack.c.h.b16 %v1465
    %v1647 = vunpack.c.l.b16 %v1466
    %v1648 = vunpack.c.h.b16 %v1466
    %v1649 = vunpack.c.l.b16 %v1467
    %v1650 = vunpack.c.h.b16 %v1467
    %v1651 = vunpack.c.l.b16 %v1468
    %v1652 = vunpack.c.h.b16 %v1468
    %v1653 = vunpack.c.l.b16 %v1469
    %v1654 = vunpack.c.h.b16 %v1469
    %v1655 = vunpack.c.l.b16 %v1470
    %v1656 = vunpack.c.h.b16 %v1470
    %v1657 = vunpack.c.l.b16 %v1471
    %v1658 = vunpack.c.h.b16 %v1471
    %v1659 = vunpack.c.l.b16 %v1472
    %v1660 = vunpack.c.h.b16 %v1472
    %v1661 = vunpack.c.l.b16 %v1473
    %v1662 = vunpack.c.h.b16 %v1473
    %v1663 = vunpack.c.l.b16 %v1474
    %v1664 = vunpack.c.h.b16 %v1474
    %v1665 = vunpack.c.l.b16 %v1475
    %v1666 = vunpack.c.h.b16 %v1475
    %v1667 = vunpack.c.l.b16 %v1476
    %v1668 = vunpack.c.h.b16 %v1476
    %v1669 = vpack.c.b16 %v1541, %v1541
    %v1670 = vpack.c.b16 %v1542, %v1542
    %v1671 = vpack.c.b16 %v1543, %v1543
    %v1672 = vpack.c.b16 %v1544, %v1544
    %v1673 = vpack.c.b16 %v1545, %v1545
    %v1674 = vpack.c.b16 %v1546, %v1546
    %v1675 = vpack.c.b16 %v1547, %v1547
    %v1676 = vpack.c.b16 %v1548, %v1548
    %v1677 = vpack.c.b16 %v1549, %v1549
    %v1678 = vpack.c.b16 %v1550, %v1550
    %v1679 = vpack.c.b16 %v1551, %v1551
    %v1680 = vpack.c.b16 %v1552, %v1552
    %v1681 = vpack.c.b16 %v1553, %v1553
    %v1682 = vpack.c.b16 %v1554, %v1554
    %v1683 = vpack.c.b16 %v1555, %v1555
    %v1684 = vpack.c.b16 %v1556, %v1556
    %v1685 = vpack.c.b16 %v1557, %v1557
    %v1686 = vpack.c.b16 %v1558, %v1558
    %v1687 = vpack.c.b16 %v1559, %v1559
    %v1688 = vpack.c.b16 %v1560, %v1560
    %v1689 = vpack.c.b16 %v1561, %v1561
    %v1690 = vpack.c.b16 %v1562, %v1562
    %v1691 = vpack.c.b16 %v1563, %v1563
    %v1692 = vpack.c.b16 %v1564, %v1564
    %v1693 = vpack.c.b16 %v1565, %v1565
    %v1694 = vpack.c.b16 %v1566, %v1566
    %v1695 = vpack.c.b16 %v1567, %v1567
    %v1696 = vpack.c.b16 %v1568, %v1568
    %v1697 = vpack.c.b16 %v1569, %v1569
    %v1698 = vpack.c.b16 %v1570, %v1570
    %v1699 = vpack.c.b16 %v1571, %v1571
    %v1700 = vpack.c.b16 %v1572, %v1572
    %v1701 = vpack.c.b16 %v1573, %v1573
    %v1702 = vpack.c.b16 %v1574, %v1574
    %v1703 = vpack.c.b16 %v1575, %v1575
    %v1704 = vpack.c.b16 %v1576, %v1576
    %v1705 = vpack.c.b16 %v1577, %v1577
    %v1706 = vpack.c.b16 %v1578, %v1578
    %v1707 = vpack.c.b16 %v1579, %v1579
    %v1708 = vpack.c.b16 %v1580, %v1580
    %v1709 = vpack.c.b16 %v1581, %v1581
    %v1710 = vpack.c.b16 %v1582, %v1582
    %v1711 = vpack.c.b16 %v1583, %v1583
    %v1712 = vpack.c.b16 %v1584, %v1584
    %v1713 = vpack.c.b16 %v1585, %v1585
    %v1714 = vpack.c.b16 %v1586, %v1586
    %v1715 = vpack.c.b16 %v1587, %v1587
    %v1716 = vpack.c.b16 %v1588, %v1588
    %v1717 = vpack.c.b16 %v1589, %v1589
    %v1718 = vpack.c.b16 %v1590, %v1590
    %v1719 = vpack.c.b16 %v1591, %v1591
    %v1720 = vpack.c.b16 %v1592, %v1592
    %v1721 = vpack.c.b16 %v1593, %v1593
    %v1722 = vpack.c.b16 %v1594, %v1594
    %v1723 = vpack.c.b16 %v1595, %v1595
    %v1724 = vpack.c.b16 %v1596, %v1596
    %v1725 = vpack.c.b16 %v1597, %v1597
    %v1726 = vpack.c.b16 %v1598, %v1598
    %v1727 = vpack.c.b16 %v1599, %v1599
    %v1728 = vpack.c.b16 %v1600, %v1600
    %v1729 = vpack.c.b16 %v1601, %v1601
    %v1730 = vpack.c.b16 %v1602, %v1602
    %v1731 = vpack.c.b16 %v1603, %v1603
    %v1732 = vpack.c.b16 %v1604, %v1604
    %v1733 = vpack.c.b16 %v1605, %v1605
    %v1734 = vpack.c.b16 %v1606, %v1606
    %v1735 = vpack.c.b16 %v1607, %v1607
    %v1736 = vpack.c.b16 %v1608, %v1608
    %v1737 = vpack.c.b16 %v1609, %v1609
    %v1738 = vpack.c.b16 %v1610, %v1610
    %v1739 = vpack.c.b16 %v1611, %v1611
    %v1740 = vpack.c.b16 %v1612, %v1612
    %v1741 = vpack.c.b16 %v1613, %v1613
    %v1742 = vpack.c.b16 %v1614, %v1614
    %v1743 = vpack.c.b16 %v1615, %v1615
    %v1744 = vpack.c.b16 %v1616, %v1616
    %v1745 = vpack.c.b16 %v1617, %v1617
    %v1746 = vpack.c.b16 %v1618, %v1618
    %v1747 = vpack.c.b16 %v1619, %v1619
    %v1748 = vpack.c.b16 %v1620, %v1620
    %v1749 = vpack.c.b16 %v1621, %v1621
    %v1750 = vpack.c.b16 %v1622, %v1622
    %v1751 = vpack.c.b16 %v1623, %v1623
    %v1752 = vpack.c.b16 %v1624, %v1624
    %v1753 = vpack.c.b16 %v1625, %v1625
    %v1754 = vpack.c.b16 %v1626, %v1626
    %v1755 = vpack.c.b16 %v1627, %v1627
    %v1756 = vpack.c.b16 %v1628, %v1628
    %v1757 = vpack.c.b16 %v1629, %v1629
    %v1758 = vpack.c.b16 %v1630, %v1630
    %v1759 = vpack.c.b16 %v1631, %v1631
    %v1760 = vpack.c.b16 %v1632, %v1632
    %v1761 = vpack.c.b16 %v1633, %v1633
    %v1762 = vpack.c.b16 %v1634, %v1634
    %v1763 = vpack.c.b16 %v1635, %v1635
    %v1764 = vpack.c.b16 %v1636, %v1636
    %v1765 = vpack.c.b16 %v1637, %v1637
    %v1766 = vpack.c.b16 %v1638, %v1638
    %v1767 = vpack.c.b16 %v1639, %v1639
    %v1768 = vpack.c.b16 %v1640, %v1640
    %v1769 = vpack.c.b16 %v1641, %v1641
    %v1770 = vpack.c.b16 %v1642, %v1642
    %v1771 = vpack.c.b16 %v1643, %v1643
    %v1772 = vpack.c.b16 %v1644, %v1644
    %v1773 = vpack.c.b16 %v1645, %v1645
    %v1774 = vpack.c.b16 %v1646, %v1646
    %v1775 = vpack.c.b16 %v1647, %v1647
    %v1776 = vpack.c.b16 %v1648, %v1648
    %v1777 = vpack.c.b16 %v1649, %v1649
    %v1778 = vpack.c.b16 %v1650, %v1650
    %v1779 = vpack.c.b16 %v1651, %v1651
    %v1780 = vpack.c.b16 %v1652, %v1652
    %v1781 = vpack.c.b16 %v1653, %v1653
    %v1782 = vpack.c.b16 %v1654, %v1654
    %v1783 = vpack.c.b16 %v1655, %v1655
    %v1784 = vpack.c.b16 %v1656, %v1656
    %v1785 = vpack.c.b16 %v1657, %v1657
    %v1786 = vpack.c.b16 %v1658, %v1658
    %v1787 = vpack.c.b16 %v1659, %v1659
    %v1788 = vpack.c.b16 %v1660, %v1660
    %v1789 = vpack.c.b16 %v1661, %v1661
    %v1790 = vpack.c.b16 %v1662, %v1662
    %v1791 = vpack.c.b16 %v1663, %v1663
    %v1792 = vpack.c.b16 %v1664, %v1664
    %v1793 = vpack.c.b16 %v1665, %v1665
    %v1794 = vpack.c.b16 %v1666, %v1666
    %v1795 = vpack.c.b16 %v1667, %v1667
    %v1796 = vpack.c.b16 %v1668, %v1668
    %v1925 = vadd.bf16 %v958, %v1669
    %v1926 = vadd.bf16 %v959, %v1670
    %v1927 = vadd.bf16 %v960, %v1671
    %v1928 = vadd.bf16 %v961, %v1672
    %v1929 = vadd.bf16 %v962, %v1673
    %v1930 = vadd.bf16 %v963, %v1674
    %v1931 = vadd.bf16 %v964, %v1675
    %v1932 = vadd.bf16 %v965, %v1676
    %v1933 = vadd.bf16 %v966, %v1677
    %v1934 = vadd.bf16 %v967, %v1678
    %v1935 = vadd.bf16 %v968, %v1679
    %v1936 = vadd.bf16 %v969, %v1680
    %v1937 = vadd.bf16 %v970, %v1681
    %v1938 = vadd.bf16 %v971, %v1682
    %v1939 = vadd.bf16 %v972, %v1683
    %v1940 = vadd.bf16 %v973, %v1684
    %v1941 = vadd.bf16 %v974, %v1685
    %v1942 = vadd.bf16 %v975, %v1686
    %v1943 = vadd.bf16 %v976, %v1687
    %v1944 = vadd.bf16 %v977, %v1688
    %v1945 = vadd.bf16 %v978, %v1689
    %v1946 = vadd.bf16 %v979, %v1690
    %v1947 = vadd.bf16 %v980, %v1691
    %v1948 = vadd.bf16 %v981, %v1692
    %v1949 = vadd.bf16 %v982, %v1693
    %v1950 = vadd.bf16 %v983, %v1694
    %v1951 = vadd.bf16 %v984, %v1695
    %v1952 = vadd.bf16 %v985, %v1696
    %v1953 = vadd.bf16 %v986, %v1697
    %v1954 = vadd.bf16 %v987, %v1698
    %v1955 = vadd.bf16 %v988, %v1699
    %v1956 = vadd.bf16 %v989, %v1700
    %v1957 = vadd.bf16 %v990, %v1701
    %v1958 = vadd.bf16 %v991, %v1702
    %v1959 = vadd.bf16 %v992, %v1703
    %v1960 = vadd.bf16 %v993, %v1704
    %v1961 = vadd.bf16 %v994, %v1705
    %v1962 = vadd.bf16 %v995, %v1706
    %v1963 = vadd.bf16 %v996, %v1707
    %v1964 = vadd.bf16 %v997, %v1708
    %v1965 = vadd.bf16 %v998, %v1709
    %v1966 = vadd.bf16 %v999, %v1710
    %v1967 = vadd.bf16 %v1000, %v1711
    %v1968 = vadd.bf16 %v1001, %v1712
    %v1969 = vadd.bf16 %v1002, %v1713
    %v1970 = vadd.bf16 %v1003, %v1714
    %v1971 = vadd.bf16 %v1004, %v1715
    %v1972 = vadd.bf16 %v1005, %v1716
    %v1973 = vadd.bf16 %v1006, %v1717
    %v1974 = vadd.bf16 %v1007, %v1718
    %v1975 = vadd.bf16 %v1008, %v1719
    %v1976 = vadd.bf16 %v1009, %v1720
    %v1977 = vadd.bf16 %v1010, %v1721
    %v1978 = vadd.bf16 %v1011, %v1722
    %v1979 = vadd.bf16 %v1012, %v1723
    %v1980 = vadd.bf16 %v1013, %v1724
    %v1981 = vadd.bf16 %v1014, %v1725
    %v1982 = vadd.bf16 %v1015, %v1726
    %v1983 = vadd.bf16 %v1016, %v1727
    %v1984 = vadd.bf16 %v1017, %v1728
    %v1985 = vadd.bf16 %v1018, %v1729
    %v1986 = vadd.bf16 %v1019, %v1730
    %v1987 = vadd.bf16 %v1020, %v1731
    %v1988 = vadd.bf16 %v1021, %v1732
    %v1989 = vadd.bf16 %v1022, %v1733
    %v1990 = vadd.bf16 %v1023, %v1734
    %v1991 = vadd.bf16 %v1024, %v1735
    %v1992 = vadd.bf16 %v1025, %v1736
    %v1993 = vadd.bf16 %v1026, %v1737
    %v1994 = vadd.bf16 %v1027, %v1738
    %v1995 = vadd.bf16 %v1028, %v1739
    %v1996 = vadd.bf16 %v1029, %v1740
    %v1997 = vadd.bf16 %v1030, %v1741
    %v1998 = vadd.bf16 %v1031, %v1742
    %v1999 = vadd.bf16 %v1032, %v1743
    %v2000 = vadd.bf16 %v1033, %v1744
    %v2001 = vadd.bf16 %v1034, %v1745
    %v2002 = vadd.bf16 %v1035, %v1746
    %v2003 = vadd.bf16 %v1036, %v1747
    %v2004 = vadd.bf16 %v1037, %v1748
    %v2005 = vadd.bf16 %v1038, %v1749
    %v2006 = vadd.bf16 %v1039, %v1750
    %v2007 = vadd.bf16 %v1040, %v1751
    %v2008 = vadd.bf16 %v1041, %v1752
    %v2009 = vadd.bf16 %v1042, %v1753
    %v2010 = vadd.bf16 %v1043, %v1754
    %v2011 = vadd.bf16 %v1044, %v1755
    %v2012 = vadd.bf16 %v1045, %v1756
    %v2013 = vadd.bf16 %v1046, %v1757
    %v2014 = vadd.bf16 %v1047, %v1758
    %v2015 = vadd.bf16 %v1048, %v1759
    %v2016 = vadd.bf16 %v1049, %v1760
    %v2017 = vadd.bf16 %v1050, %v1761
    %v2018 = vadd.bf16 %v1051, %v1762
    %v2019 = vadd.bf16 %v1052, %v1763
    %v2020 = vadd.bf16 %v1053, %v1764
    %v2021 = vadd.bf16 %v1054, %v1765
    %v2022 = vadd.bf16 %v1055, %v1766
    %v2023 = vadd.bf16 %v1056, %v1767
    %v2024 = vadd.bf16 %v1057, %v1768
    %v2025 = vadd.bf16 %v1058, %v1769
    %v2026 = vadd.bf16 %v1059, %v1770
    %v2027 = vadd.bf16 %v1060, %v1771
    %v2028 = vadd.bf16 %v1061, %v1772
    %v2029 = vadd.bf16 %v1062, %v1773
    %v2030 = vadd.bf16 %v1063, %v1774
    %v2031 = vadd.bf16 %v1064, %v1775
    %v2032 = vadd.bf16 %v1065, %v1776
    %v2033 = vadd.bf16 %v1066, %v1777
    %v2034 = vadd.bf16 %v1067, %v1778
    %v2035 = vadd.bf16 %v1068, %v1779
    %v2036 = vadd.bf16 %v1069, %v1780
    %v2037 = vadd.bf16 %v1070, %v1781
    %v2038 = vadd.bf16 %v1071, %v1782
    %v2039 = vadd.bf16 %v1072, %v1783
    %v2040 = vadd.bf16 %v1073, %v1784
    %v2041 = vadd.bf16 %v1074, %v1785
    %v2042 = vadd.bf16 %v1075, %v1786
    %v2043 = vadd.bf16 %v1076, %v1787
    %v2044 = vadd.bf16 %v1077, %v1788
    %v2045 = vadd.bf16 %v1078, %v1789
    %v2046 = vadd.bf16 %v1079, %v1790
    %v2047 = vadd.bf16 %v1080, %v1791
    %v2048 = vadd.bf16 %v1081, %v1792
    %v2049 = vadd.bf16 %v1082, %v1793
    %v2050 = vadd.bf16 %v1083, %v1794
    %v2051 = vadd.bf16 %v1084, %v1795
    %v2052 = vadd.bf16 %v1085, %v1796
    %v2053 = vtanh.bf16.pop %v1925
    %v2054 = vtanh.bf16.pop %v1926
    %v2055 = vtanh.bf16.pop %v1927
    %v2056 = vtanh.bf16.pop %v1928
    %v2057 = vtanh.bf16.pop %v1929
    %v2058 = vtanh.bf16.pop %v1930
    %v2059 = vtanh.bf16.pop %v1931
    %v2060 = vtanh.bf16.pop %v1932
    %v2061 = vtanh.bf16.pop %v1933
    %v2062 = vtanh.bf16.pop %v1934
    %v2063 = vtanh.bf16.pop %v1935
    %v2064 = vtanh.bf16.pop %v1936
    %v2065 = vtanh.bf16.pop %v1937
    %v2066 = vtanh.bf16.pop %v1938
    %v2067 = vtanh.bf16.pop %v1939
    %v2068 = vtanh.bf16.pop %v1940
    %v2069 = vtanh.bf16.pop %v1941
    %v2070 = vtanh.bf16.pop %v1942
    %v2071 = vtanh.bf16.pop %v1943
    %v2072 = vtanh.bf16.pop %v1944
    %v2073 = vtanh.bf16.pop %v1945
    %v2074 = vtanh.bf16.pop %v1946
    %v2075 = vtanh.bf16.pop %v1947
    %v2076 = vtanh.bf16.pop %v1948
    %v2077 = vtanh.bf16.pop %v1949
    %v2078 = vtanh.bf16.pop %v1950
    %v2079 = vtanh.bf16.pop %v1951
    %v2080 = vtanh.bf16.pop %v1952
    %v2081 = vtanh.bf16.pop %v1953
    %v2082 = vtanh.bf16.pop %v1954
    %v2083 = vtanh.bf16.pop %v1955
    %v2084 = vtanh.bf16.pop %v1956
    %v2085 = vtanh.bf16.pop %v1957
    %v2086 = vtanh.bf16.pop %v1958
    %v2087 = vtanh.bf16.pop %v1959
    %v2088 = vtanh.bf16.pop %v1960
    %v2089 = vtanh.bf16.pop %v1961
    %v2090 = vtanh.bf16.pop %v1962
    %v2091 = vtanh.bf16.pop %v1963
    %v2092 = vtanh.bf16.pop %v1964
    %v2093 = vtanh.bf16.pop %v1965
    %v2094 = vtanh.bf16.pop %v1966
    %v2095 = vtanh.bf16.pop %v1967
    %v2096 = vtanh.bf16.pop %v1968
    %v2097 = vtanh.bf16.pop %v1969
    %v2098 = vtanh.bf16.pop %v1970
    %v2099 = vtanh.bf16.pop %v1971
    %v2100 = vtanh.bf16.pop %v1972
    %v2101 = vtanh.bf16.pop %v1973
    %v2102 = vtanh.bf16.pop %v1974
    %v2103 = vtanh.bf16.pop %v1975
    %v2104 = vtanh.bf16.pop %v1976
    %v2105 = vtanh.bf16.pop %v1977
    %v2106 = vtanh.bf16.pop %v1978
    %v2107 = vtanh.bf16.pop %v1979
    %v2108 = vtanh.bf16.pop %v1980
    %v2109 = vtanh.bf16.pop %v1981
    %v2110 = vtanh.bf16.pop %v1982
    %v2111 = vtanh.bf16.pop %v1983
    %v2112 = vtanh.bf16.pop %v1984
    %v2113 = vtanh.bf16.pop %v1985
    %v2114 = vtanh.bf16.pop %v1986
    %v2115 = vtanh.bf16.pop %v1987
    %v2116 = vtanh.bf16.pop %v1988
    %v2117 = vtanh.bf16.pop %v1989
    %v2118 = vtanh.bf16.pop %v1990
    %v2119 = vtanh.bf16.pop %v1991
    %v2120 = vtanh.bf16.pop %v1992
    %v2121 = vtanh.bf16.pop %v1993
    %v2122 = vtanh.bf16.pop %v1994
    %v2123 = vtanh.bf16.pop %v1995
    %v2124 = vtanh.bf16.pop %v1996
    %v2125 = vtanh.bf16.pop %v1997
    %v2126 = vtanh.bf16.pop %v1998
    %v2127 = vtanh.bf16.pop %v1999
    %v2128 = vtanh.bf16.pop %v2000
    %v2129 = vtanh.bf16.pop %v2001
    %v2130 = vtanh.bf16.pop %v2002
    %v2131 = vtanh.bf16.pop %v2003
    %v2132 = vtanh.bf16.pop %v2004
    %v2133 = vtanh.bf16.pop %v2005
    %v2134 = vtanh.bf16.pop %v2006
    %v2135 = vtanh.bf16.pop %v2007
    %v2136 = vtanh.bf16.pop %v2008
    %v2137 = vtanh.bf16.pop %v2009
    %v2138 = vtanh.bf16.pop %v2010
    %v2139 = vtanh.bf16.pop %v2011
    %v2140 = vtanh.bf16.pop %v2012
    %v2141 = vtanh.bf16.pop %v2013
    %v2142 = vtanh.bf16.pop %v2014
    %v2143 = vtanh.bf16.pop %v2015
    %v2144 = vtanh.bf16.pop %v2016
    %v2145 = vtanh.bf16.pop %v2017
    %v2146 = vtanh.bf16.pop %v2018
    %v2147 = vtanh.bf16.pop %v2019
    %v2148 = vtanh.bf16.pop %v2020
    %v2149 = vtanh.bf16.pop %v2021
    %v2150 = vtanh.bf16.pop %v2022
    %v2151 = vtanh.bf16.pop %v2023
    %v2152 = vtanh.bf16.pop %v2024
    %v2153 = vtanh.bf16.pop %v2025
    %v2154 = vtanh.bf16.pop %v2026
    %v2155 = vtanh.bf16.pop %v2027
    %v2156 = vtanh.bf16.pop %v2028
    %v2157 = vtanh.bf16.pop %v2029
    %v2158 = vtanh.bf16.pop %v2030
    %v2159 = vtanh.bf16.pop %v2031
    %v2160 = vtanh.bf16.pop %v2032
    %v2161 = vtanh.bf16.pop %v2033
    %v2162 = vtanh.bf16.pop %v2034
    %v2163 = vtanh.bf16.pop %v2035
    %v2164 = vtanh.bf16.pop %v2036
    %v2165 = vtanh.bf16.pop %v2037
    %v2166 = vtanh.bf16.pop %v2038
    %v2167 = vtanh.bf16.pop %v2039
    %v2168 = vtanh.bf16.pop %v2040
    %v2169 = vtanh.bf16.pop %v2041
    %v2170 = vtanh.bf16.pop %v2042
    %v2171 = vtanh.bf16.pop %v2043
    %v2172 = vtanh.bf16.pop %v2044
    %v2173 = vtanh.bf16.pop %v2045
    %v2174 = vtanh.bf16.pop %v2046
    %v2175 = vtanh.bf16.pop %v2047
    %v2176 = vtanh.bf16.pop %v2048
    %v2177 = vtanh.bf16.pop %v2049
    %v2178 = vtanh.bf16.pop %v2050
    %v2179 = vtanh.bf16.pop %v2051
    %v2180 = vtanh.bf16.pop %v2052
    %v2181 = vld [vmem:[%s8] sm:$0x1]
    %v2182 = vpack.c.bf16 %v2181, %v2181
    %v2199 = vunpack.c.l.b16 %v2053
    %v2200 = vunpack.c.l.b16 %v2054
    %v2201 = vunpack.c.l.b16 %v2055
    %v2202 = vunpack.c.l.b16 %v2056
    %v2203 = vunpack.c.l.b16 %v2057
    %v2204 = vunpack.c.l.b16 %v2058
    %v2205 = vunpack.c.l.b16 %v2059
    %v2206 = vunpack.c.l.b16 %v2060
    %v2207 = vunpack.c.l.b16 %v2061
    %v2208 = vunpack.c.l.b16 %v2062
    %v2209 = vunpack.c.l.b16 %v2063
    %v2210 = vunpack.c.l.b16 %v2064
    %v2211 = vunpack.c.l.b16 %v2065
    %v2212 = vunpack.c.l.b16 %v2066
    %v2213 = vunpack.c.l.b16 %v2067
    %v2214 = vunpack.c.l.b16 %v2068
    %v2215 = vpack.c.b16 %v2200, %v2199
    %v2216 = vpack.c.b16 %v2202, %v2201
    %v2217 = vpack.c.b16 %v2204, %v2203
    %v2218 = vpack.c.b16 %v2206, %v2205
    %v2219 = vpack.c.b16 %v2208, %v2207
    %v2220 = vpack.c.b16 %v2210, %v2209
    %v2221 = vpack.c.b16 %v2212, %v2211
    %v2222 = vpack.c.b16 %v2214, %v2213
    %2231 = vmatprep.subr.bf16.mxu0 0
    %2232 = vmatpush1.bf16.xpose.msra.mxu0 %v2215
    %2233 = vmatprep.subr.bf16.mxu0 0
    %2234 = vmatpush1.bf16.xpose.msra.mxu0 %v2216
    %2235 = vmatprep.subr.bf16.mxu0 0
    %2236 = vmatpush1.bf16.xpose.msra.mxu0 %v2217
    %2237 = vmatprep.subr.bf16.mxu0 0
    %2238 = vmatpush1.bf16.xpose.msra.mxu0 %v2218
    %2239 = vmatprep.subr.bf16.mxu0 0
    %2240 = vmatpush1.bf16.xpose.msra.mxu0 %v2219
    %2241 = vmatprep.subr.bf16.mxu0 0
    %2242 = vmatpush1.bf16.xpose.msra.mxu0 %v2220
    %2243 = vmatprep.subr.bf16.mxu0 0
    %2244 = vmatpush1.bf16.xpose.msra.mxu0 %v2221
    %2245 = vmatprep.subr.bf16.mxu0 0
    %2246 = vmatpush1.bf16.xpose.msra.mxu0 %v2222
    %2247 = vmatprep.subr.bf16.mxu0 0
    %2248 = vmatpush1.bf16.xpose.msra.mxu0 0
    %2249 = vmatprep.subr.bf16.mxu0 0
    %2250 = vmatpush1.bf16.xpose.msra.mxu0 0
    %2251 = vmatprep.subr.bf16.mxu0 0
    %2252 = vmatpush1.bf16.xpose.msra.mxu0 0
    %2253 = vmatprep.subr.bf16.mxu0 0
    %2254 = vmatpush1.bf16.xpose.msra.mxu0 0
    %2255 = vmatprep.subr.bf16.mxu0 0
    %2256 = vmatpush1.bf16.xpose.msra.mxu0 0
    %2257 = vmatprep.subr.bf16.mxu0 0
    %2258 = vmatpush1.bf16.xpose.msra.mxu0 0
    %2259 = vmatprep.subr.bf16.mxu0 0
    %2260 = vmatpush1.bf16.xpose.msra.mxu0 0
    %2261 = vmatprep.subr.bf16.mxu0 0
    %2262 = vmatpush1.bf16.xpose.msra.mxu0 0
    %2263 = vmatprep.mubr.bf16.mxu0 0
    %2264 = vmatmul.mubr.bf16.gmra.mrb[0].mxu0 %v2182
    %v2265 = vpop.f32.mrb[0].mxu0
    %v2266 = vadd.f32 0.0, %v2265
    %v2267 = vpop.f32.mrb[0].mxu0
    %v2268 = vpop.f32.mrb[0].mxu0
    %v2269 = vpop.f32.mrb[0].mxu0
    %2270 = vdwg.mxu0
    %v2287 = vunpack.c.l.b16 %v2069
    %v2288 = vunpack.c.l.b16 %v2070
    %v2289 = vunpack.c.l.b16 %v2071
    %v2290 = vunpack.c.l.b16 %v2072
    %v2291 = vunpack.c.l.b16 %v2073
    %v2292 = vunpack.c.l.b16 %v2074
    %v2293 = vunpack.c.l.b16 %v2075
    %v2294 = vunpack.c.l.b16 %v2076
    %v2295 = vunpack.c.l.b16 %v2077
    %v2296 = vunpack.c.l.b16 %v2078
    %v2297 = vunpack.c.l.b16 %v2079
    %v2298 = vunpack.c.l.b16 %v2080
    %v2299 = vunpack.c.l.b16 %v2081
    %v2300 = vunpack.c.l.b16 %v2082
    %v2301 = vunpack.c.l.b16 %v2083
    %v2302 = vunpack.c.l.b16 %v2084
    %v2303 = vpack.c.b16 %v2288, %v2287
    %v2304 = vpack.c.b16 %v2290, %v2289
    %v2305 = vpack.c.b16 %v2292, %v2291
    %v2306 = vpack.c.b16 %v2294, %v2293
    %v2307 = vpack.c.b16 %v2296, %v2295
    %v2308 = vpack.c.b16 %v2298, %v2297
    %v2309 = vpack.c.b16 %v2300, %v2299
    %v2310 = vpack.c.b16 %v2302, %v2301
    %2319 = vmatprep.subr.bf16.mxu0 0
    %2320 = vmatpush1.bf16.xpose.msra.mxu0 %v2303
    %2321 = vmatprep.subr.bf16.mxu0 0
    %2322 = vmatpush1.bf16.xpose.msra.mxu0 %v2304
    %2323 = vmatprep.subr.bf16.mxu0 0
    %2324 = vmatpush1.bf16.xpose.msra.mxu0 %v2305
    %2325 = vmatprep.subr.bf16.mxu0 0
    %2326 = vmatpush1.bf16.xpose.msra.mxu0 %v2306
    %2327 = vmatprep.subr.bf16.mxu0 0
    %2328 = vmatpush1.bf16.xpose.msra.mxu0 %v2307
    %2329 = vmatprep.subr.bf16.mxu0 0
    %2330 = vmatpush1.bf16.xpose.msra.mxu0 %v2308
    %2331 = vmatprep.subr.bf16.mxu0 0
    %2332 = vmatpush1.bf16.xpose.msra.mxu0 %v2309
    %2333 = vmatprep.subr.bf16.mxu0 0
    %2334 = vmatpush1.bf16.xpose.msra.mxu0 %v2310
    %2335 = vmatprep.subr.bf16.mxu0 0
    %2336 = vmatpush1.bf16.xpose.msra.mxu0 0
    %2337 = vmatprep.subr.bf16.mxu0 0
    %2338 = vmatpush1.bf16.xpose.msra.mxu0 0
    %2339 = vmatprep.subr.bf16.mxu0 0
    %2340 = vmatpush1.bf16.xpose.msra.mxu0 0
    %2341 = vmatprep.subr.bf16.mxu0 0
    %2342 = vmatpush1.bf16.xpose.msra.mxu0 0
    %2343 = vmatprep.subr.bf16.mxu0 0
    %2344 = vmatpush1.bf16.xpose.msra.mxu0 0
    %2345 = vmatprep.subr.bf16.mxu0 0
    %2346 = vmatpush1.bf16.xpose.msra.mxu0 0
    %2347 = vmatprep.subr.bf16.mxu0 0
    %2348 = vmatpush1.bf16.xpose.msra.mxu0 0
    %2349 = vmatprep.subr.bf16.mxu0 0
    %2350 = vmatpush1.bf16.xpose.msra.mxu0 0
    %2351 = vmatprep.mubr.bf16.mxu0 0
    %2352 = vmatmul.mubr.bf16.gmra.mrb[0].mxu0 %v2182
    %v2353 = vpop.f32.mrb[0].mxu0
    %v2354 = vadd.f32 0.0, %v2353
    %v2355 = vpop.f32.mrb[0].mxu0
    %v2356 = vpop.f32.mrb[0].mxu0
    %v2357 = vpop.f32.mrb[0].mxu0
    %2358 = vdwg.mxu0
    %v2375 = vunpack.c.l.b16 %v2085
    %v2376 = vunpack.c.l.b16 %v2086
    %v2377 = vunpack.c.l.b16 %v2087
    %v2378 = vunpack.c.l.b16 %v2088
    %v2379 = vunpack.c.l.b16 %v2089
    %v2380 = vunpack.c.l.b16 %v2090
    %v2381 = vunpack.c.l.b16 %v2091
    %v2382 = vunpack.c.l.b16 %v2092
    %v2383 = vunpack.c.l.b16 %v2093
    %v2384 = vunpack.c.l.b16 %v2094
    %v2385 = vunpack.c.l.b16 %v2095
    %v2386 = vunpack.c.l.b16 %v2096
    %v2387 = vunpack.c.l.b16 %v2097
    %v2388 = vunpack.c.l.b16 %v2098
    %v2389 = vunpack.c.l.b16 %v2099
    %v2390 = vunpack.c.l.b16 %v2100
    %v2391 = vpack.c.b16 %v2376, %v2375
    %v2392 = vpack.c.b16 %v2378, %v2377
    %v2393 = vpack.c.b16 %v2380, %v2379
    %v2394 = vpack.c.b16 %v2382, %v2381
    %v2395 = vpack.c.b16 %v2384, %v2383
    %v2396 = vpack.c.b16 %v2386, %v2385
    %v2397 = vpack.c.b16 %v2388, %v2387
    %v2398 = vpack.c.b16 %v2390, %v2389
    %2407 = vmatprep.subr.bf16.mxu0 0
    %2408 = vmatpush1.bf16.xpose.msra.mxu0 %v2391
    %2409 = vmatprep.subr.bf16.mxu0 0
    %2410 = vmatpush1.bf16.xpose.msra.mxu0 %v2392
    %2411 = vmatprep.subr.bf16.mxu0 0
    %2412 = vmatpush1.bf16.xpose.msra.mxu0 %v2393
    %2413 = vmatprep.subr.bf16.mxu0 0
    %2414 = vmatpush1.bf16.xpose.msra.mxu0 %v2394
    %2415 = vmatprep.subr.bf16.mxu0 0
    %2416 = vmatpush1.bf16.xpose.msra.mxu0 %v2395
    %2417 = vmatprep.subr.bf16.mxu0 0
    %2418 = vmatpush1.bf16.xpose.msra.mxu0 %v2396
    %2419 = vmatprep.subr.bf16.mxu0 0
    %2420 = vmatpush1.bf16.xpose.msra.mxu0 %v2397
    %2421 = vmatprep.subr.bf16.mxu0 0
    %2422 = vmatpush1.bf16.xpose.msra.mxu0 %v2398
    %2423 = vmatprep.subr.bf16.mxu0 0
    %2424 = vmatpush1.bf16.xpose.msra.mxu0 0
    %2425 = vmatprep.subr.bf16.mxu0 0
    %2426 = vmatpush1.bf16.xpose.msra.mxu0 0
    %2427 = vmatprep.subr.bf16.mxu0 0
    %2428 = vmatpush1.bf16.xpose.msra.mxu0 0
    %2429 = vmatprep.subr.bf16.mxu0 0
    %2430 = vmatpush1.bf16.xpose.msra.mxu0 0
    %2431 = vmatprep.subr.bf16.mxu0 0
    %2432 = vmatpush1.bf16.xpose.msra.mxu0 0
    %2433 = vmatprep.subr.bf16.mxu0 0
    %2434 = vmatpush1.bf16.xpose.msra.mxu0 0
    %2435 = vmatprep.subr.bf16.mxu0 0
    %2436 = vmatpush1.bf16.xpose.msra.mxu0 0
    %2437 = vmatprep.subr.bf16.mxu0 0
    %2438 = vmatpush1.bf16.xpose.msra.mxu0 0
    %2439 = vmatprep.mubr.bf16.mxu0 0
    %2440 = vmatmul.mubr.bf16.gmra.mrb[0].mxu0 %v2182
    %v2441 = vpop.f32.mrb[0].mxu0
    %v2442 = vadd.f32 0.0, %v2441
    %v2443 = vpop.f32.mrb[0].mxu0
    %v2444 = vpop.f32.mrb[0].mxu0
    %v2445 = vpop.f32.mrb[0].mxu0
    %2446 = vdwg.mxu0
    %v2463 = vunpack.c.l.b16 %v2101
    %v2464 = vunpack.c.l.b16 %v2102
    %v2465 = vunpack.c.l.b16 %v2103
    %v2466 = vunpack.c.l.b16 %v2104
    %v2467 = vunpack.c.l.b16 %v2105
    %v2468 = vunpack.c.l.b16 %v2106
    %v2469 = vunpack.c.l.b16 %v2107
    %v2470 = vunpack.c.l.b16 %v2108
    %v2471 = vunpack.c.l.b16 %v2109
    %v2472 = vunpack.c.l.b16 %v2110
    %v2473 = vunpack.c.l.b16 %v2111
    %v2474 = vunpack.c.l.b16 %v2112
    %v2475 = vunpack.c.l.b16 %v2113
    %v2476 = vunpack.c.l.b16 %v2114
    %v2477 = vunpack.c.l.b16 %v2115
    %v2478 = vunpack.c.l.b16 %v2116
    %v2479 = vpack.c.b16 %v2464, %v2463
    %v2480 = vpack.c.b16 %v2466, %v2465
    %v2481 = vpack.c.b16 %v2468, %v2467
    %v2482 = vpack.c.b16 %v2470, %v2469
    %v2483 = vpack.c.b16 %v2472, %v2471
    %v2484 = vpack.c.b16 %v2474, %v2473
    %v2485 = vpack.c.b16 %v2476, %v2475
    %v2486 = vpack.c.b16 %v2478, %v2477
    %2495 = vmatprep.subr.bf16.mxu0 0
    %2496 = vmatpush1.bf16.xpose.msra.mxu0 %v2479
    %2497 = vmatprep.subr.bf16.mxu0 0
    %2498 = vmatpush1.bf16.xpose.msra.mxu0 %v2480
    %2499 = vmatprep.subr.bf16.mxu0 0
    %2500 = vmatpush1.bf16.xpose.msra.mxu0 %v2481
    %2501 = vmatprep.subr.bf16.mxu0 0
    %2502 = vmatpush1.bf16.xpose.msra.mxu0 %v2482
    %2503 = vmatprep.subr.bf16.mxu0 0
    %2504 = vmatpush1.bf16.xpose.msra.mxu0 %v2483
    %2505 = vmatprep.subr.bf16.mxu0 0
    %2506 = vmatpush1.bf16.xpose.msra.mxu0 %v2484
    %2507 = vmatprep.subr.bf16.mxu0 0
    %2508 = vmatpush1.bf16.xpose.msra.mxu0 %v2485
    %2509 = vmatprep.subr.bf16.mxu0 0
    %2510 = vmatpush1.bf16.xpose.msra.mxu0 %v2486
    %2511 = vmatprep.subr.bf16.mxu0 0
    %2512 = vmatpush1.bf16.xpose.msra.mxu0 0
    %2513 = vmatprep.subr.bf16.mxu0 0
    %2514 = vmatpush1.bf16.xpose.msra.mxu0 0
    %2515 = vmatprep.subr.bf16.mxu0 0
    %2516 = vmatpush1.bf16.xpose.msra.mxu0 0
    %2517 = vmatprep.subr.bf16.mxu0 0
    %2518 = vmatpush1.bf16.xpose.msra.mxu0 0
    %2519 = vmatprep.subr.bf16.mxu0 0
    %2520 = vmatpush1.bf16.xpose.msra.mxu0 0
    %2521 = vmatprep.subr.bf16.mxu0 0
    %2522 = vmatpush1.bf16.xpose.msra.mxu0 0
    %2523 = vmatprep.subr.bf16.mxu0 0
    %2524 = vmatpush1.bf16.xpose.msra.mxu0 0
    %2525 = vmatprep.subr.bf16.mxu0 0
    %2526 = vmatpush1.bf16.xpose.msra.mxu0 0
    %2527 = vmatprep.mubr.bf16.mxu0 0
    %2528 = vmatmul.mubr.bf16.gmra.mrb[0].mxu0 %v2182
    %v2529 = vpop.f32.mrb[0].mxu0
    %v2530 = vadd.f32 0.0, %v2529
    %v2531 = vpop.f32.mrb[0].mxu0
    %v2532 = vpop.f32.mrb[0].mxu0
    %v2533 = vpop.f32.mrb[0].mxu0
    %2534 = vdwg.mxu0
    %v2551 = vunpack.c.l.b16 %v2117
    %v2552 = vunpack.c.l.b16 %v2118
    %v2553 = vunpack.c.l.b16 %v2119
    %v2554 = vunpack.c.l.b16 %v2120
    %v2555 = vunpack.c.l.b16 %v2121
    %v2556 = vunpack.c.l.b16 %v2122
    %v2557 = vunpack.c.l.b16 %v2123
    %v2558 = vunpack.c.l.b16 %v2124
    %v2559 = vunpack.c.l.b16 %v2125
    %v2560 = vunpack.c.l.b16 %v2126
    %v2561 = vunpack.c.l.b16 %v2127
    %v2562 = vunpack.c.l.b16 %v2128
    %v2563 = vunpack.c.l.b16 %v2129
    %v2564 = vunpack.c.l.b16 %v2130
    %v2565 = vunpack.c.l.b16 %v2131
    %v2566 = vunpack.c.l.b16 %v2132
    %v2567 = vpack.c.b16 %v2552, %v2551
    %v2568 = vpack.c.b16 %v2554, %v2553
    %v2569 = vpack.c.b16 %v2556, %v2555
    %v2570 = vpack.c.b16 %v2558, %v2557
    %v2571 = vpack.c.b16 %v2560, %v2559
    %v2572 = vpack.c.b16 %v2562, %v2561
    %v2573 = vpack.c.b16 %v2564, %v2563
    %v2574 = vpack.c.b16 %v2566, %v2565
    %2583 = vmatprep.subr.bf16.mxu0 0
    %2584 = vmatpush1.bf16.xpose.msra.mxu0 %v2567
    %2585 = vmatprep.subr.bf16.mxu0 0
    %2586 = vmatpush1.bf16.xpose.msra.mxu0 %v2568
    %2587 = vmatprep.subr.bf16.mxu0 0
    %2588 = vmatpush1.bf16.xpose.msra.mxu0 %v2569
    %2589 = vmatprep.subr.bf16.mxu0 0
    %2590 = vmatpush1.bf16.xpose.msra.mxu0 %v2570
    %2591 = vmatprep.subr.bf16.mxu0 0
    %2592 = vmatpush1.bf16.xpose.msra.mxu0 %v2571
    %2593 = vmatprep.subr.bf16.mxu0 0
    %2594 = vmatpush1.bf16.xpose.msra.mxu0 %v2572
    %2595 = vmatprep.subr.bf16.mxu0 0
    %2596 = vmatpush1.bf16.xpose.msra.mxu0 %v2573
    %2597 = vmatprep.subr.bf16.mxu0 0
    %2598 = vmatpush1.bf16.xpose.msra.mxu0 %v2574
    %2599 = vmatprep.subr.bf16.mxu0 0
    %2600 = vmatpush1.bf16.xpose.msra.mxu0 0
    %2601 = vmatprep.subr.bf16.mxu0 0
    %2602 = vmatpush1.bf16.xpose.msra.mxu0 0
    %2603 = vmatprep.subr.bf16.mxu0 0
    %2604 = vmatpush1.bf16.xpose.msra.mxu0 0
    %2605 = vmatprep.subr.bf16.mxu0 0
    %2606 = vmatpush1.bf16.xpose.msra.mxu0 0
    %2607 = vmatprep.subr.bf16.mxu0 0
    %2608 = vmatpush1.bf16.xpose.msra.mxu0 0
    %2609 = vmatprep.subr.bf16.mxu0 0
    %2610 = vmatpush1.bf16.xpose.msra.mxu0 0
    %2611 = vmatprep.subr.bf16.mxu0 0
    %2612 = vmatpush1.bf16.xpose.msra.mxu0 0
    %2613 = vmatprep.subr.bf16.mxu0 0
    %2614 = vmatpush1.bf16.xpose.msra.mxu0 0
    %2615 = vmatprep.mubr.bf16.mxu0 0
    %2616 = vmatmul.mubr.bf16.gmra.mrb[0].mxu0 %v2182
    %v2617 = vpop.f32.mrb[0].mxu0
    %v2618 = vadd.f32 0.0, %v2617
    %v2619 = vpop.f32.mrb[0].mxu0
    %v2620 = vpop.f32.mrb[0].mxu0
    %v2621 = vpop.f32.mrb[0].mxu0
    %2622 = vdwg.mxu0
    %v2639 = vunpack.c.l.b16 %v2133
    %v2640 = vunpack.c.l.b16 %v2134
    %v2641 = vunpack.c.l.b16 %v2135
    %v2642 = vunpack.c.l.b16 %v2136
    %v2643 = vunpack.c.l.b16 %v2137
    %v2644 = vunpack.c.l.b16 %v2138
    %v2645 = vunpack.c.l.b16 %v2139
    %v2646 = vunpack.c.l.b16 %v2140
    %v2647 = vunpack.c.l.b16 %v2141
    %v2648 = vunpack.c.l.b16 %v2142
    %v2649 = vunpack.c.l.b16 %v2143
    %v2650 = vunpack.c.l.b16 %v2144
    %v2651 = vunpack.c.l.b16 %v2145
    %v2652 = vunpack.c.l.b16 %v2146
    %v2653 = vunpack.c.l.b16 %v2147
    %v2654 = vunpack.c.l.b16 %v2148
    %v2655 = vpack.c.b16 %v2640, %v2639
    %v2656 = vpack.c.b16 %v2642, %v2641
    %v2657 = vpack.c.b16 %v2644, %v2643
    %v2658 = vpack.c.b16 %v2646, %v2645
    %v2659 = vpack.c.b16 %v2648, %v2647
    %v2660 = vpack.c.b16 %v2650, %v2649
    %v2661 = vpack.c.b16 %v2652, %v2651
    %v2662 = vpack.c.b16 %v2654, %v2653
    %2671 = vmatprep.subr.bf16.mxu0 0
    %2672 = vmatpush1.bf16.xpose.msra.mxu0 %v2655
    %2673 = vmatprep.subr.bf16.mxu0 0
    %2674 = vmatpush1.bf16.xpose.msra.mxu0 %v2656
    %2675 = vmatprep.subr.bf16.mxu0 0
    %2676 = vmatpush1.bf16.xpose.msra.mxu0 %v2657
    %2677 = vmatprep.subr.bf16.mxu0 0
    %2678 = vmatpush1.bf16.xpose.msra.mxu0 %v2658
    %2679 = vmatprep.subr.bf16.mxu0 0
    %2680 = vmatpush1.bf16.xpose.msra.mxu0 %v2659
    %2681 = vmatprep.subr.bf16.mxu0 0
    %2682 = vmatpush1.bf16.xpose.msra.mxu0 %v2660
    %2683 = vmatprep.subr.bf16.mxu0 0
    %2684 = vmatpush1.bf16.xpose.msra.mxu0 %v2661
    %2685 = vmatprep.subr.bf16.mxu0 0
    %2686 = vmatpush1.bf16.xpose.msra.mxu0 %v2662
    %2687 = vmatprep.subr.bf16.mxu0 0
    %2688 = vmatpush1.bf16.xpose.msra.mxu0 0
    %2689 = vmatprep.subr.bf16.mxu0 0
    %2690 = vmatpush1.bf16.xpose.msra.mxu0 0
    %2691 = vmatprep.subr.bf16.mxu0 0
    %2692 = vmatpush1.bf16.xpose.msra.mxu0 0
    %2693 = vmatprep.subr.bf16.mxu0 0
    %2694 = vmatpush1.bf16.xpose.msra.mxu0 0
    %2695 = vmatprep.subr.bf16.mxu0 0
    %2696 = vmatpush1.bf16.xpose.msra.mxu0 0
    %2697 = vmatprep.subr.bf16.mxu0 0
    %2698 = vmatpush1.bf16.xpose.msra.mxu0 0
    %2699 = vmatprep.subr.bf16.mxu0 0
    %2700 = vmatpush1.bf16.xpose.msra.mxu0 0
    %2701 = vmatprep.subr.bf16.mxu0 0
    %2702 = vmatpush1.bf16.xpose.msra.mxu0 0
    %2703 = vmatprep.mubr.bf16.mxu0 0
    %2704 = vmatmul.mubr.bf16.gmra.mrb[0].mxu0 %v2182
    %v2705 = vpop.f32.mrb[0].mxu0
    %v2706 = vadd.f32 0.0, %v2705
    %v2707 = vpop.f32.mrb[0].mxu0
    %v2708 = vpop.f32.mrb[0].mxu0
    %v2709 = vpop.f32.mrb[0].mxu0
    %2710 = vdwg.mxu0
    %v2727 = vunpack.c.l.b16 %v2149
    %v2728 = vunpack.c.l.b16 %v2150
    %v2729 = vunpack.c.l.b16 %v2151
    %v2730 = vunpack.c.l.b16 %v2152
    %v2731 = vunpack.c.l.b16 %v2153
    %v2732 = vunpack.c.l.b16 %v2154
    %v2733 = vunpack.c.l.b16 %v2155
    %v2734 = vunpack.c.l.b16 %v2156
    %v2735 = vunpack.c.l.b16 %v2157
    %v2736 = vunpack.c.l.b16 %v2158
    %v2737 = vunpack.c.l.b16 %v2159
    %v2738 = vunpack.c.l.b16 %v2160
    %v2739 = vunpack.c.l.b16 %v2161
    %v2740 = vunpack.c.l.b16 %v2162
    %v2741 = vunpack.c.l.b16 %v2163
    %v2742 = vunpack.c.l.b16 %v2164
    %v2743 = vpack.c.b16 %v2728, %v2727
    %v2744 = vpack.c.b16 %v2730, %v2729
    %v2745 = vpack.c.b16 %v2732, %v2731
    %v2746 = vpack.c.b16 %v2734, %v2733
    %v2747 = vpack.c.b16 %v2736, %v2735
    %v2748 = vpack.c.b16 %v2738, %v2737
    %v2749 = vpack.c.b16 %v2740, %v2739
    %v2750 = vpack.c.b16 %v2742, %v2741
    %2759 = vmatprep.subr.bf16.mxu0 0
    %2760 = vmatpush1.bf16.xpose.msra.mxu0 %v2743
    %2761 = vmatprep.subr.bf16.mxu0 0
    %2762 = vmatpush1.bf16.xpose.msra.mxu0 %v2744
    %2763 = vmatprep.subr.bf16.mxu0 0
    %2764 = vmatpush1.bf16.xpose.msra.mxu0 %v2745
    %2765 = vmatprep.subr.bf16.mxu0 0
    %2766 = vmatpush1.bf16.xpose.msra.mxu0 %v2746
    %2767 = vmatprep.subr.bf16.mxu0 0
    %2768 = vmatpush1.bf16.xpose.msra.mxu0 %v2747
    %2769 = vmatprep.subr.bf16.mxu0 0
    %2770 = vmatpush1.bf16.xpose.msra.mxu0 %v2748
    %2771 = vmatprep.subr.bf16.mxu0 0
    %2772 = vmatpush1.bf16.xpose.msra.mxu0 %v2749
    %2773 = vmatprep.subr.bf16.mxu0 0
    %2774 = vmatpush1.bf16.xpose.msra.mxu0 %v2750
    %2775 = vmatprep.subr.bf16.mxu0 0
    %2776 = vmatpush1.bf16.xpose.msra.mxu0 0
    %2777 = vmatprep.subr.bf16.mxu0 0
    %2778 = vmatpush1.bf16.xpose.msra.mxu0 0
    %2779 = vmatprep.subr.bf16.mxu0 0
    %2780 = vmatpush1.bf16.xpose.msra.mxu0 0
    %2781 = vmatprep.subr.bf16.mxu0 0
    %2782 = vmatpush1.bf16.xpose.msra.mxu0 0
    %2783 = vmatprep.subr.bf16.mxu0 0
    %2784 = vmatpush1.bf16.xpose.msra.mxu0 0
    %2785 = vmatprep.subr.bf16.mxu0 0
    %2786 = vmatpush1.bf16.xpose.msra.mxu0 0
    %2787 = vmatprep.subr.bf16.mxu0 0
    %2788 = vmatpush1.bf16.xpose.msra.mxu0 0
    %2789 = vmatprep.subr.bf16.mxu0 0
    %2790 = vmatpush1.bf16.xpose.msra.mxu0 0
    %2791 = vmatprep.mubr.bf16.mxu0 0
    %2792 = vmatmul.mubr.bf16.gmra.mrb[0].mxu0 %v2182
    %v2793 = vpop.f32.mrb[0].mxu0
    %v2794 = vadd.f32 0.0, %v2793
    %v2795 = vpop.f32.mrb[0].mxu0
    %v2796 = vpop.f32.mrb[0].mxu0
    %v2797 = vpop.f32.mrb[0].mxu0
    %2798 = vdwg.mxu0
    %v2815 = vunpack.c.l.b16 %v2165
    %v2816 = vunpack.c.l.b16 %v2166
    %v2817 = vunpack.c.l.b16 %v2167
    %v2818 = vunpack.c.l.b16 %v2168
    %v2819 = vunpack.c.l.b16 %v2169
    %v2820 = vunpack.c.l.b16 %v2170
    %v2821 = vunpack.c.l.b16 %v2171
    %v2822 = vunpack.c.l.b16 %v2172
    %v2823 = vunpack.c.l.b16 %v2173
    %v2824 = vunpack.c.l.b16 %v2174
    %v2825 = vunpack.c.l.b16 %v2175
    %v2826 = vunpack.c.l.b16 %v2176
    %v2827 = vunpack.c.l.b16 %v2177
    %v2828 = vunpack.c.l.b16 %v2178
    %v2829 = vunpack.c.l.b16 %v2179
    %v2830 = vunpack.c.l.b16 %v2180
    %v2831 = vpack.c.b16 %v2816, %v2815
    %v2832 = vpack.c.b16 %v2818, %v2817
    %v2833 = vpack.c.b16 %v2820, %v2819
    %v2834 = vpack.c.b16 %v2822, %v2821
    %v2835 = vpack.c.b16 %v2824, %v2823
    %v2836 = vpack.c.b16 %v2826, %v2825
    %v2837 = vpack.c.b16 %v2828, %v2827
    %v2838 = vpack.c.b16 %v2830, %v2829
    %2847 = vmatprep.subr.bf16.mxu0 0
    %2848 = vmatpush1.bf16.xpose.msra.mxu0 %v2831
    %2849 = vmatprep.subr.bf16.mxu0 0
    %2850 = vmatpush1.bf16.xpose.msra.mxu0 %v2832
    %2851 = vmatprep.subr.bf16.mxu0 0
    %2852 = vmatpush1.bf16.xpose.msra.mxu0 %v2833
    %2853 = vmatprep.subr.bf16.mxu0 0
    %2854 = vmatpush1.bf16.xpose.msra.mxu0 %v2834
    %2855 = vmatprep.subr.bf16.mxu0 0
    %2856 = vmatpush1.bf16.xpose.msra.mxu0 %v2835
    %2857 = vmatprep.subr.bf16.mxu0 0
    %2858 = vmatpush1.bf16.xpose.msra.mxu0 %v2836
    %2859 = vmatprep.subr.bf16.mxu0 0
    %2860 = vmatpush1.bf16.xpose.msra.mxu0 %v2837
    %2861 = vmatprep.subr.bf16.mxu0 0
    %2862 = vmatpush1.bf16.xpose.msra.mxu0 %v2838
    %2863 = vmatprep.subr.bf16.mxu0 0
    %2864 = vmatpush1.bf16.xpose.msra.mxu0 0
    %2865 = vmatprep.subr.bf16.mxu0 0
    %2866 = vmatpush1.bf16.xpose.msra.mxu0 0
    %2867 = vmatprep.subr.bf16.mxu0 0
    %2868 = vmatpush1.bf16.xpose.msra.mxu0 0
    %2869 = vmatprep.subr.bf16.mxu0 0
    %2870 = vmatpush1.bf16.xpose.msra.mxu0 0
    %2871 = vmatprep.subr.bf16.mxu0 0
    %2872 = vmatpush1.bf16.xpose.msra.mxu0 0
    %2873 = vmatprep.subr.bf16.mxu0 0
    %2874 = vmatpush1.bf16.xpose.msra.mxu0 0
    %2875 = vmatprep.subr.bf16.mxu0 0
    %2876 = vmatpush1.bf16.xpose.msra.mxu0 0
    %2877 = vmatprep.subr.bf16.mxu0 0
    %2878 = vmatpush1.bf16.xpose.msra.mxu0 0
    %2879 = vmatprep.mubr.bf16.mxu0 0
    %2880 = vmatmul.mubr.bf16.gmra.mrb[0].mxu0 %v2182
    %v2881 = vpop.f32.mrb[0].mxu0
    %v2882 = vadd.f32 0.0, %v2881
    %v2883 = vpop.f32.mrb[0].mxu0
    %v2884 = vpop.f32.mrb[0].mxu0
    %v2885 = vpop.f32.mrb[0].mxu0
    %2886 = vdwg.mxu0
    %v2887 = vsub.f32 %v321, 1.0
    %v2888 = vmul.f32 %v2887, 1e+09
    %v2890 = vrot.slane %v2888, 1
    %v2891 = vrot.slane %v2888, 2
    %v2892 = vrot.slane %v2888, 3
    %v2893 = vrot.slane %v2888, 4
    %v2894 = vrot.slane %v2888, 5
    %v2895 = vrot.slane %v2888, 6
    %v2896 = vrot.slane %v2888, 7
    %v2905 = vadd.f32 %v2266, %v2888
    %v2906 = vadd.f32 %v2354, %v2890
    %v2907 = vadd.f32 %v2442, %v2891
    %v2908 = vadd.f32 %v2530, %v2892
    %v2909 = vadd.f32 %v2618, %v2893
    %v2910 = vadd.f32 %v2706, %v2894
    %v2911 = vadd.f32 %v2794, %v2895
    %v2912 = vadd.f32 %v2882, %v2896
    %v2921 = vrot.slane %v2906, 7
    %vm2922 = vcmask 1041409
    %v2923 = vsel %vm2922, %v2921, %v2905
    %v2924 = vrot.slane %v2907, 6
    %vm2925 = vcmask 1042434
    %v2926 = vsel %vm2925, %v2924, %v2923
    %v2927 = vrot.slane %v2908, 5
    %vm2928 = vcmask 1043459
    %v2929 = vsel %vm2928, %v2927, %v2926
    %v2930 = vrot.slane %v2909, 4
    %vm2931 = vcmask 1044484
    %v2932 = vsel %vm2931, %v2930, %v2929
    %v2933 = vrot.slane %v2910, 3
    %vm2934 = vcmask 1045509
    %v2935 = vsel %vm2934, %v2933, %v2932
    %v2936 = vrot.slane %v2911, 2
    %vm2937 = vcmask 1046534
    %v2938 = vsel %vm2937, %v2936, %v2935
    %v2939 = vrot.slane %v2912, 1
    %vm2940 = vcmask 1047559
    %v2941 = vsel %vm2940, %v2939, %v2938
    %2943 = vmax.xlane.f32.xlu0 %v2941
    %v2944 = vpop.xlane.xlu0 %2943
    %v2946 = vrot.slane %v2944, 1
    %v2947 = vrot.slane %v2944, 2
    %v2948 = vrot.slane %v2944, 3
    %v2949 = vrot.slane %v2944, 4
    %v2950 = vrot.slane %v2944, 5
    %v2951 = vrot.slane %v2944, 6
    %v2952 = vrot.slane %v2944, 7
    %v2961 = vsub.f32 %v2905, %v2944
    %v2962 = vsub.f32 %v2906, %v2946
    %v2963 = vsub.f32 %v2907, %v2947
    %v2964 = vsub.f32 %v2908, %v2948
    %v2965 = vsub.f32 %v2909, %v2949
    %v2966 = vsub.f32 %v2910, %v2950
    %v2967 = vsub.f32 %v2911, %v2951
    %v2968 = vsub.f32 %v2912, %v2952
    %v2969 = vmul.f32 %v2961, 1.442695
    %v2970 = vpow.pop %v2969
    %v2971 = vmul.f32 %v2962, 1.442695
    %v2972 = vpow.pop %v2971
    %v2973 = vmul.f32 %v2963, 1.442695
    %v2974 = vpow.pop %v2973
    %v2975 = vmul.f32 %v2964, 1.442695
    %v2976 = vpow.pop %v2975
    %v2977 = vmul.f32 %v2965, 1.442695
    %v2978 = vpow.pop %v2977
    %v2979 = vmul.f32 %v2966, 1.442695
    %v2980 = vpow.pop %v2979
    %v2981 = vmul.f32 %v2967, 1.442695
    %v2982 = vpow.pop %v2981
    %v2983 = vmul.f32 %v2968, 1.442695
    %v2984 = vpow.pop %v2983
    %v2986 = vrot.slane %v321, 1
    %v2987 = vrot.slane %v321, 2
    %v2988 = vrot.slane %v321, 3
    %v2989 = vrot.slane %v321, 4
    %v2990 = vrot.slane %v321, 5
    %v2991 = vrot.slane %v321, 6
    %v2992 = vrot.slane %v321, 7
    %v3001 = vmul.f32 %v2970, %v321
    %v3002 = vmul.f32 %v2972, %v2986
    %v3003 = vmul.f32 %v2974, %v2987
    %v3004 = vmul.f32 %v2976, %v2988
    %v3005 = vmul.f32 %v2978, %v2989
    %v3006 = vmul.f32 %v2980, %v2990
    %v3007 = vmul.f32 %v2982, %v2991
    %v3008 = vmul.f32 %v2984, %v2992
    %v3017 = vrot.slane %v3002, 7
    %v3018 = vsel %vm2922, %v3017, %v3001
    %v3019 = vrot.slane %v3003, 6
    %v3020 = vsel %vm2925, %v3019, %v3018
    %v3021 = vrot.slane %v3004, 5
    %v3022 = vsel %vm2928, %v3021, %v3020
    %v3023 = vrot.slane %v3005, 4
    %v3024 = vsel %vm2931, %v3023, %v3022
    %v3025 = vrot.slane %v3006, 3
    %v3026 = vsel %vm2934, %v3025, %v3024
    %v3027 = vrot.slane %v3007, 2
    %v3028 = vsel %vm2937, %v3027, %v3026
    %v3029 = vrot.slane %v3008, 1
    %v3030 = vsel %vm2940, %v3029, %v3028
    %3032 = vadd.xlane.f32.xlu0 %v3030
    %v3033 = vpop.xlane.xlu0 %3032
    %v3034 = vmax.f32 %v3033, 1e-30
    %v3035 = vrcp.pop %v3034
    %v3037 = vrot.slane %v3035, 1
    %v3038 = vrot.slane %v3035, 2
    %v3039 = vrot.slane %v3035, 3
    %v3040 = vrot.slane %v3035, 4
    %v3041 = vrot.slane %v3035, 5
    %v3042 = vrot.slane %v3035, 6
    %v3043 = vrot.slane %v3035, 7
    %v3052 = vmul.f32 %v3001, %v3035
    %v3053 = vmul.f32 %v3002, %v3037
    %v3054 = vmul.f32 %v3003, %v3038
    %v3055 = vmul.f32 %v3004, %v3039
    %v3056 = vmul.f32 %v3005, %v3040
    %v3057 = vmul.f32 %v3006, %v3041
    %v3058 = vmul.f32 %v3007, %v3042
    %v3059 = vmul.f32 %v3008, %v3043
    %v3060 = vpack.c.bf16 %v3052, %v3052
    %v3061 = vpack.c.bf16 %v3053, %v3053
    %v3062 = vpack.c.bf16 %v3054, %v3054
    %v3063 = vpack.c.bf16 %v3055, %v3055
    %v3064 = vpack.c.bf16 %v3056, %v3056
    %v3065 = vpack.c.bf16 %v3057, %v3057
    %v3066 = vpack.c.bf16 %v3058, %v3058
    %v3067 = vpack.c.bf16 %v3059, %v3059
    %v3084 = vunpack.c.l.b16 %v65
    %v3085 = vunpack.c.l.b16 %v66
    %v3086 = vunpack.c.l.b16 %v67
    %v3087 = vunpack.c.l.b16 %v68
    %v3088 = vunpack.c.l.b16 %v69
    %v3089 = vunpack.c.l.b16 %v70
    %v3090 = vunpack.c.l.b16 %v71
    %v3091 = vunpack.c.l.b16 %v72
    %v3092 = vunpack.c.l.b16 %v73
    %v3093 = vunpack.c.l.b16 %v74
    %v3094 = vunpack.c.l.b16 %v75
    %v3095 = vunpack.c.l.b16 %v76
    %v3096 = vunpack.c.l.b16 %v77
    %v3097 = vunpack.c.l.b16 %v78
    %v3098 = vunpack.c.l.b16 %v79
    %v3099 = vunpack.c.l.b16 %v80
    %v3100 = vpack.c.b16 %v3085, %v3084
    %v3101 = vpack.c.b16 %v3087, %v3086
    %v3102 = vpack.c.b16 %v3089, %v3088
    %v3103 = vpack.c.b16 %v3091, %v3090
    %v3104 = vpack.c.b16 %v3093, %v3092
    %v3105 = vpack.c.b16 %v3095, %v3094
    %v3106 = vpack.c.b16 %v3097, %v3096
    %v3107 = vpack.c.b16 %v3099, %v3098
    %3116 = vmatprep.subr.bf16.mxu0 0
    %3117 = vmatpush1.bf16.msra.mxu0 %v3100
    %3118 = vmatprep.subr.bf16.mxu0 0
    %3119 = vmatpush1.bf16.msra.mxu0 %v3101
    %3120 = vmatprep.subr.bf16.mxu0 0
    %3121 = vmatpush1.bf16.msra.mxu0 %v3102
    %3122 = vmatprep.subr.bf16.mxu0 0
    %3123 = vmatpush1.bf16.msra.mxu0 %v3103
    %3124 = vmatprep.subr.bf16.mxu0 0
    %3125 = vmatpush1.bf16.msra.mxu0 %v3104
    %3126 = vmatprep.subr.bf16.mxu0 0
    %3127 = vmatpush1.bf16.msra.mxu0 %v3105
    %3128 = vmatprep.subr.bf16.mxu0 0
    %3129 = vmatpush1.bf16.msra.mxu0 %v3106
    %3130 = vmatprep.subr.bf16.mxu0 0
    %3131 = vmatpush1.bf16.msra.mxu0 %v3107
    %3132 = vmatprep.subr.bf16.mxu0 0
    %3133 = vmatpush1.bf16.msra.mxu0 0
    %3134 = vmatprep.subr.bf16.mxu0 0
    %3135 = vmatpush1.bf16.msra.mxu0 0
    %3136 = vmatprep.subr.bf16.mxu0 0
    %3137 = vmatpush1.bf16.msra.mxu0 0
    %3138 = vmatprep.subr.bf16.mxu0 0
    %3139 = vmatpush1.bf16.msra.mxu0 0
    %3140 = vmatprep.subr.bf16.mxu0 0
    %3141 = vmatpush1.bf16.msra.mxu0 0
    %3142 = vmatprep.subr.bf16.mxu0 0
    %3143 = vmatpush1.bf16.msra.mxu0 0
    %3144 = vmatprep.subr.bf16.mxu0 0
    %3145 = vmatpush1.bf16.msra.mxu0 0
    %3146 = vmatprep.subr.bf16.mxu0 0
    %3147 = vmatpush1.bf16.msra.mxu0 0
    %3148 = vmatprep.mubr.bf16.mxu0 0
    %3149 = vmatmul.mubr.bf16.gmra.mrb[0].mxu0 %v3060
    %v3150 = vpop.f32.mrb[0].mxu0
    %v3151 = vadd.f32 0.0, %v3150
    %v3152 = vpop.f32.mrb[0].mxu0
    %v3153 = vpop.f32.mrb[0].mxu0
    %v3154 = vpop.f32.mrb[0].mxu0
    %3155 = vdwg.mxu0
    %v3172 = vunpack.c.l.b16 %v81
    %v3173 = vunpack.c.l.b16 %v82
    %v3174 = vunpack.c.l.b16 %v83
    %v3175 = vunpack.c.l.b16 %v84
    %v3176 = vunpack.c.l.b16 %v85
    %v3177 = vunpack.c.l.b16 %v86
    %v3178 = vunpack.c.l.b16 %v87
    %v3179 = vunpack.c.l.b16 %v88
    %v3180 = vunpack.c.l.b16 %v89
    %v3181 = vunpack.c.l.b16 %v90
    %v3182 = vunpack.c.l.b16 %v91
    %v3183 = vunpack.c.l.b16 %v92
    %v3184 = vunpack.c.l.b16 %v93
    %v3185 = vunpack.c.l.b16 %v94
    %v3186 = vunpack.c.l.b16 %v95
    %v3187 = vunpack.c.l.b16 %v96
    %v3188 = vpack.c.b16 %v3173, %v3172
    %v3189 = vpack.c.b16 %v3175, %v3174
    %v3190 = vpack.c.b16 %v3177, %v3176
    %v3191 = vpack.c.b16 %v3179, %v3178
    %v3192 = vpack.c.b16 %v3181, %v3180
    %v3193 = vpack.c.b16 %v3183, %v3182
    %v3194 = vpack.c.b16 %v3185, %v3184
    %v3195 = vpack.c.b16 %v3187, %v3186
    %3204 = vmatprep.subr.bf16.mxu0 0
    %3205 = vmatpush1.bf16.msra.mxu0 %v3188
    %3206 = vmatprep.subr.bf16.mxu0 0
    %3207 = vmatpush1.bf16.msra.mxu0 %v3189
    %3208 = vmatprep.subr.bf16.mxu0 0
    %3209 = vmatpush1.bf16.msra.mxu0 %v3190
    %3210 = vmatprep.subr.bf16.mxu0 0
    %3211 = vmatpush1.bf16.msra.mxu0 %v3191
    %3212 = vmatprep.subr.bf16.mxu0 0
    %3213 = vmatpush1.bf16.msra.mxu0 %v3192
    %3214 = vmatprep.subr.bf16.mxu0 0
    %3215 = vmatpush1.bf16.msra.mxu0 %v3193
    %3216 = vmatprep.subr.bf16.mxu0 0
    %3217 = vmatpush1.bf16.msra.mxu0 %v3194
    %3218 = vmatprep.subr.bf16.mxu0 0
    %3219 = vmatpush1.bf16.msra.mxu0 %v3195
    %3220 = vmatprep.subr.bf16.mxu0 0
    %3221 = vmatpush1.bf16.msra.mxu0 0
    %3222 = vmatprep.subr.bf16.mxu0 0
    %3223 = vmatpush1.bf16.msra.mxu0 0
    %3224 = vmatprep.subr.bf16.mxu0 0
    %3225 = vmatpush1.bf16.msra.mxu0 0
    %3226 = vmatprep.subr.bf16.mxu0 0
    %3227 = vmatpush1.bf16.msra.mxu0 0
    %3228 = vmatprep.subr.bf16.mxu0 0
    %3229 = vmatpush1.bf16.msra.mxu0 0
    %3230 = vmatprep.subr.bf16.mxu0 0
    %3231 = vmatpush1.bf16.msra.mxu0 0
    %3232 = vmatprep.subr.bf16.mxu0 0
    %3233 = vmatpush1.bf16.msra.mxu0 0
    %3234 = vmatprep.subr.bf16.mxu0 0
    %3235 = vmatpush1.bf16.msra.mxu0 0
    %3236 = vmatprep.mubr.bf16.mxu0 0
    %3237 = vmatmul.mubr.bf16.gmra.mrb[0].mxu0 %v3061
    %v3238 = vpop.f32.mrb[0].mxu0
    %v3239 = vadd.f32 0.0, %v3238
    %v3240 = vpop.f32.mrb[0].mxu0
    %v3241 = vpop.f32.mrb[0].mxu0
    %v3242 = vpop.f32.mrb[0].mxu0
    %3243 = vdwg.mxu0
    %v3260 = vunpack.c.l.b16 %v97
    %v3261 = vunpack.c.l.b16 %v98
    %v3262 = vunpack.c.l.b16 %v99
    %v3263 = vunpack.c.l.b16 %v100
    %v3264 = vunpack.c.l.b16 %v101
    %v3265 = vunpack.c.l.b16 %v102
    %v3266 = vunpack.c.l.b16 %v103
    %v3267 = vunpack.c.l.b16 %v104
    %v3268 = vunpack.c.l.b16 %v105
    %v3269 = vunpack.c.l.b16 %v106
    %v3270 = vunpack.c.l.b16 %v107
    %v3271 = vunpack.c.l.b16 %v108
    %v3272 = vunpack.c.l.b16 %v109
    %v3273 = vunpack.c.l.b16 %v110
    %v3274 = vunpack.c.l.b16 %v111
    %v3275 = vunpack.c.l.b16 %v112
    %v3276 = vpack.c.b16 %v3261, %v3260
    %v3277 = vpack.c.b16 %v3263, %v3262
    %v3278 = vpack.c.b16 %v3265, %v3264
    %v3279 = vpack.c.b16 %v3267, %v3266
    %v3280 = vpack.c.b16 %v3269, %v3268
    %v3281 = vpack.c.b16 %v3271, %v3270
    %v3282 = vpack.c.b16 %v3273, %v3272
    %v3283 = vpack.c.b16 %v3275, %v3274
    %3292 = vmatprep.subr.bf16.mxu0 0
    %3293 = vmatpush1.bf16.msra.mxu0 %v3276
    %3294 = vmatprep.subr.bf16.mxu0 0
    %3295 = vmatpush1.bf16.msra.mxu0 %v3277
    %3296 = vmatprep.subr.bf16.mxu0 0
    %3297 = vmatpush1.bf16.msra.mxu0 %v3278
    %3298 = vmatprep.subr.bf16.mxu0 0
    %3299 = vmatpush1.bf16.msra.mxu0 %v3279
    %3300 = vmatprep.subr.bf16.mxu0 0
    %3301 = vmatpush1.bf16.msra.mxu0 %v3280
    %3302 = vmatprep.subr.bf16.mxu0 0
    %3303 = vmatpush1.bf16.msra.mxu0 %v3281
    %3304 = vmatprep.subr.bf16.mxu0 0
    %3305 = vmatpush1.bf16.msra.mxu0 %v3282
    %3306 = vmatprep.subr.bf16.mxu0 0
    %3307 = vmatpush1.bf16.msra.mxu0 %v3283
    %3308 = vmatprep.subr.bf16.mxu0 0
    %3309 = vmatpush1.bf16.msra.mxu0 0
    %3310 = vmatprep.subr.bf16.mxu0 0
    %3311 = vmatpush1.bf16.msra.mxu0 0
    %3312 = vmatprep.subr.bf16.mxu0 0
    %3313 = vmatpush1.bf16.msra.mxu0 0
    %3314 = vmatprep.subr.bf16.mxu0 0
    %3315 = vmatpush1.bf16.msra.mxu0 0
    %3316 = vmatprep.subr.bf16.mxu0 0
    %3317 = vmatpush1.bf16.msra.mxu0 0
    %3318 = vmatprep.subr.bf16.mxu0 0
    %3319 = vmatpush1.bf16.msra.mxu0 0
    %3320 = vmatprep.subr.bf16.mxu0 0
    %3321 = vmatpush1.bf16.msra.mxu0 0
    %3322 = vmatprep.subr.bf16.mxu0 0
    %3323 = vmatpush1.bf16.msra.mxu0 0
    %3324 = vmatprep.mubr.bf16.mxu0 0
    %3325 = vmatmul.mubr.bf16.gmra.mrb[0].mxu0 %v3062
    %v3326 = vpop.f32.mrb[0].mxu0
    %v3327 = vadd.f32 0.0, %v3326
    %v3328 = vpop.f32.mrb[0].mxu0
    %v3329 = vpop.f32.mrb[0].mxu0
    %v3330 = vpop.f32.mrb[0].mxu0
    %3331 = vdwg.mxu0
    %v3348 = vunpack.c.l.b16 %v113
    %v3349 = vunpack.c.l.b16 %v114
    %v3350 = vunpack.c.l.b16 %v115
    %v3351 = vunpack.c.l.b16 %v116
    %v3352 = vunpack.c.l.b16 %v117
    %v3353 = vunpack.c.l.b16 %v118
    %v3354 = vunpack.c.l.b16 %v119
    %v3355 = vunpack.c.l.b16 %v120
    %v3356 = vunpack.c.l.b16 %v121
    %v3357 = vunpack.c.l.b16 %v122
    %v3358 = vunpack.c.l.b16 %v123
    %v3359 = vunpack.c.l.b16 %v124
    %v3360 = vunpack.c.l.b16 %v125
    %v3361 = vunpack.c.l.b16 %v126
    %v3362 = vunpack.c.l.b16 %v127
    %v3363 = vunpack.c.l.b16 %v128
    %v3364 = vpack.c.b16 %v3349, %v3348
    %v3365 = vpack.c.b16 %v3351, %v3350
    %v3366 = vpack.c.b16 %v3353, %v3352
    %v3367 = vpack.c.b16 %v3355, %v3354
    %v3368 = vpack.c.b16 %v3357, %v3356
    %v3369 = vpack.c.b16 %v3359, %v3358
    %v3370 = vpack.c.b16 %v3361, %v3360
    %v3371 = vpack.c.b16 %v3363, %v3362
    %3380 = vmatprep.subr.bf16.mxu0 0
    %3381 = vmatpush1.bf16.msra.mxu0 %v3364
    %3382 = vmatprep.subr.bf16.mxu0 0
    %3383 = vmatpush1.bf16.msra.mxu0 %v3365
    %3384 = vmatprep.subr.bf16.mxu0 0
    %3385 = vmatpush1.bf16.msra.mxu0 %v3366
    %3386 = vmatprep.subr.bf16.mxu0 0
    %3387 = vmatpush1.bf16.msra.mxu0 %v3367
    %3388 = vmatprep.subr.bf16.mxu0 0
    %3389 = vmatpush1.bf16.msra.mxu0 %v3368
    %3390 = vmatprep.subr.bf16.mxu0 0
    %3391 = vmatpush1.bf16.msra.mxu0 %v3369
    %3392 = vmatprep.subr.bf16.mxu0 0
    %3393 = vmatpush1.bf16.msra.mxu0 %v3370
    %3394 = vmatprep.subr.bf16.mxu0 0
    %3395 = vmatpush1.bf16.msra.mxu0 %v3371
    %3396 = vmatprep.subr.bf16.mxu0 0
    %3397 = vmatpush1.bf16.msra.mxu0 0
    %3398 = vmatprep.subr.bf16.mxu0 0
    %3399 = vmatpush1.bf16.msra.mxu0 0
    %3400 = vmatprep.subr.bf16.mxu0 0
    %3401 = vmatpush1.bf16.msra.mxu0 0
    %3402 = vmatprep.subr.bf16.mxu0 0
    %3403 = vmatpush1.bf16.msra.mxu0 0
    %3404 = vmatprep.subr.bf16.mxu0 0
    %3405 = vmatpush1.bf16.msra.mxu0 0
    %3406 = vmatprep.subr.bf16.mxu0 0
    %3407 = vmatpush1.bf16.msra.mxu0 0
    %3408 = vmatprep.subr.bf16.mxu0 0
    %3409 = vmatpush1.bf16.msra.mxu0 0
    %3410 = vmatprep.subr.bf16.mxu0 0
    %3411 = vmatpush1.bf16.msra.mxu0 0
    %3412 = vmatprep.mubr.bf16.mxu0 0
    %3413 = vmatmul.mubr.bf16.gmra.mrb[0].mxu0 %v3063
    %v3414 = vpop.f32.mrb[0].mxu0
    %v3415 = vadd.f32 0.0, %v3414
    %v3416 = vpop.f32.mrb[0].mxu0
    %v3417 = vpop.f32.mrb[0].mxu0
    %v3418 = vpop.f32.mrb[0].mxu0
    %3419 = vdwg.mxu0
    %v3436 = vunpack.c.l.b16 %v129
    %v3437 = vunpack.c.l.b16 %v130
    %v3438 = vunpack.c.l.b16 %v131
    %v3439 = vunpack.c.l.b16 %v132
    %v3440 = vunpack.c.l.b16 %v133
    %v3441 = vunpack.c.l.b16 %v134
    %v3442 = vunpack.c.l.b16 %v135
    %v3443 = vunpack.c.l.b16 %v136
    %v3444 = vunpack.c.l.b16 %v137
    %v3445 = vunpack.c.l.b16 %v138
    %v3446 = vunpack.c.l.b16 %v139
    %v3447 = vunpack.c.l.b16 %v140
    %v3448 = vunpack.c.l.b16 %v141
    %v3449 = vunpack.c.l.b16 %v142
    %v3450 = vunpack.c.l.b16 %v143
    %v3451 = vunpack.c.l.b16 %v144
    %v3452 = vpack.c.b16 %v3437, %v3436
    %v3453 = vpack.c.b16 %v3439, %v3438
    %v3454 = vpack.c.b16 %v3441, %v3440
    %v3455 = vpack.c.b16 %v3443, %v3442
    %v3456 = vpack.c.b16 %v3445, %v3444
    %v3457 = vpack.c.b16 %v3447, %v3446
    %v3458 = vpack.c.b16 %v3449, %v3448
    %v3459 = vpack.c.b16 %v3451, %v3450
    %3468 = vmatprep.subr.bf16.mxu0 0
    %3469 = vmatpush1.bf16.msra.mxu0 %v3452
    %3470 = vmatprep.subr.bf16.mxu0 0
    %3471 = vmatpush1.bf16.msra.mxu0 %v3453
    %3472 = vmatprep.subr.bf16.mxu0 0
    %3473 = vmatpush1.bf16.msra.mxu0 %v3454
    %3474 = vmatprep.subr.bf16.mxu0 0
    %3475 = vmatpush1.bf16.msra.mxu0 %v3455
    %3476 = vmatprep.subr.bf16.mxu0 0
    %3477 = vmatpush1.bf16.msra.mxu0 %v3456
    %3478 = vmatprep.subr.bf16.mxu0 0
    %3479 = vmatpush1.bf16.msra.mxu0 %v3457
    %3480 = vmatprep.subr.bf16.mxu0 0
    %3481 = vmatpush1.bf16.msra.mxu0 %v3458
    %3482 = vmatprep.subr.bf16.mxu0 0
    %3483 = vmatpush1.bf16.msra.mxu0 %v3459
    %3484 = vmatprep.subr.bf16.mxu0 0
    %3485 = vmatpush1.bf16.msra.mxu0 0
    %3486 = vmatprep.subr.bf16.mxu0 0
    %3487 = vmatpush1.bf16.msra.mxu0 0
    %3488 = vmatprep.subr.bf16.mxu0 0
    %3489 = vmatpush1.bf16.msra.mxu0 0
    %3490 = vmatprep.subr.bf16.mxu0 0
    %3491 = vmatpush1.bf16.msra.mxu0 0
    %3492 = vmatprep.subr.bf16.mxu0 0
    %3493 = vmatpush1.bf16.msra.mxu0 0
    %3494 = vmatprep.subr.bf16.mxu0 0
    %3495 = vmatpush1.bf16.msra.mxu0 0
    %3496 = vmatprep.subr.bf16.mxu0 0
    %3497 = vmatpush1.bf16.msra.mxu0 0
    %3498 = vmatprep.subr.bf16.mxu0 0
    %3499 = vmatpush1.bf16.msra.mxu0 0
    %3500 = vmatprep.mubr.bf16.mxu0 0
    %3501 = vmatmul.mubr.bf16.gmra.mrb[0].mxu0 %v3064
    %v3502 = vpop.f32.mrb[0].mxu0
    %v3503 = vadd.f32 0.0, %v3502
    %v3504 = vpop.f32.mrb[0].mxu0
    %v3505 = vpop.f32.mrb[0].mxu0
    %v3506 = vpop.f32.mrb[0].mxu0
    %3507 = vdwg.mxu0
    %v3524 = vunpack.c.l.b16 %v145
    %v3525 = vunpack.c.l.b16 %v146
    %v3526 = vunpack.c.l.b16 %v147
    %v3527 = vunpack.c.l.b16 %v148
    %v3528 = vunpack.c.l.b16 %v149
    %v3529 = vunpack.c.l.b16 %v150
    %v3530 = vunpack.c.l.b16 %v151
    %v3531 = vunpack.c.l.b16 %v152
    %v3532 = vunpack.c.l.b16 %v153
    %v3533 = vunpack.c.l.b16 %v154
    %v3534 = vunpack.c.l.b16 %v155
    %v3535 = vunpack.c.l.b16 %v156
    %v3536 = vunpack.c.l.b16 %v157
    %v3537 = vunpack.c.l.b16 %v158
    %v3538 = vunpack.c.l.b16 %v159
    %v3539 = vunpack.c.l.b16 %v160
    %v3540 = vpack.c.b16 %v3525, %v3524
    %v3541 = vpack.c.b16 %v3527, %v3526
    %v3542 = vpack.c.b16 %v3529, %v3528
    %v3543 = vpack.c.b16 %v3531, %v3530
    %v3544 = vpack.c.b16 %v3533, %v3532
    %v3545 = vpack.c.b16 %v3535, %v3534
    %v3546 = vpack.c.b16 %v3537, %v3536
    %v3547 = vpack.c.b16 %v3539, %v3538
    %3556 = vmatprep.subr.bf16.mxu0 0
    %3557 = vmatpush1.bf16.msra.mxu0 %v3540
    %3558 = vmatprep.subr.bf16.mxu0 0
    %3559 = vmatpush1.bf16.msra.mxu0 %v3541
    %3560 = vmatprep.subr.bf16.mxu0 0
    %3561 = vmatpush1.bf16.msra.mxu0 %v3542
    %3562 = vmatprep.subr.bf16.mxu0 0
    %3563 = vmatpush1.bf16.msra.mxu0 %v3543
    %3564 = vmatprep.subr.bf16.mxu0 0
    %3565 = vmatpush1.bf16.msra.mxu0 %v3544
    %3566 = vmatprep.subr.bf16.mxu0 0
    %3567 = vmatpush1.bf16.msra.mxu0 %v3545
    %3568 = vmatprep.subr.bf16.mxu0 0
    %3569 = vmatpush1.bf16.msra.mxu0 %v3546
    %3570 = vmatprep.subr.bf16.mxu0 0
    %3571 = vmatpush1.bf16.msra.mxu0 %v3547
    %3572 = vmatprep.subr.bf16.mxu0 0
    %3573 = vmatpush1.bf16.msra.mxu0 0
    %3574 = vmatprep.subr.bf16.mxu0 0
    %3575 = vmatpush1.bf16.msra.mxu0 0
    %3576 = vmatprep.subr.bf16.mxu0 0
    %3577 = vmatpush1.bf16.msra.mxu0 0
    %3578 = vmatprep.subr.bf16.mxu0 0
    %3579 = vmatpush1.bf16.msra.mxu0 0
    %3580 = vmatprep.subr.bf16.mxu0 0
    %3581 = vmatpush1.bf16.msra.mxu0 0
    %3582 = vmatprep.subr.bf16.mxu0 0
    %3583 = vmatpush1.bf16.msra.mxu0 0
    %3584 = vmatprep.subr.bf16.mxu0 0
    %3585 = vmatpush1.bf16.msra.mxu0 0
    %3586 = vmatprep.subr.bf16.mxu0 0
    %3587 = vmatpush1.bf16.msra.mxu0 0
    %3588 = vmatprep.mubr.bf16.mxu0 0
    %3589 = vmatmul.mubr.bf16.gmra.mrb[0].mxu0 %v3065
    %v3590 = vpop.f32.mrb[0].mxu0
    %v3591 = vadd.f32 0.0, %v3590
    %v3592 = vpop.f32.mrb[0].mxu0
    %v3593 = vpop.f32.mrb[0].mxu0
    %v3594 = vpop.f32.mrb[0].mxu0
    %3595 = vdwg.mxu0
    %v3612 = vunpack.c.l.b16 %v161
    %v3613 = vunpack.c.l.b16 %v162
    %v3614 = vunpack.c.l.b16 %v163
    %v3615 = vunpack.c.l.b16 %v164
    %v3616 = vunpack.c.l.b16 %v165
    %v3617 = vunpack.c.l.b16 %v166
    %v3618 = vunpack.c.l.b16 %v167
    %v3619 = vunpack.c.l.b16 %v168
    %v3620 = vunpack.c.l.b16 %v169
    %v3621 = vunpack.c.l.b16 %v170
    %v3622 = vunpack.c.l.b16 %v171
    %v3623 = vunpack.c.l.b16 %v172
    %v3624 = vunpack.c.l.b16 %v173
    %v3625 = vunpack.c.l.b16 %v174
    %v3626 = vunpack.c.l.b16 %v175
    %v3627 = vunpack.c.l.b16 %v176
    %v3628 = vpack.c.b16 %v3613, %v3612
    %v3629 = vpack.c.b16 %v3615, %v3614
    %v3630 = vpack.c.b16 %v3617, %v3616
    %v3631 = vpack.c.b16 %v3619, %v3618
    %v3632 = vpack.c.b16 %v3621, %v3620
    %v3633 = vpack.c.b16 %v3623, %v3622
    %v3634 = vpack.c.b16 %v3625, %v3624
    %v3635 = vpack.c.b16 %v3627, %v3626
    %3644 = vmatprep.subr.bf16.mxu0 0
    %3645 = vmatpush1.bf16.msra.mxu0 %v3628
    %3646 = vmatprep.subr.bf16.mxu0 0
    %3647 = vmatpush1.bf16.msra.mxu0 %v3629
    %3648 = vmatprep.subr.bf16.mxu0 0
    %3649 = vmatpush1.bf16.msra.mxu0 %v3630
    %3650 = vmatprep.subr.bf16.mxu0 0
    %3651 = vmatpush1.bf16.msra.mxu0 %v3631
    %3652 = vmatprep.subr.bf16.mxu0 0
    %3653 = vmatpush1.bf16.msra.mxu0 %v3632
    %3654 = vmatprep.subr.bf16.mxu0 0
    %3655 = vmatpush1.bf16.msra.mxu0 %v3633
    %3656 = vmatprep.subr.bf16.mxu0 0
    %3657 = vmatpush1.bf16.msra.mxu0 %v3634
    %3658 = vmatprep.subr.bf16.mxu0 0
    %3659 = vmatpush1.bf16.msra.mxu0 %v3635
    %3660 = vmatprep.subr.bf16.mxu0 0
    %3661 = vmatpush1.bf16.msra.mxu0 0
    %3662 = vmatprep.subr.bf16.mxu0 0
    %3663 = vmatpush1.bf16.msra.mxu0 0
    %3664 = vmatprep.subr.bf16.mxu0 0
    %3665 = vmatpush1.bf16.msra.mxu0 0
    %3666 = vmatprep.subr.bf16.mxu0 0
    %3667 = vmatpush1.bf16.msra.mxu0 0
    %3668 = vmatprep.subr.bf16.mxu0 0
    %3669 = vmatpush1.bf16.msra.mxu0 0
    %3670 = vmatprep.subr.bf16.mxu0 0
    %3671 = vmatpush1.bf16.msra.mxu0 0
    %3672 = vmatprep.subr.bf16.mxu0 0
    %3673 = vmatpush1.bf16.msra.mxu0 0
    %3674 = vmatprep.subr.bf16.mxu0 0
    %3675 = vmatpush1.bf16.msra.mxu0 0
    %3676 = vmatprep.mubr.bf16.mxu0 0
    %3677 = vmatmul.mubr.bf16.gmra.mrb[0].mxu0 %v3066
    %v3678 = vpop.f32.mrb[0].mxu0
    %v3679 = vadd.f32 0.0, %v3678
    %v3680 = vpop.f32.mrb[0].mxu0
    %v3681 = vpop.f32.mrb[0].mxu0
    %v3682 = vpop.f32.mrb[0].mxu0
    %3683 = vdwg.mxu0
    %v3700 = vunpack.c.l.b16 %v177
    %v3701 = vunpack.c.l.b16 %v178
    %v3702 = vunpack.c.l.b16 %v179
    %v3703 = vunpack.c.l.b16 %v180
    %v3704 = vunpack.c.l.b16 %v181
    %v3705 = vunpack.c.l.b16 %v182
    %v3706 = vunpack.c.l.b16 %v183
    %v3707 = vunpack.c.l.b16 %v184
    %v3708 = vunpack.c.l.b16 %v185
    %v3709 = vunpack.c.l.b16 %v186
    %v3710 = vunpack.c.l.b16 %v187
    %v3711 = vunpack.c.l.b16 %v188
    %v3712 = vunpack.c.l.b16 %v189
    %v3713 = vunpack.c.l.b16 %v190
    %v3714 = vunpack.c.l.b16 %v191
    %v3715 = vunpack.c.l.b16 %v192
    %v3716 = vpack.c.b16 %v3701, %v3700
    %v3717 = vpack.c.b16 %v3703, %v3702
    %v3718 = vpack.c.b16 %v3705, %v3704
    %v3719 = vpack.c.b16 %v3707, %v3706
    %v3720 = vpack.c.b16 %v3709, %v3708
    %v3721 = vpack.c.b16 %v3711, %v3710
    %v3722 = vpack.c.b16 %v3713, %v3712
    %v3723 = vpack.c.b16 %v3715, %v3714
    %3732 = vmatprep.subr.bf16.mxu0 0
    %3733 = vmatpush1.bf16.msra.mxu0 %v3716
    %3734 = vmatprep.subr.bf16.mxu0 0
    %3735 = vmatpush1.bf16.msra.mxu0 %v3717
    %3736 = vmatprep.subr.bf16.mxu0 0
    %3737 = vmatpush1.bf16.msra.mxu0 %v3718
    %3738 = vmatprep.subr.bf16.mxu0 0
    %3739 = vmatpush1.bf16.msra.mxu0 %v3719
    %3740 = vmatprep.subr.bf16.mxu0 0
    %3741 = vmatpush1.bf16.msra.mxu0 %v3720
    %3742 = vmatprep.subr.bf16.mxu0 0
    %3743 = vmatpush1.bf16.msra.mxu0 %v3721
    %3744 = vmatprep.subr.bf16.mxu0 0
    %3745 = vmatpush1.bf16.msra.mxu0 %v3722
    %3746 = vmatprep.subr.bf16.mxu0 0
    %3747 = vmatpush1.bf16.msra.mxu0 %v3723
    %3748 = vmatprep.subr.bf16.mxu0 0
    %3749 = vmatpush1.bf16.msra.mxu0 0
    %3750 = vmatprep.subr.bf16.mxu0 0
    %3751 = vmatpush1.bf16.msra.mxu0 0
    %3752 = vmatprep.subr.bf16.mxu0 0
    %3753 = vmatpush1.bf16.msra.mxu0 0
    %3754 = vmatprep.subr.bf16.mxu0 0
    %3755 = vmatpush1.bf16.msra.mxu0 0
    %3756 = vmatprep.subr.bf16.mxu0 0
    %3757 = vmatpush1.bf16.msra.mxu0 0
    %3758 = vmatprep.subr.bf16.mxu0 0
    %3759 = vmatpush1.bf16.msra.mxu0 0
    %3760 = vmatprep.subr.bf16.mxu0 0
    %3761 = vmatpush1.bf16.msra.mxu0 0
    %3762 = vmatprep.subr.bf16.mxu0 0
    %3763 = vmatpush1.bf16.msra.mxu0 0
    %3764 = vmatprep.mubr.bf16.mxu0 0
    %3765 = vmatmul.mubr.bf16.gmra.mrb[0].mxu0 %v3067
    %v3766 = vpop.f32.mrb[0].mxu0
    %v3767 = vadd.f32 0.0, %v3766
    %v3768 = vpop.f32.mrb[0].mxu0
    %v3769 = vpop.f32.mrb[0].mxu0
    %v3770 = vpop.f32.mrb[0].mxu0
    %3771 = vdwg.mxu0
    %v3780 = vrot.slane %v3239, 7
    %v3781 = vsel %vm2922, %v3780, %v3151
    %v3782 = vrot.slane %v3327, 6
    %v3783 = vsel %vm2925, %v3782, %v3781
    %v3784 = vrot.slane %v3415, 5
    %v3785 = vsel %vm2928, %v3784, %v3783
    %v3786 = vrot.slane %v3503, 4
    %v3787 = vsel %vm2931, %v3786, %v3785
    %v3788 = vrot.slane %v3591, 3
    %v3789 = vsel %vm2934, %v3788, %v3787
    %v3790 = vrot.slane %v3679, 2
    %v3791 = vsel %vm2937, %v3790, %v3789
    %v3792 = vrot.slane %v3767, 1
    %v3793 = vsel %vm2940, %v3792, %v3791
    %3795 = vst [vmem:[%s9] sm:$0xff] %v3793
    %v3804 = vrot.slane %v3053, 7
    %v3805 = vsel %vm2922, %v3804, %v3052
    %v3806 = vrot.slane %v3054, 6
    %v3807 = vsel %vm2925, %v3806, %v3805
    %v3808 = vrot.slane %v3055, 5
    %v3809 = vsel %vm2928, %v3808, %v3807
    %v3810 = vrot.slane %v3056, 4
    %v3811 = vsel %vm2931, %v3810, %v3809
    %v3812 = vrot.slane %v3057, 3
    %v3813 = vsel %vm2934, %v3812, %v3811
    %v3814 = vrot.slane %v3058, 2
    %v3815 = vsel %vm2937, %v3814, %v3813
    %v3816 = vrot.slane %v3059, 1
    %v3817 = vsel %vm2940, %v3816, %v3815
    %3819 = vst [vmem:[%s10] sm:$0xff] %v3817
    %v3820 = vadd.f32 %v322, %v3817
    %3821 = vst [vmem:[%s11] sm:$0xff] %v3820
    // Predicated region
    $region46: #{attention_step.1} parent=1 // pred_check
      _
    $region47: #{attention_step.1} parent=1 // pred_check_branch
      %3823 = sbr.rel (0) target = $region49
    $region48: #{attention_step.1} parent=1 // pred_region
      _
    $region49: #{attention_step.1} parent=1 // pred_fallthru
      _
    // Predicated region
    $region50: #{attention_step.1} parent=1 // pred_check
      _
    $region51: #{attention_step.1} parent=1 // pred_check_branch
      %3825 = sbr.rel (0) target = $region53
    $region52: #{attention_step.1} parent=1 // pred_region
      _
    $region53: #{attention_step.1} parent=1 // pred_fallthru
      _
    // Predicated region
    $region54: #{attention_step.1} parent=1 // pred_check
      _
    $region55: #{attention_step.1} parent=1 // pred_check_branch
      %3827 = sbr.rel (0) target = $region57
    $region56: #{attention_step.1} parent=1 // pred_region
      _
    $region57: #{attention_step.1} parent=1 // pred_fallthru
      _
    // Predicated region
    $region58: #{attention_step.1} parent=1 // pred_check
      _
    $region59: #{attention_step.1} parent=1 // pred_check_branch
      %3829 = sbr.rel (0) target = $region61
    $region60: #{attention_step.1} parent=1 // pred_region
      _
    $region61: #{attention_step.1} parent=1 // pred_fallthru
      _
    // Predicated region
    $region62: #{attention_step.1} parent=1 // pred_check
      _
    $region63: #{attention_step.1} parent=1 // pred_check_branch
      %3831 = sbr.rel (0) target = $region65
    $region64: #{attention_step.1} parent=1 // pred_region
      _
    $region65: #{attention_step.1} parent=1 // pred_fallthru
      _
    // Predicated region
    $region66: #{attention_step.1} parent=1 // pred_check
      _
    $region67: #{attention_step.1} parent=1 // pred_check_branch
      %3833 = sbr.rel (0) target = $region69
    $region68: #{attention_step.1} parent=1 // pred_region
      _
    $region69: #{attention_step.1} parent=1 // pred_fallthru
      _
    %3834 = vsyncpa [#allocation3], 1
    %3835 = vsyncpa [#allocation5], 1

</llo_original>
